<compile_context>
chip_gen: v7x
topology: tpu7x:2x2x1
jax: 0.10.0
libtpu: 0.0.40
codegen_flags: <defaults>
</compile_context>

<pallas_src>
import functools

import jax
import jax.numpy as jnp
from jax.experimental import pallas as pl
from jax.experimental.pallas import tpu as pltpu


# ---------------------------------------------------------------------------
# hardware / tiling helpers
# ---------------------------------------------------------------------------

_VMEM_CAP = None


def _vmem_capacity_bytes() -> int:
    """Best-effort VMEM capacity query (falls back to v7x's 64 MiB)."""
    global _VMEM_CAP
    if _VMEM_CAP is None:
        cap = 64 * 1024 * 1024
        try:
            info = pltpu.get_tpu_info()
            cap = int(getattr(info, "vmem_capacity_bytes", cap))
        except Exception:
            pass
        _VMEM_CAP = cap
    return _VMEM_CAP


def _vmem_limit(est_bytes: int) -> int:
    """Explicit per-kernel scoped-VMEM limit sized to the actual blocks."""
    cap = _vmem_capacity_bytes()
    hi = min(100 * 1024 * 1024, max(cap - 8 * 1024 * 1024, 32 * 1024 * 1024))
    want = max(32 * 1024 * 1024, int(est_bytes * 1.5) + (4 << 20))
    return int(min(hi, want))


def _row_tile(n_rows: int, row_bytes: int) -> int:
    """Budget-aware row tile for the folded (B*S, ...) matmul kernels."""
    budget = max(_vmem_capacity_bytes() // 4, 8 * 1024 * 1024)
    cap = min(1024, max(8, budget // max(int(row_bytes), 1)))
    if n_rows <= cap:
        return n_rows
    t = (min(cap, 512) // 8) * 8
    while t >= 8:
        if n_rows % t == 0:
            return t
        t -= 8
    return n_rows


def _seq_tile(s: int) -> int:
    if s <= 512:
        return s
    for t in (512, 256, 128):
        if s % t == 0:
            return t
    return s


def _inner_tile(h_inner: int) -> int:
    if h_inner <= 1024:
        return h_inner
    for t in (1024, 512, 256, 128):
        if h_inner % t == 0:
            return t
    return h_inner


def _layernorm_f32(x, gamma_ref, beta_ref, eps):
    """LayerNorm over the last dim; statistics in f32. Returns f32."""
    xf = x.astype(jnp.float32)
    mean = jnp.mean(xf, axis=-1, keepdims=True)
    xc = xf - mean
    var = jnp.mean(xc * xc, axis=-1, keepdims=True)
    rstd = jax.lax.rsqrt(var + eps)
    return (xc * rstd * gamma_ref[...].astype(jnp.float32)
            + beta_ref[...].astype(jnp.float32))


def _split_heads(packed2d, b, s, num_heads, head_dim, n=1):
    """(B*S, n*H) -> n arrays of (B, nh, S, hd).  Wrapper-side layout plumbing
    so the attention kernel indexes heads on a leading block dim."""
    t = packed2d.reshape(b, s, n, num_heads, head_dim).transpose(2, 0, 3, 1, 4)
    return tuple(t[i] for i in range(n))


def _merge_heads(x, b, s, h):
    """(B, nh, S, hd) -> (B*S, H)."""
    return x.transpose(0, 2, 1, 3).reshape(b * s, h)


# ---------------------------------------------------------------------------
# kernel 1: row-folded fused (optional pre-LayerNorm) + one wide linear
# ---------------------------------------------------------------------------

def _ln_linear_kernel(*refs, apply_ln, eps):
    if apply_ln:
        x_ref, gamma_ref, beta_ref, w_ref, b_ref, out_ref = refs
    else:
        x_ref, w_ref, b_ref, out_ref = refs
    x = x_ref[...]
    if apply_ln:
        y = _layernorm_f32(x, gamma_ref, beta_ref, eps).astype(x.dtype)
    else:
        y = x
    out = jnp.dot(y, w_ref[...], preferred_element_type=jnp.float32)
    out = out + b_ref[...].astype(jnp.float32)
    out_ref[...] = out.astype(out_ref.dtype)


def _ln_linear(x2d, ln_params, w_t, bias, *, eps=1e-6):
    """out = LayerNorm?(x2d) @ w_t + bias   (row-folded over B*S)."""
    n_rows, h_in = x2d.shape
    h_out = w_t.shape[1]
    dt = x2d.dtype.itemsize
    row_bytes = (h_in * dt * 2          # x, double-buffered
                 + h_out * dt * 2       # out, double-buffered
                 + (h_in + h_out) * 4)  # f32 intermediates
    tr = _row_tile(n_rows, row_bytes)
    apply_ln = ln_params is not None

    const = dict(pipeline_mode=pl.Buffered(1))  # constant-index weights/biases
    inputs = [x2d]
    in_specs = [pl.BlockSpec((tr, h_in), lambda i: (i, 0))]
    if apply_ln:
        gamma, beta = ln_params
        inputs += [gamma, beta]
        in_specs += [pl.BlockSpec((1, h_in), lambda i: (0, 0), **const),
                     pl.BlockSpec((1, h_in), lambda i: (0, 0), **const)]
    inputs += [w_t, bias]
    in_specs += [pl.BlockSpec((h_in, h_out), lambda i: (0, 0), **const),
                 pl.BlockSpec((1, h_out), lambda i: (0, 0), **const)]

    weight_bytes = (h_in * h_out + h_out) * w_t.dtype.itemsize
    vmem = _vmem_limit(tr * row_bytes + weight_bytes)

    kernel = functools.partial(_ln_linear_kernel, apply_ln=apply_ln, eps=eps)
    return pl.pallas_call(
        kernel,
        out_shape=jax.ShapeDtypeStruct((n_rows, h_out), x2d.dtype),
        grid_spec=pltpu.PrefetchScalarGridSpec(
            num_scalar_prefetch=0,
            grid=(n_rows // tr,),
            in_specs=in_specs,
            out_specs=pl.BlockSpec((tr, h_out), lambda i: (i, 0)),
        ),
        compiler_params=pltpu.CompilerParams(
            dimension_semantics=("parallel",),
            vmem_limit_bytes=vmem),
    )(*inputs)


# ---------------------------------------------------------------------------
# kernel 2: flash-style attention core, heads as a leading block dim,
#           online softmax over K/V tiles
# ---------------------------------------------------------------------------

def _flash_attention_kernel(q_ref, k_ref, v_ref, o_ref, m_sc, l_sc, acc_sc):
    ki = pl.program_id(2)

    @pl.when(ki == 0)
    def _():
        m_sc[...] = jnp.full_like(m_sc[...], -jnp.inf)
        l_sc[...] = jnp.zeros_like(l_sc[...])
        acc_sc[...] = jnp.zeros_like(acc_sc[...])

    q = q_ref[0]   # (nh, tq, hd); 1/sqrt(hd) already folded into the Q proj
    k = k_ref[0]   # (nh, tk, hd)
    v = v_ref[0]   # (nh, tk, hd)

    s = jnp.einsum('hqd,hkd->hqk', q, k, preferred_element_type=jnp.float32)
    # TODO(synk): apply src_mask / tgt_mask (masked_fill with -inf) on `s` here.

    m_prev = m_sc[...]
    m_new = jnp.maximum(m_prev, s.max(axis=-1, keepdims=True))
    alpha = jnp.exp(m_prev - m_new)
    p = jnp.exp(s - m_new)
    l_sc[...] = alpha * l_sc[...] + p.sum(axis=-1, keepdims=True)
    acc_sc[...] = alpha * acc_sc[...] + jnp.einsum(
        'hqk,hkd->hqd', p.astype(v.dtype), v, preferred_element_type=jnp.float32)
    m_sc[...] = m_new

    @pl.when(ki == pl.num_programs(2) - 1)
    def _():
        # exact divide (not the approximate EUP reciprocal) for tight parity
        o_ref[0] = (acc_sc[...] / l_sc[...]).astype(o_ref.dtype)


def _flash_attention(q, k, v):
    """q,k,v: (B, nh, S, hd) head-major -> context (B, nh, Sq, hd)."""
    b, nh, sq, hd = q.shape
    sk = k.shape[2]
    tq = _seq_tile(sq)
    tk = _seq_tile(sk)
    dt = q.dtype.itemsize

    blk_q = nh * tq * hd * dt
    blk_kv = nh * tk * hd * dt
    scratch = nh * tq * (hd + 2) * 4
    scores = nh * tq * tk * 4 * 3
    vmem = _vmem_limit(2 * blk_q * 2 + 2 * blk_kv * 2 + scratch + scores)

    qspec = pl.BlockSpec((1, nh, tq, hd), lambda bi, qi, ki: (bi, 0, qi, 0))
    kvspec = pl.BlockSpec((1, nh, tk, hd), lambda bi, qi, ki: (bi, 0, ki, 0))
    return pl.pallas_call(
        _flash_attention_kernel,
        out_shape=jax.ShapeDtypeStruct((b, nh, sq, hd), q.dtype),
        grid_spec=pltpu.PrefetchScalarGridSpec(
            num_scalar_prefetch=0,
            grid=(b, sq // tq, sk // tk),
            in_specs=[qspec, kvspec, kvspec],
            out_specs=qspec,
            scratch_shapes=[pltpu.VMEM((nh, tq, 1), jnp.float32),
                            pltpu.VMEM((nh, tq, 1), jnp.float32),
                            pltpu.VMEM((nh, tq, hd), jnp.float32)],
        ),
        compiler_params=pltpu.CompilerParams(
            dimension_semantics=("parallel", "parallel", "arbitrary"),
            vmem_limit_bytes=vmem),
    )(q, k, v)


# ---------------------------------------------------------------------------
# kernel 3: row-folded output projection (single K=H matmul) + residual + bias
# ---------------------------------------------------------------------------

def _residual_linear_kernel(res_ref, y_ref, w_ref, b_ref, out_ref):
    out = jnp.dot(y_ref[...], w_ref[...], preferred_element_type=jnp.float32)
    out = out + b_ref[...].astype(jnp.float32) + res_ref[...].astype(jnp.float32)
    out_ref[...] = out.astype(out_ref.dtype)


def _residual_linear(res2d, y2d, w_t, bias):
    n_rows, h_in = y2d.shape
    h_out = w_t.shape[1]
    dt = y2d.dtype.itemsize
    row_bytes = (h_in * dt * 2) * 2 + h_out * dt * 2 + h_out * 4
    tr = _row_tile(n_rows, row_bytes)
    vmem = _vmem_limit(tr * row_bytes + (h_in * h_out + h_out) * w_t.dtype.itemsize)
    const = dict(pipeline_mode=pl.Buffered(1))
    return pl.pallas_call(
        _residual_linear_kernel,
        out_shape=jax.ShapeDtypeStruct((n_rows, h_out), res2d.dtype),
        grid_spec=pltpu.PrefetchScalarGridSpec(
            num_scalar_prefetch=0,
            grid=(n_rows // tr,),
            in_specs=[pl.BlockSpec((tr, h_out), lambda i: (i, 0)),
                      pl.BlockSpec((tr, h_in), lambda i: (i, 0)),
                      pl.BlockSpec((h_in, h_out), lambda i: (0, 0), **const),
                      pl.BlockSpec((1, h_out), lambda i: (0, 0), **const)],
            out_specs=pl.BlockSpec((tr, h_out), lambda i: (i, 0)),
        ),
        compiler_params=pltpu.CompilerParams(
            dimension_semantics=("parallel",),
            vmem_limit_bytes=vmem),
    )(res2d, y2d, w_t, bias)


# ---------------------------------------------------------------------------
# kernel 4: feed-forward block (pre-LN + FFN + residual), tiled over the 4H
#           inner dimension (reduction grid axis, f32 accumulator)
# ---------------------------------------------------------------------------

def _ffn_kernel(x_ref, gamma_ref, beta_ref, w1t_ref, b1_ref, w2t_ref, b2_ref,
                out_ref, yln_ref, acc_ref, *, eps):
    j = pl.program_id(1)

    @pl.when(j == 0)
    def _():
        x = x_ref[...]
        yln_ref[...] = _layernorm_f32(x, gamma_ref, beta_ref, eps).astype(yln_ref.dtype)
        acc_ref[...] = x.astype(jnp.float32) + b2_ref[...].astype(jnp.float32)

    hid = jnp.dot(yln_ref[...], w1t_ref[...], preferred_element_type=jnp.float32)
    hid = jnp.maximum(hid + b1_ref[...].astype(jnp.float32), 0.0)
    acc_ref[...] += jnp.dot(hid.astype(w2t_ref.dtype), w2t_ref[...],
                            preferred_element_type=jnp.float32)

    @pl.when(j == pl.num_programs(1) - 1)
    def _():
        out_ref[...] = acc_ref[...].astype(out_ref.dtype)


def _ffn(x2d, gamma, beta, w1t, b1, w2t, b2, *, eps=1e-6):
    n_rows, h = x2d.shape
    h_inner = w1t.shape[1]
    ti = _inner_tile(h_inner)
    dt = x2d.dtype.itemsize
    row_bytes = (h * dt * 2            # x, double-buffered
                 + h * dt * 2          # out, double-buffered
                 + h * dt + h * 4      # yln + acc scratch
                 + ti * 4 * 2)         # hidden-tile intermediates
    tr = _row_tile(n_rows, row_bytes)
    wdt = w1t.dtype.itemsize
    vmem = _vmem_limit(tr * row_bytes + (h * ti + ti * h) * wdt * 2
                       + (ti + 3 * h) * 4)
    const = dict(pipeline_mode=pl.Buffered(1))

    kernel = functools.partial(_ffn_kernel, eps=eps)
    return pl.pallas_call(
        kernel,
        out_shape=jax.ShapeDtypeStruct((n_rows, h), x2d.dtype),
        grid_spec=pltpu.PrefetchScalarGridSpec(
            num_scalar_prefetch=0,
            grid=(n_rows // tr, h_inner // ti),
            in_specs=[
                pl.BlockSpec((tr, h), lambda i, j: (i, 0)),
                pl.BlockSpec((1, h), lambda i, j: (0, 0), **const),
                pl.BlockSpec((1, h), lambda i, j: (0, 0), **const),
                pl.BlockSpec((h, ti), lambda i, j: (0, j)),
                pl.BlockSpec((1, ti), lambda i, j: (0, j)),
                pl.BlockSpec((ti, h), lambda i, j: (j, 0)),
                pl.BlockSpec((1, h), lambda i, j: (0, 0), **const),
            ],
            out_specs=pl.BlockSpec((tr, h), lambda i, j: (i, 0)),
            scratch_shapes=[pltpu.VMEM((tr, h), x2d.dtype),
                            pltpu.VMEM((tr, h), jnp.float32)],
        ),
        compiler_params=pltpu.CompilerParams(
            dimension_semantics=("parallel", "arbitrary"),
            vmem_limit_bytes=vmem),
    )(x2d, gamma, beta, w1t, b1, w2t, b2)


# ---------------------------------------------------------------------------
# full decoder layer
# ---------------------------------------------------------------------------

def decoder_layer(decoder_input, encoder_output, p, *, num_heads):
    """decoder_input: [B, S, H], encoder_output: [B, S_enc, H] -> [B, S, H]."""
    b, s, h = decoder_input.shape
    b_e, s_enc, h_e = encoder_output.shape
    assert b_e == b and h_e == h
    hd = h // num_heads

    x2d = decoder_input.reshape(b * s, h)

    # --- self-attention block: x + Wo @ SA(LN1(x)) + residual ----------------
    qkv = _ln_linear(x2d, (p['ln1_g'], p['ln1_b']), p['sa_wqkvT'], p['sa_bqkv'])
    q_sa, k_sa, v_sa = _split_heads(qkv, b, s, num_heads, hd, n=3)
    ctx_sa = _flash_attention(q_sa, k_sa, v_sa)
    x1_2d = _residual_linear(x2d, _merge_heads(ctx_sa, b, s, h),
                             p['sa_woT'], p['sa_bo'])

    # --- cross-attention block: x1 + Wo @ CA(LN2(x1), enc, enc) --------------
    q_ca2d = _ln_linear(x1_2d, (p['ln2_g'], p['ln2_b']), p['ca_wqT'], p['ca_bq'])
    kv_ca = _ln_linear(encoder_output.reshape(b * s_enc, h), None,   # raw enc
                       p['ca_wkvT'], p['ca_bkv'])
    (q_ca,) = _split_heads(q_ca2d, b, s, num_heads, hd, n=1)
    k_ca, v_ca = _split_heads(kv_ca, b, s_enc, num_heads, hd, n=2)
    ctx_ca = _flash_attention(q_ca, k_ca, v_ca)
    x2_2d = _residual_linear(x1_2d, _merge_heads(ctx_ca, b, s, h),
                             p['ca_woT'], p['ca_bo'])

    # --- feed-forward block: x2 + FFN(LN3(x2)) --------------------------------
    out2d = _ffn(x2_2d, p['ln3_g'], p['ln3_b'],
                 p['ff_w1T'], p['ff_b1'], p['ff_w2T'], p['ff_b2'])
    return out2d.reshape(b, s, h)


# ---------------------------------------------------------------------------
# parameter construction (PyTorch layout) + host-side prep for the kernels
# ---------------------------------------------------------------------------

def _init_linear(key, out_dim, in_dim, dtype=jnp.float32):
    kw, kb = jax.random.split(key)
    bound = 1.0 / (in_dim ** 0.5)
    w = jax.random.uniform(kw, (out_dim, in_dim), dtype, -bound, bound)
    bias = jax.random.uniform(kb, (out_dim,), dtype, -bound, bound)
    return w, bias


def init_raw_params(key, hidden_dim, dtype=jnp.float32):
    h = hidden_dim
    keys = jax.random.split(key, 13)
    raw = {}
    raw['sa_wq'], raw['sa_bq'] = _init_linear(keys[0], h, h, dtype)
    raw['sa_wk'], raw['sa_bk'] = _init_linear(keys[1], h, h, dtype)
    raw['sa_wv'], raw['sa_bv'] = _init_linear(keys[2], h, h, dtype)
    raw['sa_wo'], raw['sa_bo'] = _init_linear(keys[3], h, h, dtype)
    raw['ca_wq'], raw['ca_bq'] = _init_linear(keys[4], h, h, dtype)
    raw['ca_wk'], raw['ca_bk'] = _init_linear(keys[5], h, h, dtype)
    raw['ca_wv'], raw['ca_bv'] = _init_linear(keys[6], h, h, dtype)
    raw['ca_wo'], raw['ca_bo'] = _init_linear(keys[7], h, h, dtype)
    raw['ff_w1'], raw['ff_b1'] = _init_linear(keys[8], 4 * h, h, dtype)
    raw['ff_w2'], raw['ff_b2'] = _init_linear(keys[9], h, 4 * h, dtype)
    for i, kk in zip((1, 2, 3), keys[10:13]):
        kg, kb = jax.random.split(kk)
        raw[f'ln{i}_g'] = 1.0 + 0.1 * jax.random.normal(kg, (h,), dtype)
        raw[f'ln{i}_b'] = 0.1 * jax.random.normal(kb, (h,), dtype)
    return raw


def prepare_kernel_params(raw, num_heads):
    """Pre-transpose nn.Linear weights to [in, out], concatenate Q|K|V weights,
    and fold 1/sqrt(head_dim) into the Q projection (host-side, one-time)."""
    h = raw['sa_wq'].shape[0]
    hd = h // num_heads
    inv_temp = 1.0 / (float(hd) ** 0.5)

    p = {
        'sa_wqkvT': jnp.concatenate([raw['sa_wq'].T * inv_temp,
                                     raw['sa_wk'].T, raw['sa_wv'].T], axis=1),
        'sa_bqkv': jnp.concatenate([raw['sa_bq'] * inv_temp,
                                    raw['sa_bk'], raw['sa_bv']]).reshape(1, 3 * h),
        'sa_woT': raw['sa_wo'].T, 'sa_bo': raw['sa_bo'].reshape(1, h),

        'ca_wqT': raw['ca_wq'].T * inv_temp,
        'ca_bq': (raw['ca_bq'] * inv_temp).reshape(1, h),
        'ca_wkvT': jnp.concatenate([raw['ca_wk'].T, raw['ca_wv'].T], axis=1),
        'ca_bkv': jnp.concatenate([raw['ca_bk'], raw['ca_bv']]).reshape(1, 2 * h),
        'ca_woT': raw['ca_wo'].T, 'ca_bo': raw['ca_bo'].reshape(1, h),

        'ff_w1T': raw['ff_w1'].T, 'ff_b1': raw['ff_b1'].reshape(1, -1),
        'ff_w2T': raw['ff_w2'].T, 'ff_b2': raw['ff_b2'].reshape(1, -1),
    }
    for i in (1, 2, 3):
        p[f'ln{i}_g'] = raw[f'ln{i}_g'].reshape(1, h)
        p[f'ln{i}_b'] = raw[f'ln{i}_b'].reshape(1, h)
    return p


# ---------------------------------------------------------------------------
# pure-JAX reference mirroring the PyTorch DecoderLayer (eval mode, no masks)
# ---------------------------------------------------------------------------

def _reference_decoder_layer(decoder_input, encoder_output, raw, *,
                             num_heads, eps=1e-6):
    def ln(x, g, b_):
        mean = x.mean(-1, keepdims=True)
        var = ((x - mean) ** 2).mean(-1, keepdims=True)
        return (x - mean) / jnp.sqrt(var + eps) * g + b_

    def mha(q_in, k_in, v_in, prefix):
        bq, sq, h = q_in.shape
        sk = k_in.shape[1]
        hd = h // num_heads
        temp = float(hd) ** 0.5
        q = q_in @ raw[f'{prefix}_wq'].T + raw[f'{prefix}_bq']
        k = k_in @ raw[f'{prefix}_wk'].T + raw[f'{prefix}_bk']
        v = v_in @ raw[f'{prefix}_wv'].T + raw[f'{prefix}_bv']
        q = q.reshape(bq, sq, num_heads, hd).transpose(0, 2, 1, 3)
        k = k.reshape(bq, sk, num_heads, hd).transpose(0, 2, 1, 3)
        v = v.reshape(bq, sk, num_heads, hd).transpose(0, 2, 1, 3)
        a = jnp.einsum('bhqd,bhkd->bhqk', q, k) / temp
        a = jax.nn.softmax(a, axis=-1)
        o = jnp.einsum('bhqk,bhkd->bhqd', a, v)
        o = o.transpose(0, 2, 1, 3).reshape(bq, sq, h)
        return o @ raw[f'{prefix}_wo'].T + raw[f'{prefix}_bo']

    x = decoder_input
    y = ln(x, raw['ln1_g'], raw['ln1_b'])
    x = x + mha(y, y, y, 'sa')
    y = ln(x, raw['ln2_g'], raw['ln2_b'])
    x = x + mha(y, encoder_output, encoder_output, 'ca')
    y = ln(x, raw['ln3_g'], raw['ln3_b'])
    hid = jax.nn.relu(y @ raw['ff_w1'].T + raw['ff_b1'])
    x = x + (hid @ raw['ff_w2'].T + raw['ff_b2'])
    return x


# ---------------------------------------------------------------------------
# main
# ---------------------------------------------------------------------------

if __name__ == "__main__":
    B, S_DEC, S_ENC, H = 2, 8, 16, 32
    NUM_HEADS = 4

    root = jax.random.PRNGKey(0)
    k_params, k_dec, k_enc = jax.random.split(root, 3)

    raw = init_raw_params(k_params, H)
    kparams = prepare_kernel_params(raw, NUM_HEADS)

    decoder_input = jax.random.normal(k_dec, (B, S_DEC, H), jnp.float32)
    encoder_output = jax.random.normal(k_enc, (B, S_ENC, H), jnp.float32)

    fwd = jax.jit(functools.partial(decoder_layer, num_heads=NUM_HEADS))
    out = jax.block_until_ready(fwd(decoder_input, encoder_output, kparams))

    ref = _reference_decoder_layer(decoder_input, encoder_output, raw,
                                   num_heads=NUM_HEADS)
    assert out.shape == (B, S_DEC, H), out.shape
    max_err = float(jnp.max(jnp.abs(out - ref)))
    assert jnp.allclose(out, ref, atol=1e-3, rtol=1e-3), \
        f"max abs err = {max_err}"

    print("KERNEL_OK")
</pallas_src>

<mosaic_0001>
module attributes {stable_mosaic.version = 11 : i64} {
  func.func @_ln_linear_kernel(%arg0: i32, %arg1: memref<16x32xf32, #tpu.memory_space<vmem>>, %arg2: memref<1x32xf32, #tpu.memory_space<vmem>>, %arg3: memref<1x32xf32, #tpu.memory_space<vmem>>, %arg4: memref<32x96xf32, #tpu.memory_space<vmem>>, %arg5: memref<1x96xf32, #tpu.memory_space<vmem>>, %arg6: memref<16x96xf32, #tpu.memory_space<vmem>>) attributes {dimension_semantics = [#tpu.dimension_semantics<parallel>], iteration_bounds = array<i64: 1>, scalar_prefetch = 0 : i64, scratch_operands = 0 : i64, tpu.core_type = #tpu.core_type<tc>, window_params = [{transform_indices = @transform_0, window_bounds = array<i64: 16, 32>}, {pipeline_mode = #tpu.pipeline_mode<synchronous>, transform_indices = @transform_1, window_bounds = array<i64: 1, 32>}, {pipeline_mode = #tpu.pipeline_mode<synchronous>, transform_indices = @transform_2, window_bounds = array<i64: 1, 32>}, {pipeline_mode = #tpu.pipeline_mode<synchronous>, transform_indices = @transform_3, window_bounds = array<i64: 32, 96>}, {pipeline_mode = #tpu.pipeline_mode<synchronous>, transform_indices = @transform_4, window_bounds = array<i64: 1, 96>}, {transform_indices = @transform_5, window_bounds = array<i64: 16, 96>}]} {
    %c0 = arith.constant 0 : index
    %c0_0 = arith.constant 0 : index
    %0 = vector.load %arg1[%c0, %c0_0] : memref<16x32xf32, #tpu.memory_space<vmem>>, vector<16x32xf32>
    %cst = arith.constant dense<0.000000e+00> : vector<16xf32>
    %1 = vector.multi_reduction <add>, %0, %cst [1] : vector<16x32xf32> to vector<16xf32>
    %2 = vector.shape_cast %1 : vector<16xf32> to vector<16x1xf32>
    %cst_1 = arith.constant 3.200000e+01 : f32
    %3 = vector.broadcast %cst_1 : f32 to vector<16x1xf32>
    %4 = arith.divf %2, %3 : vector<16x1xf32>
    %5 = vector.broadcast %4 : vector<16x1xf32> to vector<16x32xf32>
    %6 = arith.subf %0, %5 : vector<16x32xf32>
    %7 = arith.mulf %6, %6 : vector<16x32xf32>
    %cst_2 = arith.constant dense<0.000000e+00> : vector<16xf32>
    %8 = vector.multi_reduction <add>, %7, %cst_2 [1] : vector<16x32xf32> to vector<16xf32>
    %9 = vector.shape_cast %8 : vector<16xf32> to vector<16x1xf32>
    %cst_3 = arith.constant 3.200000e+01 : f32
    %10 = vector.broadcast %cst_3 : f32 to vector<16x1xf32>
    %11 = arith.divf %9, %10 : vector<16x1xf32>
    %cst_4 = arith.constant 9.99999997E-7 : f32
    %12 = vector.broadcast %cst_4 : f32 to vector<16x1xf32>
    %13 = arith.addf %11, %12 : vector<16x1xf32>
    %14 = math.rsqrt %13 : vector<16x1xf32>
    %15 = vector.broadcast %14 : vector<16x1xf32> to vector<16x32xf32>
    %16 = arith.mulf %6, %15 : vector<16x32xf32>
    %c0_5 = arith.constant 0 : index
    %c0_6 = arith.constant 0 : index
    %17 = vector.load %arg2[%c0_5, %c0_6] : memref<1x32xf32, #tpu.memory_space<vmem>>, vector<1x32xf32>
    %18 = vector.broadcast %17 : vector<1x32xf32> to vector<16x32xf32>
    %19 = arith.mulf %16, %18 : vector<16x32xf32>
    %c0_7 = arith.constant 0 : index
    %c0_8 = arith.constant 0 : index
    %20 = vector.load %arg3[%c0_7, %c0_8] : memref<1x32xf32, #tpu.memory_space<vmem>>, vector<1x32xf32>
    %21 = vector.broadcast %20 : vector<1x32xf32> to vector<16x32xf32>
    %22 = arith.addf %19, %21 : vector<16x32xf32>
    %c0_9 = arith.constant 0 : index
    %c0_10 = arith.constant 0 : index
    %23 = vector.load %arg4[%c0_9, %c0_10] : memref<32x96xf32, #tpu.memory_space<vmem>>, vector<32x96xf32>
    %cst_11 = arith.constant dense<0.000000e+00> : vector<16x96xf32>
    %24 = tpu.matmul %22, %23, %cst_11 {dimension_numbers = #tpu.dot_dimension_numbers<[1], [0], [0], [1], [0, 0, 1, 1], [], []>} : vector<16x32xf32>, vector<32x96xf32>, vector<16x96xf32> -> vector<16x96xf32>
    %c0_12 = arith.constant 0 : index
    %c0_13 = arith.constant 0 : index
    %25 = vector.load %arg5[%c0_12, %c0_13] : memref<1x96xf32, #tpu.memory_space<vmem>>, vector<1x96xf32>
    %26 = vector.broadcast %25 : vector<1x96xf32> to vector<16x96xf32>
    %27 = arith.addf %24, %26 : vector<16x96xf32>
    %c0_14 = arith.constant 0 : index
    %c0_15 = arith.constant 0 : index
    %28 = vector.load %arg6[%c0_14, %c0_15] : memref<16x96xf32, #tpu.memory_space<vmem>>, vector<16x96xf32>
    tpu.vector_store %arg6[%c0_14, %c0_15], %27 {strides = array<i32>} : memref<16x96xf32, #tpu.memory_space<vmem>>, vector<16x96xf32>,
    return
  }
  func.func @transform_0(%arg0: i32) -> (i32, i32) {
    %c0_i32 = arith.constant 0 : i32
    %c0_i32_0 = arith.constant 0 : i32
    return %arg0, %c0_i32 : i32, i32
  }
  func.func @transform_1(%arg0: i32) -> (i32, i32) {
    %c0_i32 = arith.constant 0 : i32
    %c0_i32_0 = arith.constant 0 : i32
    %c0_i32_1 = arith.constant 0 : i32
    return %c0_i32, %c0_i32_0 : i32, i32
  }
  func.func @transform_2(%arg0: i32) -> (i32, i32) {
    %c0_i32 = arith.constant 0 : i32
    %c0_i32_0 = arith.constant 0 : i32
    %c0_i32_1 = arith.constant 0 : i32
    return %c0_i32, %c0_i32_0 : i32, i32
  }
  func.func @transform_3(%arg0: i32) -> (i32, i32) {
    %c0_i32 = arith.constant 0 : i32
    %c0_i32_0 = arith.constant 0 : i32
    %c0_i32_1 = arith.constant 0 : i32
    return %c0_i32, %c0_i32_0 : i32, i32
  }
  func.func @transform_4(%arg0: i32) -> (i32, i32) {
    %c0_i32 = arith.constant 0 : i32
    %c0_i32_0 = arith.constant 0 : i32
    %c0_i32_1 = arith.constant 0 : i32
    return %c0_i32, %c0_i32_0 : i32, i32
  }
  func.func @transform_5(%arg0: i32) -> (i32, i32) {
    %c0_i32 = arith.constant 0 : i32
    %c0_i32_0 = arith.constant 0 : i32
    return %arg0, %c0_i32 : i32, i32
  }
}

module attributes {stable_mosaic.version = 11 : i64} {
  func.func @_flash_attention_kernel(%arg0: i32, %arg1: i32, %arg2: i32, %arg3: memref<1x4x8x8xf32, #tpu.memory_space<vmem>>, %arg4: memref<1x4x8x8xf32, #tpu.memory_space<vmem>>, %arg5: memref<1x4x8x8xf32, #tpu.memory_space<vmem>>, %arg6: memref<1x4x8x8xf32, #tpu.memory_space<vmem>>, %arg7: memref<4x8x1xf32, #tpu.memory_space<vmem>>, %arg8: memref<4x8x1xf32, #tpu.memory_space<vmem>>, %arg9: memref<4x8x8xf32, #tpu.memory_space<vmem>>) attributes {dimension_semantics = [#tpu.dimension_semantics<parallel>, #tpu.dimension_semantics<parallel>, #tpu.dimension_semantics<arbitrary>], iteration_bounds = array<i64: 2, 1, 1>, scalar_prefetch = 0 : i64, scratch_operands = 3 : i64, tpu.core_type = #tpu.core_type<tc>, window_params = [{transform_indices = @transform_0, window_bounds = array<i64: 1, 4, 8, 8>}, {transform_indices = @transform_1, window_bounds = array<i64: 1, 4, 8, 8>}, {transform_indices = @transform_2, window_bounds = array<i64: 1, 4, 8, 8>}, {transform_indices = @transform_3, window_bounds = array<i64: 1, 4, 8, 8>}]} {
    %c0_i32 = arith.constant 0 : i32
    %0 = arith.cmpi eq, %arg2, %c0_i32 : i32
    %1 = arith.extui %0 : i1 to i32
    %c0_i32_0 = arith.constant 0 : i32
    %2 = arith.cmpi ne, %1, %c0_i32_0 : i32
    scf.if %2 {
      %cst_35 = arith.constant 0xFF800000 : f32
      %35 = vector.broadcast %cst_35 : f32 to vector<4x8x1xf32>
      %c0_36 = arith.constant 0 : index
      %c0_37 = arith.constant 0 : index
      %c0_38 = arith.constant 0 : index
      %36 = vector.load %arg7[%c0_36, %c0_37, %c0_38] : memref<4x8x1xf32, #tpu.memory_space<vmem>>, vector<4x8x1xf32>
      tpu.vector_store %arg7[%c0_36, %c0_37, %c0_38], %35 {strides = array<i32>} : memref<4x8x1xf32, #tpu.memory_space<vmem>>, vector<4x8x1xf32>,
      %cst_39 = arith.constant 0.000000e+00 : f32
      %37 = vector.broadcast %cst_39 : f32 to vector<4x8x1xf32>
      %c0_40 = arith.constant 0 : index
      %c0_41 = arith.constant 0 : index
      %c0_42 = arith.constant 0 : index
      %38 = vector.load %arg8[%c0_40, %c0_41, %c0_42] : memref<4x8x1xf32, #tpu.memory_space<vmem>>, vector<4x8x1xf32>
      tpu.vector_store %arg8[%c0_40, %c0_41, %c0_42], %37 {strides = array<i32>} : memref<4x8x1xf32, #tpu.memory_space<vmem>>, vector<4x8x1xf32>,
      %cst_43 = arith.constant 0.000000e+00 : f32
      %39 = vector.broadcast %cst_43 : f32 to vector<4x8x8xf32>
      %c0_44 = arith.constant 0 : index
      %c0_45 = arith.constant 0 : index
      %c0_46 = arith.constant 0 : index
      %40 = vector.load %arg9[%c0_44, %c0_45, %c0_46] : memref<4x8x8xf32, #tpu.memory_space<vmem>>, vector<4x8x8xf32>
      tpu.vector_store %arg9[%c0_44, %c0_45, %c0_46], %39 {strides = array<i32>} : memref<4x8x8xf32, #tpu.memory_space<vmem>>, vector<4x8x8xf32>,
    } else {
    }
    %c0 = arith.constant 0 : index
    %c0_1 = arith.constant 0 : index
    %c0_2 = arith.constant 0 : index
    %c0_3 = arith.constant 0 : index
    %3 = vector.load %arg3[%c0, %c0_1, %c0_2, %c0_3] : memref<1x4x8x8xf32, #tpu.memory_space<vmem>>, vector<1x4x8x8xf32>
    %4 = vector.shape_cast %3 : vector<1x4x8x8xf32> to vector<4x8x8xf32>
    %c0_4 = arith.constant 0 : index
    %c0_5 = arith.constant 0 : index
    %c0_6 = arith.constant 0 : index
    %c0_7 = arith.constant 0 : index
    %5 = vector.load %arg4[%c0_4, %c0_5, %c0_6, %c0_7] : memref<1x4x8x8xf32, #tpu.memory_space<vmem>>, vector<1x4x8x8xf32>
    %6 = vector.shape_cast %5 : vector<1x4x8x8xf32> to vector<4x8x8xf32>
    %c0_8 = arith.constant 0 : index
    %c0_9 = arith.constant 0 : index
    %c0_10 = arith.constant 0 : index
    %c0_11 = arith.constant 0 : index
    %7 = vector.load %arg5[%c0_8, %c0_9, %c0_10, %c0_11] : memref<1x4x8x8xf32, #tpu.memory_space<vmem>>, vector<1x4x8x8xf32>
    %8 = vector.shape_cast %7 : vector<1x4x8x8xf32> to vector<4x8x8xf32>
    "tpu.trace_start"() <{level = 10 : i32, message = "hqd,hkd->hqk"}> : () -> ()
    %cst = arith.constant dense<0.000000e+00> : vector<4x8x8xf32>
    %9 = tpu.matmul %4, %6, %cst {dimension_numbers = #tpu.dot_dimension_numbers<[2], [2], [1], [1], [0, 0, 0, 1, 1, 1], [0], [0]>} : vector<4x8x8xf32>, vector<4x8x8xf32>, vector<4x8x8xf32> -> vector<4x8x8xf32>
    "tpu.trace_stop"() : () -> ()
    %c0_12 = arith.constant 0 : index
    %c0_13 = arith.constant 0 : index
    %c0_14 = arith.constant 0 : index
    %10 = vector.load %arg7[%c0_12, %c0_13, %c0_14] : memref<4x8x1xf32, #tpu.memory_space<vmem>>, vector<4x8x1xf32>
    %cst_15 = arith.constant dense<0xFF800000> : vector<4x8xf32>
    %11 = vector.multi_reduction <maximumf>, %9, %cst_15 [2] : vector<4x8x8xf32> to vector<4x8xf32>
    %12 = vector.shape_cast %11 : vector<4x8xf32> to vector<4x8x1xf32>
    %13 = arith.maximumf %10, %12 : vector<4x8x1xf32>
    %14 = arith.subf %10, %13 : vector<4x8x1xf32>
    %15 = math.exp %14 : vector<4x8x1xf32>
    %16 = vector.broadcast %13 : vector<4x8x1xf32> to vector<4x8x8xf32>
    %17 = arith.subf %9, %16 : vector<4x8x8xf32>
    %18 = math.exp %17 : vector<4x8x8xf32>
    %c0_16 = arith.constant 0 : index
    %c0_17 = arith.constant 0 : index
    %c0_18 = arith.constant 0 : index
    %19 = vector.load %arg8[%c0_16, %c0_17, %c0_18] : memref<4x8x1xf32, #tpu.memory_space<vmem>>, vector<4x8x1xf32>
    %20 = arith.mulf %15, %19 : vector<4x8x1xf32>
    %cst_19 = arith.constant dense<0.000000e+00> : vector<4x8xf32>
    %21 = vector.multi_reduction <add>, %18, %cst_19 [2] : vector<4x8x8xf32> to vector<4x8xf32>
    %22 = vector.shape_cast %21 : vector<4x8xf32> to vector<4x8x1xf32>
    %23 = arith.addf %20, %22 : vector<4x8x1xf32>
    %c0_20 = arith.constant 0 : index
    %c0_21 = arith.constant 0 : index
    %c0_22 = arith.constant 0 : index
    %24 = vector.load %arg8[%c0_20, %c0_21, %c0_22] : memref<4x8x1xf32, #tpu.memory_space<vmem>>, vector<4x8x1xf32>
    tpu.vector_store %arg8[%c0_20, %c0_21, %c0_22], %23 {strides = array<i32>} : memref<4x8x1xf32, #tpu.memory_space<vmem>>, vector<4x8x1xf32>,
    %c0_23 = arith.constant 0 : index
    %c0_24 = arith.constant 0 : index
    %c0_25 = arith.constant 0 : index
    %25 = vector.load %arg9[%c0_23, %c0_24, %c0_25] : memref<4x8x8xf32, #tpu.memory_space<vmem>>, vector<4x8x8xf32>
    %26 = vector.broadcast %15 : vector<4x8x1xf32> to vector<4x8x8xf32>
    %27 = arith.mulf %26, %25 : vector<4x8x8xf32>
    "tpu.trace_start"() <{level = 10 : i32, message = "hqk,hkd->hqd"}> : () -> ()
    %cst_26 = arith.constant dense<0.000000e+00> : vector<4x8x8xf32>
    %28 = tpu.matmul %18, %8, %cst_26 {dimension_numbers = #tpu.dot_dimension_numbers<[2], [1], [1], [2], [0, 0, 0, 1, 1, 2], [0], [0]>} : vector<4x8x8xf32>, vector<4x8x8xf32>, vector<4x8x8xf32> -> vector<4x8x8xf32>
    "tpu.trace_stop"() : () -> ()
    %29 = arith.addf %27, %28 : vector<4x8x8xf32>
    %c0_27 = arith.constant 0 : index
    %c0_28 = arith.constant 0 : index
    %c0_29 = arith.constant 0 : index
    %30 = vector.load %arg9[%c0_27, %c0_28, %c0_29] : memref<4x8x8xf32, #tpu.memory_space<vmem>>, vector<4x8x8xf32>
    tpu.vector_store %arg9[%c0_27, %c0_28, %c0_29], %29 {strides = array<i32>} : memref<4x8x8xf32, #tpu.memory_space<vmem>>, vector<4x8x8xf32>,
    %c0_30 = arith.constant 0 : index
    %c0_31 = arith.constant 0 : index
    %c0_32 = arith.constant 0 : index
    %31 = vector.load %arg7[%c0_30, %c0_31, %c0_32] : memref<4x8x1xf32, #tpu.memory_space<vmem>>, vector<4x8x1xf32>
    tpu.vector_store %arg7[%c0_30, %c0_31, %c0_32], %13 {strides = array<i32>} : memref<4x8x1xf32, #tpu.memory_space<vmem>>, vector<4x8x1xf32>,
    %c0_i32_33 = arith.constant 0 : i32
    %32 = arith.cmpi eq, %arg2, %c0_i32_33 : i32
    %33 = arith.extui %32 : i1 to i32
    %c0_i32_34 = arith.constant 0 : i32
    %34 = arith.cmpi ne, %33, %c0_i32_34 : i32
    scf.if %34 {
      %c0_35 = arith.constant 0 : index
      %c0_36 = arith.constant 0 : index
      %c0_37 = arith.constant 0 : index
      %35 = vector.load %arg9[%c0_35, %c0_36, %c0_37] : memref<4x8x8xf32, #tpu.memory_space<vmem>>, vector<4x8x8xf32>
      %c0_38 = arith.constant 0 : index
      %c0_39 = arith.constant 0 : index
      %c0_40 = arith.constant 0 : index
      %36 = vector.load %arg8[%c0_38, %c0_39, %c0_40] : memref<4x8x1xf32, #tpu.memory_space<vmem>>, vector<4x8x1xf32>
      %37 = vector.broadcast %36 : vector<4x8x1xf32> to vector<4x8x8xf32>
      %38 = arith.divf %35, %37 : vector<4x8x8xf32>
      %c0_41 = arith.constant 0 : index
      %c0_42 = arith.constant 0 : index
      %c0_43 = arith.constant 0 : index
      %c0_44 = arith.constant 0 : index
      %39 = vector.load %arg6[%c0_41, %c0_42, %c0_43, %c0_44] : memref<1x4x8x8xf32, #tpu.memory_space<vmem>>, vector<1x4x8x8xf32>
      %40 = vector.shape_cast %39 : vector<1x4x8x8xf32> to vector<4x8x8xf32>
      %41 = vector.shape_cast %38 : vector<4x8x8xf32> to vector<1x4x8x8xf32>
      tpu.vector_store %arg6[%c0_41, %c0_42, %c0_43, %c0_44], %41 {strides = array<i32>} : memref<1x4x8x8xf32, #tpu.memory_space<vmem>>, vector<1x4x8x8xf32>,
    } else {
    }
    return
  }
  func.func @transform_0(%arg0: i32, %arg1: i32, %arg2: i32) -> (i32, i32, i32, i32) {
    %c0_i32 = arith.constant 0 : i32
    %c0_i32_0 = arith.constant 0 : i32
    %c0_i32_1 = arith.constant 0 : i32
    return %arg0, %c0_i32, %arg1, %c0_i32_0 : i32, i32, i32, i32
  }
  func.func @transform_1(%arg0: i32, %arg1: i32, %arg2: i32) -> (i32, i32, i32, i32) {
    %c0_i32 = arith.constant 0 : i32
    %c0_i32_0 = arith.constant 0 : i32
    %c0_i32_1 = arith.constant 0 : i32
    return %arg0, %c0_i32, %arg2, %c0_i32_0 : i32, i32, i32, i32
  }
  func.func @transform_2(%arg0: i32, %arg1: i32, %arg2: i32) -> (i32, i32, i32, i32) {
    %c0_i32 = arith.constant 0 : i32
    %c0_i32_0 = arith.constant 0 : i32
    %c0_i32_1 = arith.constant 0 : i32
    return %arg0, %c0_i32, %arg2, %c0_i32_0 : i32, i32, i32, i32
  }
  func.func @transform_3(%arg0: i32, %arg1: i32, %arg2: i32) -> (i32, i32, i32, i32) {
    %c0_i32 = arith.constant 0 : i32
    %c0_i32_0 = arith.constant 0 : i32
    %c0_i32_1 = arith.constant 0 : i32
    return %arg0, %c0_i32, %arg1, %c0_i32_0 : i32, i32, i32, i32
  }
}

module attributes {stable_mosaic.version = 11 : i64} {
  func.func @_residual_linear_kernel(%arg0: i32, %arg1: memref<16x32xf32, #tpu.memory_space<vmem>>, %arg2: memref<16x32xf32, #tpu.memory_space<vmem>>, %arg3: memref<32x32xf32, #tpu.memory_space<vmem>>, %arg4: memref<1x32xf32, #tpu.memory_space<vmem>>, %arg5: memref<16x32xf32, #tpu.memory_space<vmem>>) attributes {dimension_semantics = [#tpu.dimension_semantics<parallel>], iteration_bounds = array<i64: 1>, scalar_prefetch = 0 : i64, scratch_operands = 0 : i64, tpu.core_type = #tpu.core_type<tc>, window_params = [{transform_indices = @transform_0, window_bounds = array<i64: 16, 32>}, {transform_indices = @transform_1, window_bounds = array<i64: 16, 32>}, {pipeline_mode = #tpu.pipeline_mode<synchronous>, transform_indices = @transform_2, window_bounds = array<i64: 32, 32>}, {pipeline_mode = #tpu.pipeline_mode<synchronous>, transform_indices = @transform_3, window_bounds = array<i64: 1, 32>}, {transform_indices = @transform_4, window_bounds = array<i64: 16, 32>}]} {
    %c0 = arith.constant 0 : index
    %c0_0 = arith.constant 0 : index
    %0 = vector.load %arg2[%c0, %c0_0] : memref<16x32xf32, #tpu.memory_space<vmem>>, vector<16x32xf32>
    %c0_1 = arith.constant 0 : index
    %c0_2 = arith.constant 0 : index
    %1 = vector.load %arg3[%c0_1, %c0_2] : memref<32x32xf32, #tpu.memory_space<vmem>>, vector<32x32xf32>
    %cst = arith.constant dense<0.000000e+00> : vector<16x32xf32>
    %2 = tpu.matmul %0, %1, %cst {dimension_numbers = #tpu.dot_dimension_numbers<[1], [0], [0], [1], [0, 0, 1, 1], [], []>} : vector<16x32xf32>, vector<32x32xf32>, vector<16x32xf32> -> vector<16x32xf32>
    %c0_3 = arith.constant 0 : index
    %c0_4 = arith.constant 0 : index
    %3 = vector.load %arg4[%c0_3, %c0_4] : memref<1x32xf32, #tpu.memory_space<vmem>>, vector<1x32xf32>
    %4 = vector.broadcast %3 : vector<1x32xf32> to vector<16x32xf32>
    %5 = arith.addf %2, %4 : vector<16x32xf32>
    %c0_5 = arith.constant 0 : index
    %c0_6 = arith.constant 0 : index
    %6 = vector.load %arg1[%c0_5, %c0_6] : memref<16x32xf32, #tpu.memory_space<vmem>>, vector<16x32xf32>
    %7 = arith.addf %5, %6 : vector<16x32xf32>
    %c0_7 = arith.constant 0 : index
    %c0_8 = arith.constant 0 : index
    %8 = vector.load %arg5[%c0_7, %c0_8] : memref<16x32xf32, #tpu.memory_space<vmem>>, vector<16x32xf32>
    tpu.vector_store %arg5[%c0_7, %c0_8], %7 {strides = array<i32>} : memref<16x32xf32, #tpu.memory_space<vmem>>, vector<16x32xf32>,
    return
  }
  func.func @transform_0(%arg0: i32) -> (i32, i32) {
    %c0_i32 = arith.constant 0 : i32
    %c0_i32_0 = arith.constant 0 : i32
    return %arg0, %c0_i32 : i32, i32
  }
  func.func @transform_1(%arg0: i32) -> (i32, i32) {
    %c0_i32 = arith.constant 0 : i32
    %c0_i32_0 = arith.constant 0 : i32
    return %arg0, %c0_i32 : i32, i32
  }
  func.func @transform_2(%arg0: i32) -> (i32, i32) {
    %c0_i32 = arith.constant 0 : i32
    %c0_i32_0 = arith.constant 0 : i32
    %c0_i32_1 = arith.constant 0 : i32
    return %c0_i32, %c0_i32_0 : i32, i32
  }
  func.func @transform_3(%arg0: i32) -> (i32, i32) {
    %c0_i32 = arith.constant 0 : i32
    %c0_i32_0 = arith.constant 0 : i32
    %c0_i32_1 = arith.constant 0 : i32
    return %c0_i32, %c0_i32_0 : i32, i32
  }
  func.func @transform_4(%arg0: i32) -> (i32, i32) {
    %c0_i32 = arith.constant 0 : i32
    %c0_i32_0 = arith.constant 0 : i32
    return %arg0, %c0_i32 : i32, i32
  }
}

module attributes {stable_mosaic.version = 11 : i64} {
  func.func @_ln_linear_kernel(%arg0: i32, %arg1: memref<16x32xf32, #tpu.memory_space<vmem>>, %arg2: memref<1x32xf32, #tpu.memory_space<vmem>>, %arg3: memref<1x32xf32, #tpu.memory_space<vmem>>, %arg4: memref<32x32xf32, #tpu.memory_space<vmem>>, %arg5: memref<1x32xf32, #tpu.memory_space<vmem>>, %arg6: memref<16x32xf32, #tpu.memory_space<vmem>>) attributes {dimension_semantics = [#tpu.dimension_semantics<parallel>], iteration_bounds = array<i64: 1>, scalar_prefetch = 0 : i64, scratch_operands = 0 : i64, tpu.core_type = #tpu.core_type<tc>, window_params = [{transform_indices = @transform_0, window_bounds = array<i64: 16, 32>}, {pipeline_mode = #tpu.pipeline_mode<synchronous>, transform_indices = @transform_1, window_bounds = array<i64: 1, 32>}, {pipeline_mode = #tpu.pipeline_mode<synchronous>, transform_indices = @transform_2, window_bounds = array<i64: 1, 32>}, {pipeline_mode = #tpu.pipeline_mode<synchronous>, transform_indices = @transform_3, window_bounds = array<i64: 32, 32>}, {pipeline_mode = #tpu.pipeline_mode<synchronous>, transform_indices = @transform_4, window_bounds = array<i64: 1, 32>}, {transform_indices = @transform_5, window_bounds = array<i64: 16, 32>}]} {
    %c0 = arith.constant 0 : index
    %c0_0 = arith.constant 0 : index
    %0 = vector.load %arg1[%c0, %c0_0] : memref<16x32xf32, #tpu.memory_space<vmem>>, vector<16x32xf32>
    %cst = arith.constant dense<0.000000e+00> : vector<16xf32>
    %1 = vector.multi_reduction <add>, %0, %cst [1] : vector<16x32xf32> to vector<16xf32>
    %2 = vector.shape_cast %1 : vector<16xf32> to vector<16x1xf32>
    %cst_1 = arith.constant 3.200000e+01 : f32
    %3 = vector.broadcast %cst_1 : f32 to vector<16x1xf32>
    %4 = arith.divf %2, %3 : vector<16x1xf32>
    %5 = vector.broadcast %4 : vector<16x1xf32> to vector<16x32xf32>
    %6 = arith.subf %0, %5 : vector<16x32xf32>
    %7 = arith.mulf %6, %6 : vector<16x32xf32>
    %cst_2 = arith.constant dense<0.000000e+00> : vector<16xf32>
    %8 = vector.multi_reduction <add>, %7, %cst_2 [1] : vector<16x32xf32> to vector<16xf32>
    %9 = vector.shape_cast %8 : vector<16xf32> to vector<16x1xf32>
    %cst_3 = arith.constant 3.200000e+01 : f32
    %10 = vector.broadcast %cst_3 : f32 to vector<16x1xf32>
    %11 = arith.divf %9, %10 : vector<16x1xf32>
    %cst_4 = arith.constant 9.99999997E-7 : f32
    %12 = vector.broadcast %cst_4 : f32 to vector<16x1xf32>
    %13 = arith.addf %11, %12 : vector<16x1xf32>
    %14 = math.rsqrt %13 : vector<16x1xf32>
    %15 = vector.broadcast %14 : vector<16x1xf32> to vector<16x32xf32>
    %16 = arith.mulf %6, %15 : vector<16x32xf32>
    %c0_5 = arith.constant 0 : index
    %c0_6 = arith.constant 0 : index
    %17 = vector.load %arg2[%c0_5, %c0_6] : memref<1x32xf32, #tpu.memory_space<vmem>>, vector<1x32xf32>
    %18 = vector.broadcast %17 : vector<1x32xf32> to vector<16x32xf32>
    %19 = arith.mulf %16, %18 : vector<16x32xf32>
    %c0_7 = arith.constant 0 : index
    %c0_8 = arith.constant 0 : index
    %20 = vector.load %arg3[%c0_7, %c0_8] : memref<1x32xf32, #tpu.memory_space<vmem>>, vector<1x32xf32>
    %21 = vector.broadcast %20 : vector<1x32xf32> to vector<16x32xf32>
    %22 = arith.addf %19, %21 : vector<16x32xf32>
    %c0_9 = arith.constant 0 : index
    %c0_10 = arith.constant 0 : index
    %23 = vector.load %arg4[%c0_9, %c0_10] : memref<32x32xf32, #tpu.memory_space<vmem>>, vector<32x32xf32>
    %cst_11 = arith.constant dense<0.000000e+00> : vector<16x32xf32>
    %24 = tpu.matmul %22, %23, %cst_11 {dimension_numbers = #tpu.dot_dimension_numbers<[1], [0], [0], [1], [0, 0, 1, 1], [], []>} : vector<16x32xf32>, vector<32x32xf32>, vector<16x32xf32> -> vector<16x32xf32>
    %c0_12 = arith.constant 0 : index
    %c0_13 = arith.constant 0 : index
    %25 = vector.load %arg5[%c0_12, %c0_13] : memref<1x32xf32, #tpu.memory_space<vmem>>, vector<1x32xf32>
    %26 = vector.broadcast %25 : vector<1x32xf32> to vector<16x32xf32>
    %27 = arith.addf %24, %26 : vector<16x32xf32>
    %c0_14 = arith.constant 0 : index
    %c0_15 = arith.constant 0 : index
    %28 = vector.load %arg6[%c0_14, %c0_15] : memref<16x32xf32, #tpu.memory_space<vmem>>, vector<16x32xf32>
    tpu.vector_store %arg6[%c0_14, %c0_15], %27 {strides = array<i32>} : memref<16x32xf32, #tpu.memory_space<vmem>>, vector<16x32xf32>,
    return
  }
  func.func @transform_0(%arg0: i32) -> (i32, i32) {
    %c0_i32 = arith.constant 0 : i32
    %c0_i32_0 = arith.constant 0 : i32
    return %arg0, %c0_i32 : i32, i32
  }
  func.func @transform_1(%arg0: i32) -> (i32, i32) {
    %c0_i32 = arith.constant 0 : i32
    %c0_i32_0 = arith.constant 0 : i32
    %c0_i32_1 = arith.constant 0 : i32
    return %c0_i32, %c0_i32_0 : i32, i32
  }
  func.func @transform_2(%arg0: i32) -> (i32, i32) {
    %c0_i32 = arith.constant 0 : i32
    %c0_i32_0 = arith.constant 0 : i32
    %c0_i32_1 = arith.constant 0 : i32
    return %c0_i32, %c0_i32_0 : i32, i32
  }
  func.func @transform_3(%arg0: i32) -> (i32, i32) {
    %c0_i32 = arith.constant 0 : i32
    %c0_i32_0 = arith.constant 0 : i32
    %c0_i32_1 = arith.constant 0 : i32
    return %c0_i32, %c0_i32_0 : i32, i32
  }
  func.func @transform_4(%arg0: i32) -> (i32, i32) {
    %c0_i32 = arith.constant 0 : i32
    %c0_i32_0 = arith.constant 0 : i32
    %c0_i32_1 = arith.constant 0 : i32
    return %c0_i32, %c0_i32_0 : i32, i32
  }
  func.func @transform_5(%arg0: i32) -> (i32, i32) {
    %c0_i32 = arith.constant 0 : i32
    %c0_i32_0 = arith.constant 0 : i32
    return %arg0, %c0_i32 : i32, i32
  }
}

module attributes {stable_mosaic.version = 11 : i64} {
  func.func @_ln_linear_kernel(%arg0: i32, %arg1: memref<32x32xf32, #tpu.memory_space<vmem>>, %arg2: memref<32x64xf32, #tpu.memory_space<vmem>>, %arg3: memref<1x64xf32, #tpu.memory_space<vmem>>, %arg4: memref<32x64xf32, #tpu.memory_space<vmem>>) attributes {dimension_semantics = [#tpu.dimension_semantics<parallel>], iteration_bounds = array<i64: 1>, scalar_prefetch = 0 : i64, scratch_operands = 0 : i64, tpu.core_type = #tpu.core_type<tc>, window_params = [{transform_indices = @transform_0, window_bounds = array<i64: 32, 32>}, {pipeline_mode = #tpu.pipeline_mode<synchronous>, transform_indices = @transform_1, window_bounds = array<i64: 32, 64>}, {pipeline_mode = #tpu.pipeline_mode<synchronous>, transform_indices = @transform_2, window_bounds = array<i64: 1, 64>}, {transform_indices = @transform_3, window_bounds = array<i64: 32, 64>}]} {
    %c0 = arith.constant 0 : index
    %c0_0 = arith.constant 0 : index
    %0 = vector.load %arg1[%c0, %c0_0] : memref<32x32xf32, #tpu.memory_space<vmem>>, vector<32x32xf32>
    %c0_1 = arith.constant 0 : index
    %c0_2 = arith.constant 0 : index
    %1 = vector.load %arg2[%c0_1, %c0_2] : memref<32x64xf32, #tpu.memory_space<vmem>>, vector<32x64xf32>
    %cst = arith.constant dense<0.000000e+00> : vector<32x64xf32>
    %2 = tpu.matmul %0, %1, %cst {dimension_numbers = #tpu.dot_dimension_numbers<[1], [0], [0], [1], [0, 0, 1, 1], [], []>} : vector<32x32xf32>, vector<32x64xf32>, vector<32x64xf32> -> vector<32x64xf32>
    %c0_3 = arith.constant 0 : index
    %c0_4 = arith.constant 0 : index
    %3 = vector.load %arg3[%c0_3, %c0_4] : memref<1x64xf32, #tpu.memory_space<vmem>>, vector<1x64xf32>
    %4 = vector.broadcast %3 : vector<1x64xf32> to vector<32x64xf32>
    %5 = arith.addf %2, %4 : vector<32x64xf32>
    %c0_5 = arith.constant 0 : index
    %c0_6 = arith.constant 0 : index
    %6 = vector.load %arg4[%c0_5, %c0_6] : memref<32x64xf32, #tpu.memory_space<vmem>>, vector<32x64xf32>
    tpu.vector_store %arg4[%c0_5, %c0_6], %5 {strides = array<i32>} : memref<32x64xf32, #tpu.memory_space<vmem>>, vector<32x64xf32>,
    return
  }
  func.func @transform_0(%arg0: i32) -> (i32, i32) {
    %c0_i32 = arith.constant 0 : i32
    %c0_i32_0 = arith.constant 0 : i32
    return %arg0, %c0_i32 : i32, i32
  }
  func.func @transform_1(%arg0: i32) -> (i32, i32) {
    %c0_i32 = arith.constant 0 : i32
    %c0_i32_0 = arith.constant 0 : i32
    %c0_i32_1 = arith.constant 0 : i32
    return %c0_i32, %c0_i32_0 : i32, i32
  }
  func.func @transform_2(%arg0: i32) -> (i32, i32) {
    %c0_i32 = arith.constant 0 : i32
    %c0_i32_0 = arith.constant 0 : i32
    %c0_i32_1 = arith.constant 0 : i32
    return %c0_i32, %c0_i32_0 : i32, i32
  }
  func.func @transform_3(%arg0: i32) -> (i32, i32) {
    %c0_i32 = arith.constant 0 : i32
    %c0_i32_0 = arith.constant 0 : i32
    return %arg0, %c0_i32 : i32, i32
  }
}

module attributes {stable_mosaic.version = 11 : i64} {
  func.func @_flash_attention_kernel(%arg0: i32, %arg1: i32, %arg2: i32, %arg3: memref<1x4x8x8xf32, #tpu.memory_space<vmem>>, %arg4: memref<1x4x16x8xf32, #tpu.memory_space<vmem>>, %arg5: memref<1x4x16x8xf32, #tpu.memory_space<vmem>>, %arg6: memref<1x4x8x8xf32, #tpu.memory_space<vmem>>, %arg7: memref<4x8x1xf32, #tpu.memory_space<vmem>>, %arg8: memref<4x8x1xf32, #tpu.memory_space<vmem>>, %arg9: memref<4x8x8xf32, #tpu.memory_space<vmem>>) attributes {dimension_semantics = [#tpu.dimension_semantics<parallel>, #tpu.dimension_semantics<parallel>, #tpu.dimension_semantics<arbitrary>], iteration_bounds = array<i64: 2, 1, 1>, scalar_prefetch = 0 : i64, scratch_operands = 3 : i64, tpu.core_type = #tpu.core_type<tc>, window_params = [{transform_indices = @transform_0, window_bounds = array<i64: 1, 4, 8, 8>}, {transform_indices = @transform_1, window_bounds = array<i64: 1, 4, 16, 8>}, {transform_indices = @transform_2, window_bounds = array<i64: 1, 4, 16, 8>}, {transform_indices = @transform_3, window_bounds = array<i64: 1, 4, 8, 8>}]} {
    %c0_i32 = arith.constant 0 : i32
    %0 = arith.cmpi eq, %arg2, %c0_i32 : i32
    %1 = arith.extui %0 : i1 to i32
    %c0_i32_0 = arith.constant 0 : i32
    %2 = arith.cmpi ne, %1, %c0_i32_0 : i32
    scf.if %2 {
      %cst_35 = arith.constant 0xFF800000 : f32
      %35 = vector.broadcast %cst_35 : f32 to vector<4x8x1xf32>
      %c0_36 = arith.constant 0 : index
      %c0_37 = arith.constant 0 : index
      %c0_38 = arith.constant 0 : index
      %36 = vector.load %arg7[%c0_36, %c0_37, %c0_38] : memref<4x8x1xf32, #tpu.memory_space<vmem>>, vector<4x8x1xf32>
      tpu.vector_store %arg7[%c0_36, %c0_37, %c0_38], %35 {strides = array<i32>} : memref<4x8x1xf32, #tpu.memory_space<vmem>>, vector<4x8x1xf32>,
      %cst_39 = arith.constant 0.000000e+00 : f32
      %37 = vector.broadcast %cst_39 : f32 to vector<4x8x1xf32>
      %c0_40 = arith.constant 0 : index
      %c0_41 = arith.constant 0 : index
      %c0_42 = arith.constant 0 : index
      %38 = vector.load %arg8[%c0_40, %c0_41, %c0_42] : memref<4x8x1xf32, #tpu.memory_space<vmem>>, vector<4x8x1xf32>
      tpu.vector_store %arg8[%c0_40, %c0_41, %c0_42], %37 {strides = array<i32>} : memref<4x8x1xf32, #tpu.memory_space<vmem>>, vector<4x8x1xf32>,
      %cst_43 = arith.constant 0.000000e+00 : f32
      %39 = vector.broadcast %cst_43 : f32 to vector<4x8x8xf32>
      %c0_44 = arith.constant 0 : index
      %c0_45 = arith.constant 0 : index
      %c0_46 = arith.constant 0 : index
      %40 = vector.load %arg9[%c0_44, %c0_45, %c0_46] : memref<4x8x8xf32, #tpu.memory_space<vmem>>, vector<4x8x8xf32>
      tpu.vector_store %arg9[%c0_44, %c0_45, %c0_46], %39 {strides = array<i32>} : memref<4x8x8xf32, #tpu.memory_space<vmem>>, vector<4x8x8xf32>,
    } else {
    }
    %c0 = arith.constant 0 : index
    %c0_1 = arith.constant 0 : index
    %c0_2 = arith.constant 0 : index
    %c0_3 = arith.constant 0 : index
    %3 = vector.load %arg3[%c0, %c0_1, %c0_2, %c0_3] : memref<1x4x8x8xf32, #tpu.memory_space<vmem>>, vector<1x4x8x8xf32>
    %4 = vector.shape_cast %3 : vector<1x4x8x8xf32> to vector<4x8x8xf32>
    %c0_4 = arith.constant 0 : index
    %c0_5 = arith.constant 0 : index
    %c0_6 = arith.constant 0 : index
    %c0_7 = arith.constant 0 : index
    %5 = vector.load %arg4[%c0_4, %c0_5, %c0_6, %c0_7] : memref<1x4x16x8xf32, #tpu.memory_space<vmem>>, vector<1x4x16x8xf32>
    %6 = vector.shape_cast %5 : vector<1x4x16x8xf32> to vector<4x16x8xf32>
    %c0_8 = arith.constant 0 : index
    %c0_9 = arith.constant 0 : index
    %c0_10 = arith.constant 0 : index
    %c0_11 = arith.constant 0 : index
    %7 = vector.load %arg5[%c0_8, %c0_9, %c0_10, %c0_11] : memref<1x4x16x8xf32, #tpu.memory_space<vmem>>, vector<1x4x16x8xf32>
    %8 = vector.shape_cast %7 : vector<1x4x16x8xf32> to vector<4x16x8xf32>
    "tpu.trace_start"() <{level = 10 : i32, message = "hqd,hkd->hqk"}> : () -> ()
    %cst = arith.constant dense<0.000000e+00> : vector<4x8x16xf32>
    %9 = tpu.matmul %4, %6, %cst {dimension_numbers = #tpu.dot_dimension_numbers<[2], [2], [1], [1], [0, 0, 0, 1, 1, 1], [0], [0]>} : vector<4x8x8xf32>, vector<4x16x8xf32>, vector<4x8x16xf32> -> vector<4x8x16xf32>
    "tpu.trace_stop"() : () -> ()
    %c0_12 = arith.constant 0 : index
    %c0_13 = arith.constant 0 : index
    %c0_14 = arith.constant 0 : index
    %10 = vector.load %arg7[%c0_12, %c0_13, %c0_14] : memref<4x8x1xf32, #tpu.memory_space<vmem>>, vector<4x8x1xf32>
    %cst_15 = arith.constant dense<0xFF800000> : vector<4x8xf32>
    %11 = vector.multi_reduction <maximumf>, %9, %cst_15 [2] : vector<4x8x16xf32> to vector<4x8xf32>
    %12 = vector.shape_cast %11 : vector<4x8xf32> to vector<4x8x1xf32>
    %13 = arith.maximumf %10, %12 : vector<4x8x1xf32>
    %14 = arith.subf %10, %13 : vector<4x8x1xf32>
    %15 = math.exp %14 : vector<4x8x1xf32>
    %16 = vector.broadcast %13 : vector<4x8x1xf32> to vector<4x8x16xf32>
    %17 = arith.subf %9, %16 : vector<4x8x16xf32>
    %18 = math.exp %17 : vector<4x8x16xf32>
    %c0_16 = arith.constant 0 : index
    %c0_17 = arith.constant 0 : index
    %c0_18 = arith.constant 0 : index
    %19 = vector.load %arg8[%c0_16, %c0_17, %c0_18] : memref<4x8x1xf32, #tpu.memory_space<vmem>>, vector<4x8x1xf32>
    %20 = arith.mulf %15, %19 : vector<4x8x1xf32>
    %cst_19 = arith.constant dense<0.000000e+00> : vector<4x8xf32>
    %21 = vector.multi_reduction <add>, %18, %cst_19 [2] : vector<4x8x16xf32> to vector<4x8xf32>
    %22 = vector.shape_cast %21 : vector<4x8xf32> to vector<4x8x1xf32>
    %23 = arith.addf %20, %22 : vector<4x8x1xf32>
    %c0_20 = arith.constant 0 : index
    %c0_21 = arith.constant 0 : index
    %c0_22 = arith.constant 0 : index
    %24 = vector.load %arg8[%c0_20, %c0_21, %c0_22] : memref<4x8x1xf32, #tpu.memory_space<vmem>>, vector<4x8x1xf32>
    tpu.vector_store %arg8[%c0_20, %c0_21, %c0_22], %23 {strides = array<i32>} : memref<4x8x1xf32, #tpu.memory_space<vmem>>, vector<4x8x1xf32>,
    %c0_23 = arith.constant 0 : index
    %c0_24 = arith.constant 0 : index
    %c0_25 = arith.constant 0 : index
    %25 = vector.load %arg9[%c0_23, %c0_24, %c0_25] : memref<4x8x8xf32, #tpu.memory_space<vmem>>, vector<4x8x8xf32>
    %26 = vector.broadcast %15 : vector<4x8x1xf32> to vector<4x8x8xf32>
    %27 = arith.mulf %26, %25 : vector<4x8x8xf32>
    "tpu.trace_start"() <{level = 10 : i32, message = "hqk,hkd->hqd"}> : () -> ()
    %cst_26 = arith.constant dense<0.000000e+00> : vector<4x8x8xf32>
    %28 = tpu.matmul %18, %8, %cst_26 {dimension_numbers = #tpu.dot_dimension_numbers<[2], [1], [1], [2], [0, 0, 0, 1, 1, 2], [0], [0]>} : vector<4x8x16xf32>, vector<4x16x8xf32>, vector<4x8x8xf32> -> vector<4x8x8xf32>
    "tpu.trace_stop"() : () -> ()
    %29 = arith.addf %27, %28 : vector<4x8x8xf32>
    %c0_27 = arith.constant 0 : index
    %c0_28 = arith.constant 0 : index
    %c0_29 = arith.constant 0 : index
    %30 = vector.load %arg9[%c0_27, %c0_28, %c0_29] : memref<4x8x8xf32, #tpu.memory_space<vmem>>, vector<4x8x8xf32>
    tpu.vector_store %arg9[%c0_27, %c0_28, %c0_29], %29 {strides = array<i32>} : memref<4x8x8xf32, #tpu.memory_space<vmem>>, vector<4x8x8xf32>,
    %c0_30 = arith.constant 0 : index
    %c0_31 = arith.constant 0 : index
    %c0_32 = arith.constant 0 : index
    %31 = vector.load %arg7[%c0_30, %c0_31, %c0_32] : memref<4x8x1xf32, #tpu.memory_space<vmem>>, vector<4x8x1xf32>
    tpu.vector_store %arg7[%c0_30, %c0_31, %c0_32], %13 {strides = array<i32>} : memref<4x8x1xf32, #tpu.memory_space<vmem>>, vector<4x8x1xf32>,
    %c0_i32_33 = arith.constant 0 : i32
    %32 = arith.cmpi eq, %arg2, %c0_i32_33 : i32
    %33 = arith.extui %32 : i1 to i32
    %c0_i32_34 = arith.constant 0 : i32
    %34 = arith.cmpi ne, %33, %c0_i32_34 : i32
    scf.if %34 {
      %c0_35 = arith.constant 0 : index
      %c0_36 = arith.constant 0 : index
      %c0_37 = arith.constant 0 : index
      %35 = vector.load %arg9[%c0_35, %c0_36, %c0_37] : memref<4x8x8xf32, #tpu.memory_space<vmem>>, vector<4x8x8xf32>
      %c0_38 = arith.constant 0 : index
      %c0_39 = arith.constant 0 : index
      %c0_40 = arith.constant 0 : index
      %36 = vector.load %arg8[%c0_38, %c0_39, %c0_40] : memref<4x8x1xf32, #tpu.memory_space<vmem>>, vector<4x8x1xf32>
      %37 = vector.broadcast %36 : vector<4x8x1xf32> to vector<4x8x8xf32>
      %38 = arith.divf %35, %37 : vector<4x8x8xf32>
      %c0_41 = arith.constant 0 : index
      %c0_42 = arith.constant 0 : index
      %c0_43 = arith.constant 0 : index
      %c0_44 = arith.constant 0 : index
      %39 = vector.load %arg6[%c0_41, %c0_42, %c0_43, %c0_44] : memref<1x4x8x8xf32, #tpu.memory_space<vmem>>, vector<1x4x8x8xf32>
      %40 = vector.shape_cast %39 : vector<1x4x8x8xf32> to vector<4x8x8xf32>
      %41 = vector.shape_cast %38 : vector<4x8x8xf32> to vector<1x4x8x8xf32>
      tpu.vector_store %arg6[%c0_41, %c0_42, %c0_43, %c0_44], %41 {strides = array<i32>} : memref<1x4x8x8xf32, #tpu.memory_space<vmem>>, vector<1x4x8x8xf32>,
    } else {
    }
    return
  }
  func.func @transform_0(%arg0: i32, %arg1: i32, %arg2: i32) -> (i32, i32, i32, i32) {
    %c0_i32 = arith.constant 0 : i32
    %c0_i32_0 = arith.constant 0 : i32
    %c0_i32_1 = arith.constant 0 : i32
    return %arg0, %c0_i32, %arg1, %c0_i32_0 : i32, i32, i32, i32
  }
  func.func @transform_1(%arg0: i32, %arg1: i32, %arg2: i32) -> (i32, i32, i32, i32) {
    %c0_i32 = arith.constant 0 : i32
    %c0_i32_0 = arith.constant 0 : i32
    %c0_i32_1 = arith.constant 0 : i32
    return %arg0, %c0_i32, %arg2, %c0_i32_0 : i32, i32, i32, i32
  }
  func.func @transform_2(%arg0: i32, %arg1: i32, %arg2: i32) -> (i32, i32, i32, i32) {
    %c0_i32 = arith.constant 0 : i32
    %c0_i32_0 = arith.constant 0 : i32
    %c0_i32_1 = arith.constant 0 : i32
    return %arg0, %c0_i32, %arg2, %c0_i32_0 : i32, i32, i32, i32
  }
  func.func @transform_3(%arg0: i32, %arg1: i32, %arg2: i32) -> (i32, i32, i32, i32) {
    %c0_i32 = arith.constant 0 : i32
    %c0_i32_0 = arith.constant 0 : i32
    %c0_i32_1 = arith.constant 0 : i32
    return %arg0, %c0_i32, %arg1, %c0_i32_0 : i32, i32, i32, i32
  }
}

module attributes {stable_mosaic.version = 11 : i64} {
  func.func @_ffn_kernel(%arg0: i32, %arg1: i32, %arg2: memref<16x32xf32, #tpu.memory_space<vmem>>, %arg3: memref<1x32xf32, #tpu.memory_space<vmem>>, %arg4: memref<1x32xf32, #tpu.memory_space<vmem>>, %arg5: memref<32x128xf32, #tpu.memory_space<vmem>>, %arg6: memref<1x128xf32, #tpu.memory_space<vmem>>, %arg7: memref<128x32xf32, #tpu.memory_space<vmem>>, %arg8: memref<1x32xf32, #tpu.memory_space<vmem>>, %arg9: memref<16x32xf32, #tpu.memory_space<vmem>>, %arg10: memref<16x32xf32, #tpu.memory_space<vmem>>, %arg11: memref<16x32xf32, #tpu.memory_space<vmem>>) attributes {dimension_semantics = [#tpu.dimension_semantics<parallel>, #tpu.dimension_semantics<arbitrary>], iteration_bounds = array<i64: 1, 1>, scalar_prefetch = 0 : i64, scratch_operands = 2 : i64, tpu.core_type = #tpu.core_type<tc>, window_params = [{transform_indices = @transform_0, window_bounds = array<i64: 16, 32>}, {pipeline_mode = #tpu.pipeline_mode<synchronous>, transform_indices = @transform_1, window_bounds = array<i64: 1, 32>}, {pipeline_mode = #tpu.pipeline_mode<synchronous>, transform_indices = @transform_2, window_bounds = array<i64: 1, 32>}, {transform_indices = @transform_3, window_bounds = array<i64: 32, 128>}, {transform_indices = @transform_4, window_bounds = array<i64: 1, 128>}, {transform_indices = @transform_5, window_bounds = array<i64: 128, 32>}, {pipeline_mode = #tpu.pipeline_mode<synchronous>, transform_indices = @transform_6, window_bounds = array<i64: 1, 32>}, {transform_indices = @transform_7, window_bounds = array<i64: 16, 32>}]} {
    %c0_i32 = arith.constant 0 : i32
    %0 = arith.cmpi eq, %arg1, %c0_i32 : i32
    %1 = arith.extui %0 : i1 to i32
    %c0_i32_0 = arith.constant 0 : i32
    %2 = arith.cmpi ne, %1, %c0_i32_0 : i32
    scf.if %2 {
      %c0_16 = arith.constant 0 : index
      %c0_17 = arith.constant 0 : index
      %19 = vector.load %arg2[%c0_16, %c0_17] : memref<16x32xf32, #tpu.memory_space<vmem>>, vector<16x32xf32>
      %cst_18 = arith.constant dense<0.000000e+00> : vector<16xf32>
      %20 = vector.multi_reduction <add>, %19, %cst_18 [1] : vector<16x32xf32> to vector<16xf32>
      %21 = vector.shape_cast %20 : vector<16xf32> to vector<16x1xf32>
      %cst_19 = arith.constant 3.200000e+01 : f32
      %22 = vector.broadcast %cst_19 : f32 to vector<16x1xf32>
      %23 = arith.divf %21, %22 : vector<16x1xf32>
      %24 = vector.broadcast %23 : vector<16x1xf32> to vector<16x32xf32>
      %25 = arith.subf %19, %24 : vector<16x32xf32>
      %26 = arith.mulf %25, %25 : vector<16x32xf32>
      %cst_20 = arith.constant dense<0.000000e+00> : vector<16xf32>
      %27 = vector.multi_reduction <add>, %26, %cst_20 [1] : vector<16x32xf32> to vector<16xf32>
      %28 = vector.shape_cast %27 : vector<16xf32> to vector<16x1xf32>
      %cst_21 = arith.constant 3.200000e+01 : f32
      %29 = vector.broadcast %cst_21 : f32 to vector<16x1xf32>
      %30 = arith.divf %28, %29 : vector<16x1xf32>
      %cst_22 = arith.constant 9.99999997E-7 : f32
      %31 = vector.broadcast %cst_22 : f32 to vector<16x1xf32>
      %32 = arith.addf %30, %31 : vector<16x1xf32>
      %33 = math.rsqrt %32 : vector<16x1xf32>
      %34 = vector.broadcast %33 : vector<16x1xf32> to vector<16x32xf32>
      %35 = arith.mulf %25, %34 : vector<16x32xf32>
      %c0_23 = arith.constant 0 : index
      %c0_24 = arith.constant 0 : index
      %36 = vector.load %arg3[%c0_23, %c0_24] : memref<1x32xf32, #tpu.memory_space<vmem>>, vector<1x32xf32>
      %37 = vector.broadcast %36 : vector<1x32xf32> to vector<16x32xf32>
      %38 = arith.mulf %35, %37 : vector<16x32xf32>
      %c0_25 = arith.constant 0 : index
      %c0_26 = arith.constant 0 : index
      %39 = vector.load %arg4[%c0_25, %c0_26] : memref<1x32xf32, #tpu.memory_space<vmem>>, vector<1x32xf32>
      %40 = vector.broadcast %39 : vector<1x32xf32> to vector<16x32xf32>
      %41 = arith.addf %38, %40 : vector<16x32xf32>
      %c0_27 = arith.constant 0 : index
      %c0_28 = arith.constant 0 : index
      %42 = vector.load %arg10[%c0_27, %c0_28] : memref<16x32xf32, #tpu.memory_space<vmem>>, vector<16x32xf32>
      tpu.vector_store %arg10[%c0_27, %c0_28], %41 {strides = array<i32>} : memref<16x32xf32, #tpu.memory_space<vmem>>, vector<16x32xf32>,
      %c0_29 = arith.constant 0 : index
      %c0_30 = arith.constant 0 : index
      %43 = vector.load %arg8[%c0_29, %c0_30] : memref<1x32xf32, #tpu.memory_space<vmem>>, vector<1x32xf32>
      %44 = vector.broadcast %43 : vector<1x32xf32> to vector<16x32xf32>
      %45 = arith.addf %19, %44 : vector<16x32xf32>
      %c0_31 = arith.constant 0 : index
      %c0_32 = arith.constant 0 : index
      %46 = vector.load %arg11[%c0_31, %c0_32] : memref<16x32xf32, #tpu.memory_space<vmem>>, vector<16x32xf32>
      tpu.vector_store %arg11[%c0_31, %c0_32], %45 {strides = array<i32>} : memref<16x32xf32, #tpu.memory_space<vmem>>, vector<16x32xf32>,
    } else {
    }
    %c0 = arith.constant 0 : index
    %c0_1 = arith.constant 0 : index
    %3 = vector.load %arg10[%c0, %c0_1] : memref<16x32xf32, #tpu.memory_space<vmem>>, vector<16x32xf32>
    %c0_2 = arith.constant 0 : index
    %c0_3 = arith.constant 0 : index
    %4 = vector.load %arg5[%c0_2, %c0_3] : memref<32x128xf32, #tpu.memory_space<vmem>>, vector<32x128xf32>
    %cst = arith.constant dense<0.000000e+00> : vector<16x128xf32>
    %5 = tpu.matmul %3, %4, %cst {dimension_numbers = #tpu.dot_dimension_numbers<[1], [0], [0], [1], [0, 0, 1, 1], [], []>} : vector<16x32xf32>, vector<32x128xf32>, vector<16x128xf32> -> vector<16x128xf32>
    %c0_4 = arith.constant 0 : index
    %c0_5 = arith.constant 0 : index
    %6 = vector.load %arg6[%c0_4, %c0_5] : memref<1x128xf32, #tpu.memory_space<vmem>>, vector<1x128xf32>
    %7 = vector.broadcast %6 : vector<1x128xf32> to vector<16x128xf32>
    %8 = arith.addf %5, %7 : vector<16x128xf32>
    %cst_6 = arith.constant 0.000000e+00 : f32
    %9 = vector.broadcast %cst_6 : f32 to vector<16x128xf32>
    %10 = arith.maximumf %8, %9 : vector<16x128xf32>
    %c0_7 = arith.constant 0 : index
    %c0_8 = arith.constant 0 : index
    %11 = vector.load %arg11[%c0_7, %c0_8] : memref<16x32xf32, #tpu.memory_space<vmem>>, vector<16x32xf32>
    %c0_9 = arith.constant 0 : index
    %c0_10 = arith.constant 0 : index
    %12 = vector.load %arg7[%c0_9, %c0_10] : memref<128x32xf32, #tpu.memory_space<vmem>>, vector<128x32xf32>
    %cst_11 = arith.constant dense<0.000000e+00> : vector<16x32xf32>
    %13 = tpu.matmul %10, %12, %cst_11 {dimension_numbers = #tpu.dot_dimension_numbers<[1], [0], [0], [1], [0, 0, 1, 1], [], []>} : vector<16x128xf32>, vector<128x32xf32>, vector<16x32xf32> -> vector<16x32xf32>
    %14 = arith.addf %11, %13 : vector<16x32xf32>
    %c0_12 = arith.constant 0 : index
    %c0_13 = arith.constant 0 : index
    %15 = vector.load %arg11[%c0_12, %c0_13] : memref<16x32xf32, #tpu.memory_space<vmem>>, vector<16x32xf32>
    tpu.vector_store %arg11[%c0_12, %c0_13], %14 {strides = array<i32>} : memref<16x32xf32, #tpu.memory_space<vmem>>, vector<16x32xf32>,
    %c0_i32_14 = arith.constant 0 : i32
    %16 = arith.cmpi eq, %arg1, %c0_i32_14 : i32
    %17 = arith.extui %16 : i1 to i32
    %c0_i32_15 = arith.constant 0 : i32
    %18 = arith.cmpi ne, %17, %c0_i32_15 : i32
    scf.if %18 {
      %c0_16 = arith.constant 0 : index
      %c0_17 = arith.constant 0 : index
      %19 = vector.load %arg11[%c0_16, %c0_17] : memref<16x32xf32, #tpu.memory_space<vmem>>, vector<16x32xf32>
      %c0_18 = arith.constant 0 : index
      %c0_19 = arith.constant 0 : index
      %20 = vector.load %arg9[%c0_18, %c0_19] : memref<16x32xf32, #tpu.memory_space<vmem>>, vector<16x32xf32>
      tpu.vector_store %arg9[%c0_18, %c0_19], %19 {strides = array<i32>} : memref<16x32xf32, #tpu.memory_space<vmem>>, vector<16x32xf32>,
    } else {
    }
    return
  }
  func.func @transform_0(%arg0: i32, %arg1: i32) -> (i32, i32) {
    %c0_i32 = arith.constant 0 : i32
    %c0_i32_0 = arith.constant 0 : i32
    return %arg0, %c0_i32 : i32, i32
  }
  func.func @transform_1(%arg0: i32, %arg1: i32) -> (i32, i32) {
    %c0_i32 = arith.constant 0 : i32
    %c0_i32_0 = arith.constant 0 : i32
    %c0_i32_1 = arith.constant 0 : i32
    return %c0_i32, %c0_i32_0 : i32, i32
  }
  func.func @transform_2(%arg0: i32, %arg1: i32) -> (i32, i32) {
    %c0_i32 = arith.constant 0 : i32
    %c0_i32_0 = arith.constant 0 : i32
    %c0_i32_1 = arith.constant 0 : i32
    return %c0_i32, %c0_i32_0 : i32, i32
  }
  func.func @transform_3(%arg0: i32, %arg1: i32) -> (i32, i32) {
    %c0_i32 = arith.constant 0 : i32
    %c0_i32_0 = arith.constant 0 : i32
    return %c0_i32, %arg1 : i32, i32
  }
  func.func @transform_4(%arg0: i32, %arg1: i32) -> (i32, i32) {
    %c0_i32 = arith.constant 0 : i32
    %c0_i32_0 = arith.constant 0 : i32
    return %c0_i32, %arg1 : i32, i32
  }
  func.func @transform_5(%arg0: i32, %arg1: i32) -> (i32, i32) {
    %c0_i32 = arith.constant 0 : i32
    %c0_i32_0 = arith.constant 0 : i32
    return %arg1, %c0_i32 : i32, i32
  }
  func.func @transform_6(%arg0: i32, %arg1: i32) -> (i32, i32) {
    %c0_i32 = arith.constant 0 : i32
    %c0_i32_0 = arith.constant 0 : i32
    %c0_i32_1 = arith.constant 0 : i32
    return %c0_i32, %c0_i32_0 : i32, i32
  }
  func.func @transform_7(%arg0: i32, %arg1: i32) -> (i32, i32) {
    %c0_i32 = arith.constant 0 : i32
    %c0_i32_0 = arith.constant 0 : i32
    return %arg0, %c0_i32 : i32, i32
  }
}

</mosaic_0001>

<llo_original>
// kernel: decoder_layer.8
$region0: #{decoder_layer.8}
  #allocation0 [shape = 'u32[]', space=smem, size = 0x4, offset = 0x4, fixed_abs, tag = 'smem constant byte address 0x4 - core index']
  #allocation1 [shape = 'u32[144,128]{1,0:T(1,128)}', space=vmem, size = 0x12000, scoped, tag = 'internal scratch']
  %s0 = inlined_call_operand.vmem [shape: f32[16,32], index: 0, kind: input, shape index: {}]
  %s1 = inlined_call_operand.vmem [shape: f32[1,32], index: 1, kind: input, shape index: {}]
  %s2 = inlined_call_operand.vmem [shape: f32[1,32], index: 2, kind: input, shape index: {}]
  %s3 = inlined_call_operand.vmem [shape: f32[32,96], index: 3, kind: input, shape index: {}]
  %s4 = inlined_call_operand.vmem [shape: f32[1,96], index: 4, kind: input, shape index: {}]
  %s5 = inlined_call_operand.vmem [shape: f32[16,96], index: 5, kind: output, shape index: {}]
  %s6 = sld [smem:[#allocation0]]
  $region30: #{decoder_layer.8} parent=0
    _
  %s8 = ssub.s32 1, %s6
  %s9 = scalar_select 0, %s8, %s6
  // Predicated region
  $region2: #{decoder_layer.8} parent=0 // pred_check
    _
  $region3: #{decoder_layer.8} parent=0 // pred_check_branch
    %11 = sbr.rel (0) target = $region5
  $region4: #{decoder_layer.8} parent=0 // pred_region
    _
  $region5: #{decoder_layer.8} parent=0 // pred_fallthru
    _
  // Predicated region
  $region6: #{decoder_layer.8} parent=0 // pred_check
    _
  $region7: #{decoder_layer.8} parent=0 // pred_check_branch
    %13 = sbr.rel (0) target = $region9
  $region8: #{decoder_layer.8} parent=0 // pred_region
    _
  $region9: #{decoder_layer.8} parent=0 // pred_fallthru
    _
  // Predicated region
  $region10: #{decoder_layer.8} parent=0 // pred_check
    _
  $region11: #{decoder_layer.8} parent=0 // pred_check_branch
    %15 = sbr.rel (0) target = $region13
  $region12: #{decoder_layer.8} parent=0 // pred_region
    _
  $region13: #{decoder_layer.8} parent=0 // pred_fallthru
    _
  // Predicated region
  $region14: #{decoder_layer.8} parent=0 // pred_check
    _
  $region15: #{decoder_layer.8} parent=0 // pred_check_branch
    %17 = sbr.rel (0) target = $region17
  $region16: #{decoder_layer.8} parent=0 // pred_region
    _
  $region17: #{decoder_layer.8} parent=0 // pred_fallthru
    _
  // Predicated region
  $region18: #{decoder_layer.8} parent=0 // pred_check
    _
  $region19: #{decoder_layer.8} parent=0 // pred_check_branch
    %19 = sbr.rel (0) target = $region21
  $region20: #{decoder_layer.8} parent=0 // pred_region
    _
  $region21: #{decoder_layer.8} parent=0 // pred_fallthru
    _
  %v20 = vld [vmem:[%s0] sm:$0xff]
  %v21 = vld [vmem:[%s0 + $0x8] sm:$0xff]
  %vm22 = vcmask 261120
  %v23 = vsel %vm22, %v20, 0.0
  %24 = vadd.xlane.f32.xlu0 %v23
  %v25 = vpop.xlane.xlu0 %24
  %v26 = vsel %vm22, %v21, 0.0
  %27 = vadd.xlane.f32.xlu0 %v26
  %v28 = vpop.xlane.xlu0 %27
  %v29 = vrcp.pop 32.0
  %v30 = vmul.f32 %v25, %v29
  %v31 = vmul.f32 %v28, %v29
  %v32 = vsub.f32 %v20, %v30
  %v33 = vsub.f32 %v21, %v31
  %v34 = vmul.f32 %v32, %v32
  %v35 = vmul.f32 %v33, %v33
  %v36 = vsel %vm22, %v34, 0.0
  %37 = vadd.xlane.f32.xlu0 %v36
  %v38 = vpop.xlane.xlu0 %37
  %v39 = vsel %vm22, %v35, 0.0
  %40 = vadd.xlane.f32.xlu0 %v39
  %v41 = vpop.xlane.xlu0 %40
  %v42 = vmul.f32 %v38, %v29
  %v43 = vmul.f32 %v41, %v29
  %v44 = vadd.f32 %v42, 1e-06
  %v45 = vadd.f32 %v43, 1e-06
  %v46 = vrsqrt.pop %v44
  %v47 = vrsqrt.pop %v45
  %v48 = vmul.f32 %v32, %v46
  %v49 = vmul.f32 %v33, %v47
  %v50 = vld [vmem:[%s1] sm:$0x1]
  %v52 = vlaneseq
  %v53 = vshrl.u32 %v52, 7
  %v54 = vsub.s32 0, %v53
  %v55 = vrot.slane %v50, %v54
  %v57 = vmul.f32 %v48, %v55
  %v58 = vmul.f32 %v49, %v55
  %v59 = vld [vmem:[%s2] sm:$0x1]
  %v61 = vlaneseq
  %v62 = vshrl.u32 %v61, 7
  %v63 = vsub.s32 0, %v62
  %v64 = vrot.slane %v59, %v63
  %v66 = vadd.f32 %v57, %v64
  %v67 = vadd.f32 %v58, %v64
  %v68 = vld [vmem:[%s3] sm:$0xff]
  %v69 = vld [vmem:[%s3 + $0x8] sm:$0xff]
  %v70 = vld [vmem:[%s3 + $0x10] sm:$0xff]
  %v71 = vld [vmem:[%s3 + $0x18] sm:$0xff]
  %v72 = vld [vmem:[%s4] sm:$0x1]
  %v74 = vlaneseq
  %v75 = vshrl.u32 %v74, 7
  %v76 = vsub.s32 0, %v75
  %v77 = vrot.slane %v72, %v76
  %v80 = vsel %vm22, %v66, 0
  %v83 = vsel %vm22, %v67, 0
  %85 = vmatprep.subr.mxu0 0.0
  %86 = vmatpush1.msra.mxu0 %v68
  %87 = vmatprep.subr.mxu0 0.0
  %88 = vmatpush1.msra.mxu0 %v69
  %89 = vmatprep.subr.mxu0 0.0
  %90 = vmatpush1.msra.mxu0 %v70
  %91 = vmatprep.subr.mxu0 0.0
  %92 = vmatpush1.msra.mxu0 %v71
  %93 = vmatprep.subr.mxu0 0.0
  %94 = vmatpush1.msra.mxu0 0.0
  %95 = vmatprep.subr.mxu0 0.0
  %96 = vmatpush1.msra.mxu0 0.0
  %97 = vmatprep.subr.mxu0 0.0
  %98 = vmatpush1.msra.mxu0 0.0
  %99 = vmatprep.subr.mxu0 0.0
  %100 = vmatpush1.msra.mxu0 0.0
  %101 = vmatprep.subr.mxu0 0.0
  %102 = vmatpush1.msra.mxu0 0.0
  %103 = vmatprep.subr.mxu0 0.0
  %104 = vmatpush1.msra.mxu0 0.0
  %105 = vmatprep.subr.mxu0 0.0
  %106 = vmatpush1.msra.mxu0 0.0
  %107 = vmatprep.subr.mxu0 0.0
  %108 = vmatpush1.msra.mxu0 0.0
  %109 = vmatprep.subr.mxu0 0.0
  %110 = vmatpush1.msra.mxu0 0.0
  %111 = vmatprep.subr.mxu0 0.0
  %112 = vmatpush1.msra.mxu0 0.0
  %113 = vmatprep.subr.mxu0 0.0
  %114 = vmatpush1.msra.mxu0 0.0
  %115 = vmatprep.subr.mxu0 0.0
  %116 = vmatpush1.msra.mxu0 0.0
  %117 = vmatprep.subr.mxu0 0.0
  %118 = vmatpush1.msra.mxu0 0.0
  %119 = vmatprep.subr.mxu0 0.0
  %120 = vmatpush1.msra.mxu0 0.0
  %121 = vmatprep.subr.mxu0 0.0
  %122 = vmatpush1.msra.mxu0 0.0
  %123 = vmatprep.subr.mxu0 0.0
  %124 = vmatpush1.msra.mxu0 0.0
  %125 = vmatprep.subr.mxu0 0.0
  %126 = vmatpush1.msra.mxu0 0.0
  %127 = vmatprep.subr.mxu0 0.0
  %128 = vmatpush1.msra.mxu0 0.0
  %129 = vmatprep.subr.mxu0 0.0
  %130 = vmatpush1.msra.mxu0 0.0
  %131 = vmatprep.subr.mxu0 0.0
  %132 = vmatpush1.msra.mxu0 0.0
  %133 = vmatprep.subr.mxu0 0.0
  %134 = vmatpush1.msra.mxu0 0.0
  %135 = vmatprep.subr.mxu0 0.0
  %136 = vmatpush1.msra.mxu0 0.0
  %137 = vmatprep.subr.mxu0 0.0
  %138 = vmatpush1.msra.mxu0 0.0
  %139 = vmatprep.subr.mxu0 0.0
  %140 = vmatpush1.msra.mxu0 0.0
  %141 = vmatprep.subr.mxu0 0.0
  %142 = vmatpush1.msra.mxu0 0.0
  %143 = vmatprep.subr.mxu0 0.0
  %144 = vmatpush1.msra.mxu0 0.0
  %145 = vmatprep.subr.mxu0 0.0
  %146 = vmatpush1.msra.mxu0 0.0
  %147 = vmatprep.subr.mxu0 0.0
  %148 = vmatpush1.msra.mxu0 0.0
  %149 = vmatprep.mubr.f32.mxu0 0.0
  %150 = vmatmul.mubr.f32.gmra.mrb[0].mxu0 %v80
  %v151 = vpop.f32.mrb[0].mxu0
  %v152 = vadd.f32 %v77, %v151
  %v153 = vpop.f32.mrb[0].mxu0
  %154 = vmatprep.mubr.f32.mxu0 0.0
  %155 = vmatmul.mubr.f32.gmra.mrb[0].mxu0 %v83
  %v156 = vpop.f32.mrb[0].mxu0
  %v157 = vadd.f32 %v77, %v156
  %v158 = vpop.f32.mrb[0].mxu0
  %159 = vdwg.mxu0
  %vm160 = vcmask 785408
  %161 = vst.msk [vmem:[%s5] sm:$0xff] %vm160, %v152
  %162 = vst.msk [vmem:[%s5 + $0x8] sm:$0xff] %vm160, %v157
  // Predicated region
  $region22: #{decoder_layer.8} parent=0 // pred_check
    _
  $region23: #{decoder_layer.8} parent=0 // pred_check_branch
    %164 = sbr.rel (0) target = $region25
  $region24: #{decoder_layer.8} parent=0 // pred_region
    _
  $region25: #{decoder_layer.8} parent=0 // pred_fallthru
    _
  // Predicated region
  $region26: #{decoder_layer.8} parent=0 // pred_check
    _
  $region27: #{decoder_layer.8} parent=0 // pred_check_branch
    %166 = sbr.rel (0) target = $region29
  $region28: #{decoder_layer.8} parent=0 // pred_region
    _
  $region29: #{decoder_layer.8} parent=0 // pred_fallthru
    _

// kernel: decoder_layer.10
$region0: #{decoder_layer.10}
  #allocation0 [shape = 'u32[]', space=smem, size = 0x4, offset = 0x4, fixed_abs, tag = 'smem constant byte address 0x4 - core index']
  #allocation1 [shape = 'u32[144,128]{1,0:T(1,128)}', space=vmem, size = 0x12000, scoped, tag = 'internal scratch']
  %s0 = inlined_call_operand.vmem [shape: f32[16,32], index: 0, kind: input, shape index: {}]
  %s1 = inlined_call_operand.vmem [shape: f32[16,32], index: 1, kind: input, shape index: {}]
  %s2 = inlined_call_operand.vmem [shape: f32[32,32], index: 2, kind: input, shape index: {}]
  %s3 = inlined_call_operand.vmem [shape: f32[1,32], index: 3, kind: input, shape index: {}]
  %s4 = inlined_call_operand.vmem [shape: f32[16,32], index: 4, kind: output, shape index: {}]
  %s5 = sld [smem:[#allocation0]]
  $region26: #{decoder_layer.10} parent=0
    _
  %s7 = ssub.s32 1, %s5
  %s8 = scalar_select 0, %s7, %s5
  // Predicated region
  $region2: #{decoder_layer.10} parent=0 // pred_check
    _
  $region3: #{decoder_layer.10} parent=0 // pred_check_branch
    %10 = sbr.rel (0) target = $region5
  $region4: #{decoder_layer.10} parent=0 // pred_region
    _
  $region5: #{decoder_layer.10} parent=0 // pred_fallthru
    _
  // Predicated region
  $region6: #{decoder_layer.10} parent=0 // pred_check
    _
  $region7: #{decoder_layer.10} parent=0 // pred_check_branch
    %12 = sbr.rel (0) target = $region9
  $region8: #{decoder_layer.10} parent=0 // pred_region
    _
  $region9: #{decoder_layer.10} parent=0 // pred_fallthru
    _
  // Predicated region
  $region10: #{decoder_layer.10} parent=0 // pred_check
    _
  $region11: #{decoder_layer.10} parent=0 // pred_check_branch
    %14 = sbr.rel (0) target = $region13
  $region12: #{decoder_layer.10} parent=0 // pred_region
    _
  $region13: #{decoder_layer.10} parent=0 // pred_fallthru
    _
  // Predicated region
  $region14: #{decoder_layer.10} parent=0 // pred_check
    _
  $region15: #{decoder_layer.10} parent=0 // pred_check_branch
    %16 = sbr.rel (0) target = $region17
  $region16: #{decoder_layer.10} parent=0 // pred_region
    _
  $region17: #{decoder_layer.10} parent=0 // pred_fallthru
    _
  %v17 = vld [vmem:[%s1] sm:$0xff]
  %v18 = vld [vmem:[%s1 + $0x8] sm:$0xff]
  %v19 = vld [vmem:[%s2] sm:$0xff]
  %v20 = vld [vmem:[%s2 + $0x8] sm:$0xff]
  %v21 = vld [vmem:[%s2 + $0x10] sm:$0xff]
  %v22 = vld [vmem:[%s2 + $0x18] sm:$0xff]
  %v23 = vld [vmem:[%s3] sm:$0x1]
  %v25 = vlaneseq
  %v26 = vshrl.u32 %v25, 7
  %v27 = vsub.s32 0, %v26
  %v28 = vrot.slane %v23, %v27
  %vm30 = vcmask 261120
  %v32 = vsel %vm30, %v17, 0
  %v35 = vsel %vm30, %v18, 0
  %37 = vmatprep.subr.mxu0 0.0
  %38 = vmatpush1.msra.mxu0 %v19
  %39 = vmatprep.subr.mxu0 0.0
  %40 = vmatpush1.msra.mxu0 %v20
  %41 = vmatprep.subr.mxu0 0.0
  %42 = vmatpush1.msra.mxu0 %v21
  %43 = vmatprep.subr.mxu0 0.0
  %44 = vmatpush1.msra.mxu0 %v22
  %45 = vmatprep.subr.mxu0 0.0
  %46 = vmatpush1.msra.mxu0 0.0
  %47 = vmatprep.subr.mxu0 0.0
  %48 = vmatpush1.msra.mxu0 0.0
  %49 = vmatprep.subr.mxu0 0.0
  %50 = vmatpush1.msra.mxu0 0.0
  %51 = vmatprep.subr.mxu0 0.0
  %52 = vmatpush1.msra.mxu0 0.0
  %53 = vmatprep.subr.mxu0 0.0
  %54 = vmatpush1.msra.mxu0 0.0
  %55 = vmatprep.subr.mxu0 0.0
  %56 = vmatpush1.msra.mxu0 0.0
  %57 = vmatprep.subr.mxu0 0.0
  %58 = vmatpush1.msra.mxu0 0.0
  %59 = vmatprep.subr.mxu0 0.0
  %60 = vmatpush1.msra.mxu0 0.0
  %61 = vmatprep.subr.mxu0 0.0
  %62 = vmatpush1.msra.mxu0 0.0
  %63 = vmatprep.subr.mxu0 0.0
  %64 = vmatpush1.msra.mxu0 0.0
  %65 = vmatprep.subr.mxu0 0.0
  %66 = vmatpush1.msra.mxu0 0.0
  %67 = vmatprep.subr.mxu0 0.0
  %68 = vmatpush1.msra.mxu0 0.0
  %69 = vmatprep.subr.mxu0 0.0
  %70 = vmatpush1.msra.mxu0 0.0
  %71 = vmatprep.subr.mxu0 0.0
  %72 = vmatpush1.msra.mxu0 0.0
  %73 = vmatprep.subr.mxu0 0.0
  %74 = vmatpush1.msra.mxu0 0.0
  %75 = vmatprep.subr.mxu0 0.0
  %76 = vmatpush1.msra.mxu0 0.0
  %77 = vmatprep.subr.mxu0 0.0
  %78 = vmatpush1.msra.mxu0 0.0
  %79 = vmatprep.subr.mxu0 0.0
  %80 = vmatpush1.msra.mxu0 0.0
  %81 = vmatprep.subr.mxu0 0.0
  %82 = vmatpush1.msra.mxu0 0.0
  %83 = vmatprep.subr.mxu0 0.0
  %84 = vmatpush1.msra.mxu0 0.0
  %85 = vmatprep.subr.mxu0 0.0
  %86 = vmatpush1.msra.mxu0 0.0
  %87 = vmatprep.subr.mxu0 0.0
  %88 = vmatpush1.msra.mxu0 0.0
  %89 = vmatprep.subr.mxu0 0.0
  %90 = vmatpush1.msra.mxu0 0.0
  %91 = vmatprep.subr.mxu0 0.0
  %92 = vmatpush1.msra.mxu0 0.0
  %93 = vmatprep.subr.mxu0 0.0
  %94 = vmatpush1.msra.mxu0 0.0
  %95 = vmatprep.subr.mxu0 0.0
  %96 = vmatpush1.msra.mxu0 0.0
  %97 = vmatprep.subr.mxu0 0.0
  %98 = vmatpush1.msra.mxu0 0.0
  %99 = vmatprep.subr.mxu0 0.0
  %100 = vmatpush1.msra.mxu0 0.0
  %101 = vmatprep.mubr.f32.mxu0 0.0
  %102 = vmatmul.mubr.f32.gmra.mrb[0].mxu0 %v32
  %v103 = vpop.f32.mrb[0].mxu0
  %v104 = vadd.f32 %v28, %v103
  %v105 = vpop.f32.mrb[0].mxu0
  %106 = vmatprep.mubr.f32.mxu0 0.0
  %107 = vmatmul.mubr.f32.gmra.mrb[0].mxu0 %v35
  %v108 = vpop.f32.mrb[0].mxu0
  %v109 = vadd.f32 %v28, %v108
  %v110 = vpop.f32.mrb[0].mxu0
  %111 = vdwg.mxu0
  %v112 = vld [vmem:[%s0] sm:$0xff]
  %v113 = vld [vmem:[%s0 + $0x8] sm:$0xff]
  %v114 = vadd.f32 %v104, %v112
  %v115 = vadd.f32 %v109, %v113
  %116 = vst.msk [vmem:[%s4] sm:$0xff] %vm30, %v114
  %117 = vst.msk [vmem:[%s4 + $0x8] sm:$0xff] %vm30, %v115
  // Predicated region
  $region18: #{decoder_layer.10} parent=0 // pred_check
    _
  $region19: #{decoder_layer.10} parent=0 // pred_check_branch
    %119 = sbr.rel (0) target = $region21
  $region20: #{decoder_layer.10} parent=0 // pred_region
    _
  $region21: #{decoder_layer.10} parent=0 // pred_fallthru
    _
  // Predicated region
  $region22: #{decoder_layer.10} parent=0 // pred_check
    _
  $region23: #{decoder_layer.10} parent=0 // pred_check_branch
    %121 = sbr.rel (0) target = $region25
  $region24: #{decoder_layer.10} parent=0 // pred_region
    _
  $region25: #{decoder_layer.10} parent=0 // pred_fallthru
    _

// kernel: decoder_layer.11
$region0: #{decoder_layer.11}
  #allocation0 [shape = 'u32[]', space=smem, size = 0x4, offset = 0x4, fixed_abs, tag = 'smem constant byte address 0x4 - core index']
  #allocation1 [shape = 'u32[144,128]{1,0:T(1,128)}', space=vmem, size = 0x12000, scoped, tag = 'internal scratch']
  %s0 = inlined_call_operand.vmem [shape: f32[16,32], index: 0, kind: input, shape index: {}]
  %s1 = inlined_call_operand.vmem [shape: f32[1,32], index: 1, kind: input, shape index: {}]
  %s2 = inlined_call_operand.vmem [shape: f32[1,32], index: 2, kind: input, shape index: {}]
  %s3 = inlined_call_operand.vmem [shape: f32[32,32], index: 3, kind: input, shape index: {}]
  %s4 = inlined_call_operand.vmem [shape: f32[1,32], index: 4, kind: input, shape index: {}]
  %s5 = inlined_call_operand.vmem [shape: f32[16,32], index: 5, kind: output, shape index: {}]
  %s6 = sld [smem:[#allocation0]]
  $region30: #{decoder_layer.11} parent=0
    _
  %s8 = ssub.s32 1, %s6
  %s9 = scalar_select 0, %s8, %s6
  // Predicated region
  $region2: #{decoder_layer.11} parent=0 // pred_check
    _
  $region3: #{decoder_layer.11} parent=0 // pred_check_branch
    %11 = sbr.rel (0) target = $region5
  $region4: #{decoder_layer.11} parent=0 // pred_region
    _
  $region5: #{decoder_layer.11} parent=0 // pred_fallthru
    _
  // Predicated region
  $region6: #{decoder_layer.11} parent=0 // pred_check
    _
  $region7: #{decoder_layer.11} parent=0 // pred_check_branch
    %13 = sbr.rel (0) target = $region9
  $region8: #{decoder_layer.11} parent=0 // pred_region
    _
  $region9: #{decoder_layer.11} parent=0 // pred_fallthru
    _
  // Predicated region
  $region10: #{decoder_layer.11} parent=0 // pred_check
    _
  $region11: #{decoder_layer.11} parent=0 // pred_check_branch
    %15 = sbr.rel (0) target = $region13
  $region12: #{decoder_layer.11} parent=0 // pred_region
    _
  $region13: #{decoder_layer.11} parent=0 // pred_fallthru
    _
  // Predicated region
  $region14: #{decoder_layer.11} parent=0 // pred_check
    _
  $region15: #{decoder_layer.11} parent=0 // pred_check_branch
    %17 = sbr.rel (0) target = $region17
  $region16: #{decoder_layer.11} parent=0 // pred_region
    _
  $region17: #{decoder_layer.11} parent=0 // pred_fallthru
    _
  // Predicated region
  $region18: #{decoder_layer.11} parent=0 // pred_check
    _
  $region19: #{decoder_layer.11} parent=0 // pred_check_branch
    %19 = sbr.rel (0) target = $region21
  $region20: #{decoder_layer.11} parent=0 // pred_region
    _
  $region21: #{decoder_layer.11} parent=0 // pred_fallthru
    _
  %v20 = vld [vmem:[%s0] sm:$0xff]
  %v21 = vld [vmem:[%s0 + $0x8] sm:$0xff]
  %vm22 = vcmask 261120
  %v23 = vsel %vm22, %v20, 0.0
  %24 = vadd.xlane.f32.xlu0 %v23
  %v25 = vpop.xlane.xlu0 %24
  %v26 = vsel %vm22, %v21, 0.0
  %27 = vadd.xlane.f32.xlu0 %v26
  %v28 = vpop.xlane.xlu0 %27
  %v29 = vrcp.pop 32.0
  %v30 = vmul.f32 %v25, %v29
  %v31 = vmul.f32 %v28, %v29
  %v32 = vsub.f32 %v20, %v30
  %v33 = vsub.f32 %v21, %v31
  %v34 = vmul.f32 %v32, %v32
  %v35 = vmul.f32 %v33, %v33
  %v36 = vsel %vm22, %v34, 0.0
  %37 = vadd.xlane.f32.xlu0 %v36
  %v38 = vpop.xlane.xlu0 %37
  %v39 = vsel %vm22, %v35, 0.0
  %40 = vadd.xlane.f32.xlu0 %v39
  %v41 = vpop.xlane.xlu0 %40
  %v42 = vmul.f32 %v38, %v29
  %v43 = vmul.f32 %v41, %v29
  %v44 = vadd.f32 %v42, 1e-06
  %v45 = vadd.f32 %v43, 1e-06
  %v46 = vrsqrt.pop %v44
  %v47 = vrsqrt.pop %v45
  %v48 = vmul.f32 %v32, %v46
  %v49 = vmul.f32 %v33, %v47
  %v50 = vld [vmem:[%s1] sm:$0x1]
  %v52 = vlaneseq
  %v53 = vshrl.u32 %v52, 7
  %v54 = vsub.s32 0, %v53
  %v55 = vrot.slane %v50, %v54
  %v57 = vmul.f32 %v48, %v55
  %v58 = vmul.f32 %v49, %v55
  %v59 = vld [vmem:[%s2] sm:$0x1]
  %v61 = vlaneseq
  %v62 = vshrl.u32 %v61, 7
  %v63 = vsub.s32 0, %v62
  %v64 = vrot.slane %v59, %v63
  %v66 = vadd.f32 %v57, %v64
  %v67 = vadd.f32 %v58, %v64
  %v68 = vld [vmem:[%s3] sm:$0xff]
  %v69 = vld [vmem:[%s3 + $0x8] sm:$0xff]
  %v70 = vld [vmem:[%s3 + $0x10] sm:$0xff]
  %v71 = vld [vmem:[%s3 + $0x18] sm:$0xff]
  %v72 = vld [vmem:[%s4] sm:$0x1]
  %v74 = vlaneseq
  %v75 = vshrl.u32 %v74, 7
  %v76 = vsub.s32 0, %v75
  %v77 = vrot.slane %v72, %v76
  %v80 = vsel %vm22, %v66, 0
  %v83 = vsel %vm22, %v67, 0
  %85 = vmatprep.subr.mxu0 0.0
  %86 = vmatpush1.msra.mxu0 %v68
  %87 = vmatprep.subr.mxu0 0.0
  %88 = vmatpush1.msra.mxu0 %v69
  %89 = vmatprep.subr.mxu0 0.0
  %90 = vmatpush1.msra.mxu0 %v70
  %91 = vmatprep.subr.mxu0 0.0
  %92 = vmatpush1.msra.mxu0 %v71
  %93 = vmatprep.subr.mxu0 0.0
  %94 = vmatpush1.msra.mxu0 0.0
  %95 = vmatprep.subr.mxu0 0.0
  %96 = vmatpush1.msra.mxu0 0.0
  %97 = vmatprep.subr.mxu0 0.0
  %98 = vmatpush1.msra.mxu0 0.0
  %99 = vmatprep.subr.mxu0 0.0
  %100 = vmatpush1.msra.mxu0 0.0
  %101 = vmatprep.subr.mxu0 0.0
  %102 = vmatpush1.msra.mxu0 0.0
  %103 = vmatprep.subr.mxu0 0.0
  %104 = vmatpush1.msra.mxu0 0.0
  %105 = vmatprep.subr.mxu0 0.0
  %106 = vmatpush1.msra.mxu0 0.0
  %107 = vmatprep.subr.mxu0 0.0
  %108 = vmatpush1.msra.mxu0 0.0
  %109 = vmatprep.subr.mxu0 0.0
  %110 = vmatpush1.msra.mxu0 0.0
  %111 = vmatprep.subr.mxu0 0.0
  %112 = vmatpush1.msra.mxu0 0.0
  %113 = vmatprep.subr.mxu0 0.0
  %114 = vmatpush1.msra.mxu0 0.0
  %115 = vmatprep.subr.mxu0 0.0
  %116 = vmatpush1.msra.mxu0 0.0
  %117 = vmatprep.subr.mxu0 0.0
  %118 = vmatpush1.msra.mxu0 0.0
  %119 = vmatprep.subr.mxu0 0.0
  %120 = vmatpush1.msra.mxu0 0.0
  %121 = vmatprep.subr.mxu0 0.0
  %122 = vmatpush1.msra.mxu0 0.0
  %123 = vmatprep.subr.mxu0 0.0
  %124 = vmatpush1.msra.mxu0 0.0
  %125 = vmatprep.subr.mxu0 0.0
  %126 = vmatpush1.msra.mxu0 0.0
  %127 = vmatprep.subr.mxu0 0.0
  %128 = vmatpush1.msra.mxu0 0.0
  %129 = vmatprep.subr.mxu0 0.0
  %130 = vmatpush1.msra.mxu0 0.0
  %131 = vmatprep.subr.mxu0 0.0
  %132 = vmatpush1.msra.mxu0 0.0
  %133 = vmatprep.subr.mxu0 0.0
  %134 = vmatpush1.msra.mxu0 0.0
  %135 = vmatprep.subr.mxu0 0.0
  %136 = vmatpush1.msra.mxu0 0.0
  %137 = vmatprep.subr.mxu0 0.0
  %138 = vmatpush1.msra.mxu0 0.0
  %139 = vmatprep.subr.mxu0 0.0
  %140 = vmatpush1.msra.mxu0 0.0
  %141 = vmatprep.subr.mxu0 0.0
  %142 = vmatpush1.msra.mxu0 0.0
  %143 = vmatprep.subr.mxu0 0.0
  %144 = vmatpush1.msra.mxu0 0.0
  %145 = vmatprep.subr.mxu0 0.0
  %146 = vmatpush1.msra.mxu0 0.0
  %147 = vmatprep.subr.mxu0 0.0
  %148 = vmatpush1.msra.mxu0 0.0
  %149 = vmatprep.mubr.f32.mxu0 0.0
  %150 = vmatmul.mubr.f32.gmra.mrb[0].mxu0 %v80
  %v151 = vpop.f32.mrb[0].mxu0
  %v152 = vadd.f32 %v77, %v151
  %v153 = vpop.f32.mrb[0].mxu0
  %154 = vmatprep.mubr.f32.mxu0 0.0
  %155 = vmatmul.mubr.f32.gmra.mrb[0].mxu0 %v83
  %v156 = vpop.f32.mrb[0].mxu0
  %v157 = vadd.f32 %v77, %v156
  %v158 = vpop.f32.mrb[0].mxu0
  %159 = vdwg.mxu0
  %160 = vst.msk [vmem:[%s5] sm:$0xff] %vm22, %v152
  %161 = vst.msk [vmem:[%s5 + $0x8] sm:$0xff] %vm22, %v157
  // Predicated region
  $region22: #{decoder_layer.11} parent=0 // pred_check
    _
  $region23: #{decoder_layer.11} parent=0 // pred_check_branch
    %163 = sbr.rel (0) target = $region25
  $region24: #{decoder_layer.11} parent=0 // pred_region
    _
  $region25: #{decoder_layer.11} parent=0 // pred_fallthru
    _
  // Predicated region
  $region26: #{decoder_layer.11} parent=0 // pred_check
    _
  $region27: #{decoder_layer.11} parent=0 // pred_check_branch
    %165 = sbr.rel (0) target = $region29
  $region28: #{decoder_layer.11} parent=0 // pred_region
    _
  $region29: #{decoder_layer.11} parent=0 // pred_fallthru
    _

// kernel: decoder_layer.9
$region0: #{decoder_layer.9}
  #allocation0 [shape = 'u32[]', space=smem, size = 0x4, offset = 0x4, fixed_abs, tag = 'smem constant byte address 0x4 - core index']
  #allocation1 [shape = 'u32[144,128]{1,0:T(1,128)}', space=vmem, size = 0x12000, scoped, tag = 'internal scratch']
  #allocation2 [shape = 'f32[4,8,1]{2,1,0:T(8,128)}', space=vmem, size = 0x4000, scoped, tag = 'scratch operand']
  #allocation3 [shape = 'f32[4,8,1]{2,1,0:T(8,128)}', space=vmem, size = 0x4000, scoped, tag = 'scratch operand']
  #allocation4 [shape = 'f32[4,8,8]{2,1,0:T(8,128)}', space=vmem, size = 0x4000, scoped, tag = 'scratch operand']
  %s0 = inlined_call_operand.vmem [shape: f32[2,4,8,8], index: 0, kind: input, shape index: {}]
  %s1 = inlined_call_operand.vmem [shape: f32[2,4,8,8], index: 1, kind: input, shape index: {}]
  %s2 = inlined_call_operand.vmem [shape: f32[2,4,8,8], index: 2, kind: input, shape index: {}]
  %s3 = inlined_call_operand.vmem [shape: f32[2,4,8,8], index: 3, kind: output, shape index: {}]
  %s4 = sld [smem:[#allocation0]]
  $region53: #{decoder_layer.9} parent=0
    _
  %s6 = ssub.s32 1, %s4
  %s7 = scalar_select 0, %s6, %s4
  loop: start=0, step=1, limit=4
  $region2: #{decoder_layer.9} parent=0 // loop_pre_header
    _
  $region3: #{decoder_layer.9} parent=0 // loop_header
    %s9 = sphi 0, %s13
    %p10 = scmp.ge.s32.totalorder %s9, 4
    %s16 = sphi 0, %s35
    %s17 = sphi 0, %s31
    %s18 = sphi 0, %s27
    %s19 = sphi 0, %s16
    %s20 = sphi 0, %s17
    %s21 = sphi 0, %s18
    %s22 = sphi 0, %s19
    %s23 = sphi 0, %s20
    %s24 = sphi 0, %s21
    %s40 = sphi 0, %s42
    %s43 = sphi 0, %s40
    %s44 = sphi 0, %s43
    %s60 = sphi 0, %s44
    %s68 = sphi 0, %s70
    %s71 = sphi 0, %s68
    %s72 = sphi 0, %s71
    %s88 = sphi 0, %s72
    %s96 = sphi 0, %s98
    %s99 = sphi 0, %s96
    %s100 = sphi 0, %s99
    %s116 = sphi 0, %s100
    %s124 = sphi 0, %s126
    %s127 = sphi 0, %s124
    %s128 = sphi 0, %s127
    %s144 = sphi 0, %s128
  $region4: #{decoder_layer.9} parent=0 // loop_header_branch
    %12 = sbr.rel (%p10) target = $region8
  $region5: #{decoder_layer.9} parent=0 // loop_body
    %s14 = ssub.s32 %s9, 1
    %s15 = ssub.s32 %s9, 2
    %s25 = sadd.s32 1, %s18
    %p26 = scmp.ge.s32.totalorder %s25, 1
    %s27 = scalar_select %p26, 0, %s25
    %s28 = sadd.s32 1, %s17
    %s29 = scalar_select %p26, %s28, %s17
    %p30 = scmp.ge.s32.totalorder %s29, 1
    %s31 = scalar_select %p30, 0, %s29
    %s32 = sadd.s32 1, %s16
    %s33 = scalar_select %p30, %s32, %s16
    %p34 = scmp.ge.s32.totalorder %s33, 2
    %s35 = scalar_select %p34, 0, %s33
    %s36 = ssub.s32 %s16, %s35
    %s37 = ssub.s32 %s17, %s31
    %s38 = sor.u32 %s36, %s37
    %p39 = scmp.eq.s32.totalorder %s38, 0
    %s41 = sadd.s32 %s40, 1
    %s42 = scalar_select %p39, %s40, %s41
    %p45 = pneg %p39
    %p46 = scmp.eq.s32.totalorder %s9, 1
    %p47 = por %p45, %p46
    %p48 = scmp.ne.s32.totalorder %s40, %s43
    %p49 = scmp.eq.s32.totalorder %s9, 0
    %p50 = por %p48, %p49
    %p51 = scmp.ne.s32.totalorder %s40, %s43
    %p52 = scmp.eq.s32.totalorder %s14, 1
    %p53 = por %p51, %p52
    %p54 = scmp.ne.s32.totalorder %s43, %s44
    %p55 = scmp.eq.s32.totalorder %s14, 0
    %p56 = por %p54, %p55
    %p57 = scmp.ne.s32.totalorder %s43, %s44
    %p58 = scmp.eq.s32.totalorder %s15, 1
    %p59 = por %p57, %p58
    %p61 = scmp.ne.s32.totalorder %s44, %s60
    %p62 = scmp.eq.s32.totalorder %s15, 0
    %p63 = por %p61, %p62
    %s64 = ssub.s32 %s16, %s35
    %s65 = ssub.s32 %s18, %s27
    %s66 = sor.u32 %s64, %s65
    %p67 = scmp.eq.s32.totalorder %s66, 0
    %s69 = sadd.s32 %s68, 1
    %s70 = scalar_select %p67, %s68, %s69
    %p73 = pneg %p67
    %p74 = scmp.eq.s32.totalorder %s9, 1
    %p75 = por %p73, %p74
    %p76 = scmp.ne.s32.totalorder %s68, %s71
    %p77 = scmp.eq.s32.totalorder %s9, 0
    %p78 = por %p76, %p77
    %p79 = scmp.ne.s32.totalorder %s68, %s71
    %p80 = scmp.eq.s32.totalorder %s14, 1
    %p81 = por %p79, %p80
    %p82 = scmp.ne.s32.totalorder %s71, %s72
    %p83 = scmp.eq.s32.totalorder %s14, 0
    %p84 = por %p82, %p83
    %p85 = scmp.ne.s32.totalorder %s71, %s72
    %p86 = scmp.eq.s32.totalorder %s15, 1
    %p87 = por %p85, %p86
    %p89 = scmp.ne.s32.totalorder %s72, %s88
    %p90 = scmp.eq.s32.totalorder %s15, 0
    %p91 = por %p89, %p90
    %s92 = ssub.s32 %s16, %s35
    %s93 = ssub.s32 %s18, %s27
    %s94 = sor.u32 %s92, %s93
    %p95 = scmp.eq.s32.totalorder %s94, 0
    %s97 = sadd.s32 %s96, 1
    %s98 = scalar_select %p95, %s96, %s97
    %p101 = pneg %p95
    %p102 = scmp.eq.s32.totalorder %s9, 1
    %p103 = por %p101, %p102
    %p104 = scmp.ne.s32.totalorder %s96, %s99
    %p105 = scmp.eq.s32.totalorder %s9, 0
    %p106 = por %p104, %p105
    %p107 = scmp.ne.s32.totalorder %s96, %s99
    %p108 = scmp.eq.s32.totalorder %s14, 1
    %p109 = por %p107, %p108
    %p110 = scmp.ne.s32.totalorder %s99, %s100
    %p111 = scmp.eq.s32.totalorder %s14, 0
    %p112 = por %p110, %p111
    %p113 = scmp.ne.s32.totalorder %s99, %s100
    %p114 = scmp.eq.s32.totalorder %s15, 1
    %p115 = por %p113, %p114
    %p117 = scmp.ne.s32.totalorder %s100, %s116
    %p118 = scmp.eq.s32.totalorder %s15, 0
    %p119 = por %p117, %p118
    %s120 = ssub.s32 %s16, %s35
    %s121 = ssub.s32 %s17, %s31
    %s122 = sor.u32 %s120, %s121
    %p123 = scmp.eq.s32.totalorder %s122, 0
    %s125 = sadd.s32 %s124, 1
    %s126 = scalar_select %p123, %s124, %s125
    %p129 = pneg %p123
    %p130 = scmp.eq.s32.totalorder %s9, 1
    %p131 = por %p129, %p130
    %p132 = scmp.ne.s32.totalorder %s124, %s127
    %p133 = scmp.eq.s32.totalorder %s9, 0
    %p134 = por %p132, %p133
    %p135 = scmp.ne.s32.totalorder %s124, %s127
    %p136 = scmp.eq.s32.totalorder %s14, 1
    %p137 = por %p135, %p136
    %p138 = scmp.ne.s32.totalorder %s127, %s128
    %p139 = scmp.eq.s32.totalorder %s14, 0
    %p140 = por %p138, %p139
    %p141 = scmp.ne.s32.totalorder %s127, %s128
    %p142 = scmp.eq.s32.totalorder %s15, 1
    %p143 = por %p141, %p142
    %p145 = scmp.ne.s32.totalorder %s128, %s144
    %p146 = scmp.eq.s32.totalorder %s15, 0
    %p147 = por %p145, %p146
    %p148 = scmp.le.s32.totalorder 1, %s9
    %p149 = scmp.lt.s32.totalorder %s9, 3
    %p150 = pnand %p148, %p149
    %p151 = pneg %p150
    // Predicated region
    $region9: #{decoder_layer.9} parent=5 // pred_check
      _
    $region10: #{decoder_layer.9} parent=5 // pred_check_branch
      %153 = sbr.rel (%p150) target = $region12
    $region11: #{decoder_layer.9} parent=5 // pred_region
      %s154 = ssub.s32 %s9, 1
    $region12: #{decoder_layer.9} parent=5 // pred_fallthru
      _
    %p155 = scmp.lt.s32.totalorder %s9, 2
    // Predicated region
    $region13: #{decoder_layer.9} parent=5 // pred_check
      %p156 = pneg %p155
    $region14: #{decoder_layer.9} parent=5 // pred_check_branch
      %158 = sbr.rel (%p156) target = $region16
    $region15: #{decoder_layer.9} parent=5 // pred_region
      // Predicated region
      $region17: #{decoder_layer.9} parent=15 // pred_check
        %p159 = pneg %p50
      $region18: #{decoder_layer.9} parent=15 // pred_check_branch
        %161 = sbr.rel (%p159) target = $region20
      $region19: #{decoder_layer.9} parent=15 // pred_region
        %p162 = scmp.lt.s32.totalorder %s16, 1
        %s163 = scalar_select %p162, %s16, 1
        %p164 = scmp.lt.s32.totalorder %s17, 0
        %s165 = scalar_select %p164, %s17, 0
        %s166 = smul.addr %s163, 4
        %s167 = sadd.s32 %s165, %s166
        %s168 = smul.addr %s167, 8
        %s169 = scalar_lea.vmem %s0, %s168
      $region20: #{decoder_layer.9} parent=15 // pred_fallthru
        _
      // Predicated region
      $region21: #{decoder_layer.9} parent=15 // pred_check
        %p170 = pneg %p78
      $region22: #{decoder_layer.9} parent=15 // pred_check_branch
        %172 = sbr.rel (%p170) target = $region24
      $region23: #{decoder_layer.9} parent=15 // pred_region
        %p173 = scmp.lt.s32.totalorder %s16, 1
        %s174 = scalar_select %p173, %s16, 1
        %p175 = scmp.lt.s32.totalorder %s18, 0
        %s176 = scalar_select %p175, %s18, 0
        %s177 = smul.addr %s174, 4
        %s178 = sadd.s32 %s176, %s177
        %s179 = smul.addr %s178, 8
        %s180 = scalar_lea.vmem %s1, %s179
      $region24: #{decoder_layer.9} parent=15 // pred_fallthru
        _
      // Predicated region
      $region25: #{decoder_layer.9} parent=15 // pred_check
        %p181 = pneg %p106
      $region26: #{decoder_layer.9} parent=15 // pred_check_branch
        %183 = sbr.rel (%p181) target = $region28
      $region27: #{decoder_layer.9} parent=15 // pred_region
        %p184 = scmp.lt.s32.totalorder %s16, 1
        %s185 = scalar_select %p184, %s16, 1
        %p186 = scmp.lt.s32.totalorder %s18, 0
        %s187 = scalar_select %p186, %s18, 0
        %s188 = smul.addr %s185, 4
        %s189 = sadd.s32 %s187, %s188
        %s190 = smul.addr %s189, 8
        %s191 = scalar_lea.vmem %s2, %s190
      $region28: #{decoder_layer.9} parent=15 // pred_fallthru
        _
    $region16: #{decoder_layer.9} parent=5 // pred_fallthru
      _
    %p192 = scmp.le.s32.totalorder 1, %s9
    %p193 = scmp.lt.s32.totalorder %s9, 3
    %p194 = pnand %p192, %p193
    %p195 = pneg %p194
    // Predicated region
    $region29: #{decoder_layer.9} parent=5 // pred_check
      _
    $region30: #{decoder_layer.9} parent=5 // pred_check_branch
      %197 = sbr.rel (%p194) target = $region32
    $region31: #{decoder_layer.9} parent=5 // pred_region
      %s198 = ssub.s32 %s9, 1
      %p199 = scmp.lt.s32.totalorder %s19, 1
      %s200 = scalar_select %p199, %s19, 1
      %p201 = scmp.lt.s32.totalorder %s20, 0
      %s202 = scalar_select %p201, %s20, 0
      %s203 = smul.addr %s200, 4
      %s204 = sadd.s32 %s202, %s203
      %s205 = smul.addr %s204, 8
      %s206 = scalar_lea.vmem %s0, %s205
      %p207 = pneg %p56
      %p208 = pneg %p53
      %p209 = scmp.lt.s32.totalorder %s19, 1
      %s210 = scalar_select %p209, %s19, 1
      %p211 = scmp.lt.s32.totalorder %s21, 0
      %s212 = scalar_select %p211, %s21, 0
      %s213 = smul.addr %s210, 4
      %s214 = sadd.s32 %s212, %s213
      %s215 = smul.addr %s214, 8
      %s216 = scalar_lea.vmem %s1, %s215
      %p217 = pneg %p84
      %p218 = pneg %p81
      %p219 = scmp.lt.s32.totalorder %s19, 1
      %s220 = scalar_select %p219, %s19, 1
      %p221 = scmp.lt.s32.totalorder %s21, 0
      %s222 = scalar_select %p221, %s21, 0
      %s223 = smul.addr %s220, 4
      %s224 = sadd.s32 %s222, %s223
      %s225 = smul.addr %s224, 8
      %s226 = scalar_lea.vmem %s2, %s225
      %p227 = pneg %p112
      %p228 = pneg %p109
      %p229 = pneg %p140
      %p230 = pneg %p137
      %p231 = scmp.lt.s32.totalorder %s19, 1
      %s232 = scalar_select %p231, %s19, 1
      %p233 = scmp.lt.s32.totalorder %s20, 0
      %s234 = scalar_select %p233, %s20, 0
      %s235 = smul.addr %s232, 4
      %s236 = sadd.s32 %s234, %s235
      %s237 = smul.addr %s236, 8
      %s238 = scalar_lea.vmem %s3, %s237
      %p239 = scmp.lt.s32.totalorder %s19, 1
      %s240 = scalar_select %p239, %s19, 1
      %p241 = scmp.lt.s32.totalorder %s20, 0
      %s242 = scalar_select %p241, %s20, 0
      %s243 = smul.addr %s240, 4
      %s244 = sadd.s32 %s242, %s243
      %s245 = smul.addr %s244, 8
      %s246 = scalar_lea.vmem %s0, %s245
      %p247 = scmp.lt.s32.totalorder %s19, 1
      %s248 = scalar_select %p247, %s19, 1
      %p249 = scmp.lt.s32.totalorder %s21, 0
      %s250 = scalar_select %p249, %s21, 0
      %s251 = smul.addr %s248, 4
      %s252 = sadd.s32 %s250, %s251
      %s253 = smul.addr %s252, 8
      %s254 = scalar_lea.vmem %s1, %s253
      %p255 = scmp.lt.s32.totalorder %s19, 1
      %s256 = scalar_select %p255, %s19, 1
      %p257 = scmp.lt.s32.totalorder %s21, 0
      %s258 = scalar_select %p257, %s21, 0
      %s259 = smul.addr %s256, 4
      %s260 = sadd.s32 %s258, %s259
      %s261 = smul.addr %s260, 8
      %s262 = scalar_lea.vmem %s2, %s261
      %p263 = scmp.lt.s32.totalorder %s19, 1
      %s264 = scalar_select %p263, %s19, 1
      %p265 = scmp.lt.s32.totalorder %s20, 0
      %s266 = scalar_select %p265, %s20, 0
      %s267 = smul.addr %s264, 4
      %s268 = sadd.s32 %s266, %s267
      %s269 = smul.addr %s268, 8
      %s270 = scalar_lea.vmem %s3, %s269
      %p271 = scmp.eq.s32.totalorder %s21, 0
      // Predicated region
      $region33: #{decoder_layer.9} parent=31 // pred_check
        %p272 = pneg %p271
      $region34: #{decoder_layer.9} parent=31 // pred_check_branch
        %274 = sbr.rel (%p272) target = $region36
      $region35: #{decoder_layer.9} parent=31 // pred_region
        %vm275 = vcmask 7168
        %276 = vst.msk [vmem:[#allocation2] sm:$0xff] %vm275, -inf
        %277 = vst.msk [vmem:[#allocation2 + $0x8] sm:$0xff] %vm275, -inf
        %278 = vst.msk [vmem:[#allocation2 + $0x10] sm:$0xff] %vm275, -inf
        %279 = vst.msk [vmem:[#allocation2 + $0x18] sm:$0xff] %vm275, -inf
        %280 = vst.msk [vmem:[#allocation3] sm:$0xff] %vm275, 0.0
        %281 = vst.msk [vmem:[#allocation3 + $0x8] sm:$0xff] %vm275, 0.0
        %282 = vst.msk [vmem:[#allocation3 + $0x10] sm:$0xff] %vm275, 0.0
        %283 = vst.msk [vmem:[#allocation3 + $0x18] sm:$0xff] %vm275, 0.0
        %vm284 = vcmask 64512
        %285 = vst.msk [vmem:[#allocation4] sm:$0xff] %vm284, 0.0
        %286 = vst.msk [vmem:[#allocation4 + $0x8] sm:$0xff] %vm284, 0.0
        %287 = vst.msk [vmem:[#allocation4 + $0x10] sm:$0xff] %vm284, 0.0
        %288 = vst.msk [vmem:[#allocation4 + $0x18] sm:$0xff] %vm284, 0.0
      $region36: #{decoder_layer.9} parent=31 // pred_fallthru
        _
      %v289 = vld [vmem:[%s246] sm:$0xff]
      %v290 = vld [vmem:[%s246 + $0x8] sm:$0xff]
      %v291 = vld [vmem:[%s246 + $0x10] sm:$0xff]
      %v292 = vld [vmem:[%s246 + $0x18] sm:$0xff]
      %v293 = vld [vmem:[%s254] sm:$0xff]
      %v294 = vld [vmem:[%s254 + $0x8] sm:$0xff]
      %v295 = vld [vmem:[%s254 + $0x10] sm:$0xff]
      %v296 = vld [vmem:[%s254 + $0x18] sm:$0xff]
      %v297 = vld [vmem:[%s262] sm:$0xff]
      %v298 = vld [vmem:[%s262 + $0x8] sm:$0xff]
      %v299 = vld [vmem:[%s262 + $0x10] sm:$0xff]
      %v300 = vld [vmem:[%s262 + $0x18] sm:$0xff]
      %vm301 = vcmask 64512
      %v303 = vsel %vm301, %v289, 0
      %v306 = vsel %vm301, %v293, 0
      %308 = vmatprep.subr.mxu0 0.0
      %309 = vmatpush1.xpose.msra.mxu0 %v306
      %310 = vmatprep.subr.mxu0 0.0
      %311 = vmatpush1.xpose.msra.mxu0 0.0
      %312 = vmatprep.subr.mxu0 0.0
      %313 = vmatpush1.xpose.msra.mxu0 0.0
      %314 = vmatprep.subr.mxu0 0.0
      %315 = vmatpush1.xpose.msra.mxu0 0.0
      %316 = vmatprep.subr.mxu0 0.0
      %317 = vmatpush1.xpose.msra.mxu0 0.0
      %318 = vmatprep.subr.mxu0 0.0
      %319 = vmatpush1.xpose.msra.mxu0 0.0
      %320 = vmatprep.subr.mxu0 0.0
      %321 = vmatpush1.xpose.msra.mxu0 0.0
      %322 = vmatprep.subr.mxu0 0.0
      %323 = vmatpush1.xpose.msra.mxu0 0.0
      %324 = vmatprep.subr.mxu0 0.0
      %325 = vmatpush1.xpose.msra.mxu0 0.0
      %326 = vmatprep.subr.mxu0 0.0
      %327 = vmatpush1.xpose.msra.mxu0 0.0
      %328 = vmatprep.subr.mxu0 0.0
      %329 = vmatpush1.xpose.msra.mxu0 0.0
      %330 = vmatprep.subr.mxu0 0.0
      %331 = vmatpush1.xpose.msra.mxu0 0.0
      %332 = vmatprep.subr.mxu0 0.0
      %333 = vmatpush1.xpose.msra.mxu0 0.0
      %334 = vmatprep.subr.mxu0 0.0
      %335 = vmatpush1.xpose.msra.mxu0 0.0
      %336 = vmatprep.subr.mxu0 0.0
      %337 = vmatpush1.xpose.msra.mxu0 0.0
      %338 = vmatprep.subr.mxu0 0.0
      %339 = vmatpush1.xpose.msra.mxu0 0.0
      %340 = vmatprep.subr.mxu0 0.0
      %341 = vmatpush1.xpose.msra.mxu0 0.0
      %342 = vmatprep.subr.mxu0 0.0
      %343 = vmatpush1.xpose.msra.mxu0 0.0
      %344 = vmatprep.subr.mxu0 0.0
      %345 = vmatpush1.xpose.msra.mxu0 0.0
      %346 = vmatprep.subr.mxu0 0.0
      %347 = vmatpush1.xpose.msra.mxu0 0.0
      %348 = vmatprep.subr.mxu0 0.0
      %349 = vmatpush1.xpose.msra.mxu0 0.0
      %350 = vmatprep.subr.mxu0 0.0
      %351 = vmatpush1.xpose.msra.mxu0 0.0
      %352 = vmatprep.subr.mxu0 0.0
      %353 = vmatpush1.xpose.msra.mxu0 0.0
      %354 = vmatprep.subr.mxu0 0.0
      %355 = vmatpush1.xpose.msra.mxu0 0.0
      %356 = vmatprep.subr.mxu0 0.0
      %357 = vmatpush1.xpose.msra.mxu0 0.0
      %358 = vmatprep.subr.mxu0 0.0
      %359 = vmatpush1.xpose.msra.mxu0 0.0
      %360 = vmatprep.subr.mxu0 0.0
      %361 = vmatpush1.xpose.msra.mxu0 0.0
      %362 = vmatprep.subr.mxu0 0.0
      %363 = vmatpush1.xpose.msra.mxu0 0.0
      %364 = vmatprep.subr.mxu0 0.0
      %365 = vmatpush1.xpose.msra.mxu0 0.0
      %366 = vmatprep.subr.mxu0 0.0
      %367 = vmatpush1.xpose.msra.mxu0 0.0
      %368 = vmatprep.subr.mxu0 0.0
      %369 = vmatpush1.xpose.msra.mxu0 0.0
      %370 = vmatprep.subr.mxu0 0.0
      %371 = vmatpush1.xpose.msra.mxu0 0.0
      %372 = vmatprep.mubr.f32.mxu0 0.0
      %373 = vmatmul.mubr.f32.gmra.mrb[0].mxu0 %v303
      %v374 = vpop.f32.mrb[0].mxu0
      %v375 = vadd.f32 0.0, %v374
      %v376 = vpop.f32.mrb[0].mxu0
      %377 = vdwg.mxu0
      %v379 = vsel %vm301, %v290, 0
      %v382 = vsel %vm301, %v294, 0
      %384 = vmatprep.subr.mxu0 0.0
      %385 = vmatpush1.xpose.msra.mxu0 %v382
      %386 = vmatprep.subr.mxu0 0.0
      %387 = vmatpush1.xpose.msra.mxu0 0.0
      %388 = vmatprep.subr.mxu0 0.0
      %389 = vmatpush1.xpose.msra.mxu0 0.0
      %390 = vmatprep.subr.mxu0 0.0
      %391 = vmatpush1.xpose.msra.mxu0 0.0
      %392 = vmatprep.subr.mxu0 0.0
      %393 = vmatpush1.xpose.msra.mxu0 0.0
      %394 = vmatprep.subr.mxu0 0.0
      %395 = vmatpush1.xpose.msra.mxu0 0.0
      %396 = vmatprep.subr.mxu0 0.0
      %397 = vmatpush1.xpose.msra.mxu0 0.0
      %398 = vmatprep.subr.mxu0 0.0
      %399 = vmatpush1.xpose.msra.mxu0 0.0
      %400 = vmatprep.subr.mxu0 0.0
      %401 = vmatpush1.xpose.msra.mxu0 0.0
      %402 = vmatprep.subr.mxu0 0.0
      %403 = vmatpush1.xpose.msra.mxu0 0.0
      %404 = vmatprep.subr.mxu0 0.0
      %405 = vmatpush1.xpose.msra.mxu0 0.0
      %406 = vmatprep.subr.mxu0 0.0
      %407 = vmatpush1.xpose.msra.mxu0 0.0
      %408 = vmatprep.subr.mxu0 0.0
      %409 = vmatpush1.xpose.msra.mxu0 0.0
      %410 = vmatprep.subr.mxu0 0.0
      %411 = vmatpush1.xpose.msra.mxu0 0.0
      %412 = vmatprep.subr.mxu0 0.0
      %413 = vmatpush1.xpose.msra.mxu0 0.0
      %414 = vmatprep.subr.mxu0 0.0
      %415 = vmatpush1.xpose.msra.mxu0 0.0
      %416 = vmatprep.subr.mxu0 0.0
      %417 = vmatpush1.xpose.msra.mxu0 0.0
      %418 = vmatprep.subr.mxu0 0.0
      %419 = vmatpush1.xpose.msra.mxu0 0.0
      %420 = vmatprep.subr.mxu0 0.0
      %421 = vmatpush1.xpose.msra.mxu0 0.0
      %422 = vmatprep.subr.mxu0 0.0
      %423 = vmatpush1.xpose.msra.mxu0 0.0
      %424 = vmatprep.subr.mxu0 0.0
      %425 = vmatpush1.xpose.msra.mxu0 0.0
      %426 = vmatprep.subr.mxu0 0.0
      %427 = vmatpush1.xpose.msra.mxu0 0.0
      %428 = vmatprep.subr.mxu0 0.0
      %429 = vmatpush1.xpose.msra.mxu0 0.0
      %430 = vmatprep.subr.mxu0 0.0
      %431 = vmatpush1.xpose.msra.mxu0 0.0
      %432 = vmatprep.subr.mxu0 0.0
      %433 = vmatpush1.xpose.msra.mxu0 0.0
      %434 = vmatprep.subr.mxu0 0.0
      %435 = vmatpush1.xpose.msra.mxu0 0.0
      %436 = vmatprep.subr.mxu0 0.0
      %437 = vmatpush1.xpose.msra.mxu0 0.0
      %438 = vmatprep.subr.mxu0 0.0
      %439 = vmatpush1.xpose.msra.mxu0 0.0
      %440 = vmatprep.subr.mxu0 0.0
      %441 = vmatpush1.xpose.msra.mxu0 0.0
      %442 = vmatprep.subr.mxu0 0.0
      %443 = vmatpush1.xpose.msra.mxu0 0.0
      %444 = vmatprep.subr.mxu0 0.0
      %445 = vmatpush1.xpose.msra.mxu0 0.0
      %446 = vmatprep.subr.mxu0 0.0
      %447 = vmatpush1.xpose.msra.mxu0 0.0
      %448 = vmatprep.mubr.f32.mxu0 0.0
      %449 = vmatmul.mubr.f32.gmra.mrb[0].mxu0 %v379
      %v450 = vpop.f32.mrb[0].mxu0
      %v451 = vadd.f32 0.0, %v450
      %v452 = vpop.f32.mrb[0].mxu0
      %453 = vdwg.mxu0
      %v455 = vsel %vm301, %v291, 0
      %v458 = vsel %vm301, %v295, 0
      %460 = vmatprep.subr.mxu0 0.0
      %461 = vmatpush1.xpose.msra.mxu0 %v458
      %462 = vmatprep.subr.mxu0 0.0
      %463 = vmatpush1.xpose.msra.mxu0 0.0
      %464 = vmatprep.subr.mxu0 0.0
      %465 = vmatpush1.xpose.msra.mxu0 0.0
      %466 = vmatprep.subr.mxu0 0.0
      %467 = vmatpush1.xpose.msra.mxu0 0.0
      %468 = vmatprep.subr.mxu0 0.0
      %469 = vmatpush1.xpose.msra.mxu0 0.0
      %470 = vmatprep.subr.mxu0 0.0
      %471 = vmatpush1.xpose.msra.mxu0 0.0
      %472 = vmatprep.subr.mxu0 0.0
      %473 = vmatpush1.xpose.msra.mxu0 0.0
      %474 = vmatprep.subr.mxu0 0.0
      %475 = vmatpush1.xpose.msra.mxu0 0.0
      %476 = vmatprep.subr.mxu0 0.0
      %477 = vmatpush1.xpose.msra.mxu0 0.0
      %478 = vmatprep.subr.mxu0 0.0
      %479 = vmatpush1.xpose.msra.mxu0 0.0
      %480 = vmatprep.subr.mxu0 0.0
      %481 = vmatpush1.xpose.msra.mxu0 0.0
      %482 = vmatprep.subr.mxu0 0.0
      %483 = vmatpush1.xpose.msra.mxu0 0.0
      %484 = vmatprep.subr.mxu0 0.0
      %485 = vmatpush1.xpose.msra.mxu0 0.0
      %486 = vmatprep.subr.mxu0 0.0
      %487 = vmatpush1.xpose.msra.mxu0 0.0
      %488 = vmatprep.subr.mxu0 0.0
      %489 = vmatpush1.xpose.msra.mxu0 0.0
      %490 = vmatprep.subr.mxu0 0.0
      %491 = vmatpush1.xpose.msra.mxu0 0.0
      %492 = vmatprep.subr.mxu0 0.0
      %493 = vmatpush1.xpose.msra.mxu0 0.0
      %494 = vmatprep.subr.mxu0 0.0
      %495 = vmatpush1.xpose.msra.mxu0 0.0
      %496 = vmatprep.subr.mxu0 0.0
      %497 = vmatpush1.xpose.msra.mxu0 0.0
      %498 = vmatprep.subr.mxu0 0.0
      %499 = vmatpush1.xpose.msra.mxu0 0.0
      %500 = vmatprep.subr.mxu0 0.0
      %501 = vmatpush1.xpose.msra.mxu0 0.0
      %502 = vmatprep.subr.mxu0 0.0
      %503 = vmatpush1.xpose.msra.mxu0 0.0
      %504 = vmatprep.subr.mxu0 0.0
      %505 = vmatpush1.xpose.msra.mxu0 0.0
      %506 = vmatprep.subr.mxu0 0.0
      %507 = vmatpush1.xpose.msra.mxu0 0.0
      %508 = vmatprep.subr.mxu0 0.0
      %509 = vmatpush1.xpose.msra.mxu0 0.0
      %510 = vmatprep.subr.mxu0 0.0
      %511 = vmatpush1.xpose.msra.mxu0 0.0
      %512 = vmatprep.subr.mxu0 0.0
      %513 = vmatpush1.xpose.msra.mxu0 0.0
      %514 = vmatprep.subr.mxu0 0.0
      %515 = vmatpush1.xpose.msra.mxu0 0.0
      %516 = vmatprep.subr.mxu0 0.0
      %517 = vmatpush1.xpose.msra.mxu0 0.0
      %518 = vmatprep.subr.mxu0 0.0
      %519 = vmatpush1.xpose.msra.mxu0 0.0
      %520 = vmatprep.subr.mxu0 0.0
      %521 = vmatpush1.xpose.msra.mxu0 0.0
      %522 = vmatprep.subr.mxu0 0.0
      %523 = vmatpush1.xpose.msra.mxu0 0.0
      %524 = vmatprep.mubr.f32.mxu0 0.0
      %525 = vmatmul.mubr.f32.gmra.mrb[0].mxu0 %v455
      %v526 = vpop.f32.mrb[0].mxu0
      %v527 = vadd.f32 0.0, %v526
      %v528 = vpop.f32.mrb[0].mxu0
      %529 = vdwg.mxu0
      %v531 = vsel %vm301, %v292, 0
      %v534 = vsel %vm301, %v296, 0
      %536 = vmatprep.subr.mxu0 0.0
      %537 = vmatpush1.xpose.msra.mxu0 %v534
      %538 = vmatprep.subr.mxu0 0.0
      %539 = vmatpush1.xpose.msra.mxu0 0.0
      %540 = vmatprep.subr.mxu0 0.0
      %541 = vmatpush1.xpose.msra.mxu0 0.0
      %542 = vmatprep.subr.mxu0 0.0
      %543 = vmatpush1.xpose.msra.mxu0 0.0
      %544 = vmatprep.subr.mxu0 0.0
      %545 = vmatpush1.xpose.msra.mxu0 0.0
      %546 = vmatprep.subr.mxu0 0.0
      %547 = vmatpush1.xpose.msra.mxu0 0.0
      %548 = vmatprep.subr.mxu0 0.0
      %549 = vmatpush1.xpose.msra.mxu0 0.0
      %550 = vmatprep.subr.mxu0 0.0
      %551 = vmatpush1.xpose.msra.mxu0 0.0
      %552 = vmatprep.subr.mxu0 0.0
      %553 = vmatpush1.xpose.msra.mxu0 0.0
      %554 = vmatprep.subr.mxu0 0.0
      %555 = vmatpush1.xpose.msra.mxu0 0.0
      %556 = vmatprep.subr.mxu0 0.0
      %557 = vmatpush1.xpose.msra.mxu0 0.0
      %558 = vmatprep.subr.mxu0 0.0
      %559 = vmatpush1.xpose.msra.mxu0 0.0
      %560 = vmatprep.subr.mxu0 0.0
      %561 = vmatpush1.xpose.msra.mxu0 0.0
      %562 = vmatprep.subr.mxu0 0.0
      %563 = vmatpush1.xpose.msra.mxu0 0.0
      %564 = vmatprep.subr.mxu0 0.0
      %565 = vmatpush1.xpose.msra.mxu0 0.0
      %566 = vmatprep.subr.mxu0 0.0
      %567 = vmatpush1.xpose.msra.mxu0 0.0
      %568 = vmatprep.subr.mxu0 0.0
      %569 = vmatpush1.xpose.msra.mxu0 0.0
      %570 = vmatprep.subr.mxu0 0.0
      %571 = vmatpush1.xpose.msra.mxu0 0.0
      %572 = vmatprep.subr.mxu0 0.0
      %573 = vmatpush1.xpose.msra.mxu0 0.0
      %574 = vmatprep.subr.mxu0 0.0
      %575 = vmatpush1.xpose.msra.mxu0 0.0
      %576 = vmatprep.subr.mxu0 0.0
      %577 = vmatpush1.xpose.msra.mxu0 0.0
      %578 = vmatprep.subr.mxu0 0.0
      %579 = vmatpush1.xpose.msra.mxu0 0.0
      %580 = vmatprep.subr.mxu0 0.0
      %581 = vmatpush1.xpose.msra.mxu0 0.0
      %582 = vmatprep.subr.mxu0 0.0
      %583 = vmatpush1.xpose.msra.mxu0 0.0
      %584 = vmatprep.subr.mxu0 0.0
      %585 = vmatpush1.xpose.msra.mxu0 0.0
      %586 = vmatprep.subr.mxu0 0.0
      %587 = vmatpush1.xpose.msra.mxu0 0.0
      %588 = vmatprep.subr.mxu0 0.0
      %589 = vmatpush1.xpose.msra.mxu0 0.0
      %590 = vmatprep.subr.mxu0 0.0
      %591 = vmatpush1.xpose.msra.mxu0 0.0
      %592 = vmatprep.subr.mxu0 0.0
      %593 = vmatpush1.xpose.msra.mxu0 0.0
      %594 = vmatprep.subr.mxu0 0.0
      %595 = vmatpush1.xpose.msra.mxu0 0.0
      %596 = vmatprep.subr.mxu0 0.0
      %597 = vmatpush1.xpose.msra.mxu0 0.0
      %598 = vmatprep.subr.mxu0 0.0
      %599 = vmatpush1.xpose.msra.mxu0 0.0
      %600 = vmatprep.mubr.f32.mxu0 0.0
      %601 = vmatmul.mubr.f32.gmra.mrb[0].mxu0 %v531
      %v602 = vpop.f32.mrb[0].mxu0
      %v603 = vadd.f32 0.0, %v602
      %v604 = vpop.f32.mrb[0].mxu0
      %605 = vdwg.mxu0
      %v606 = vld [vmem:[#allocation2] sm:$0xff]
      %v607 = vld [vmem:[#allocation2 + $0x8] sm:$0xff]
      %v608 = vld [vmem:[#allocation2 + $0x10] sm:$0xff]
      %v609 = vld [vmem:[#allocation2 + $0x18] sm:$0xff]
      %v610 = vsel %vm301, %v375, -inf
      %611 = vmax.xlane.f32.xlu0 %v610
      %v612 = vpop.xlane.xlu0 %611
      %v613 = vsel %vm301, %v451, -inf
      %614 = vmax.xlane.f32.xlu0 %v613
      %v615 = vpop.xlane.xlu0 %614
      %v616 = vsel %vm301, %v527, -inf
      %617 = vmax.xlane.f32.xlu0 %v616
      %v618 = vpop.xlane.xlu0 %617
      %v619 = vsel %vm301, %v603, -inf
      %620 = vmax.xlane.f32.xlu0 %v619
      %v621 = vpop.xlane.xlu0 %620
      %v622 = vmax.f32 %v606, %v612
      %v623 = vmax.f32 %v607, %v615
      %v624 = vmax.f32 %v608, %v618
      %v625 = vmax.f32 %v609, %v621
      %v626 = vsub.f32 %v606, %v622
      %v627 = vsub.f32 %v607, %v623
      %v628 = vsub.f32 %v608, %v624
      %v629 = vsub.f32 %v609, %v625
      %v630 = vmul.f32 %v626, 1.442695
      %v631 = vpow.pop %v630
      %v632 = vmul.f32 %v627, 1.442695
      %v633 = vpow.pop %v632
      %v634 = vmul.f32 %v628, 1.442695
      %v635 = vpow.pop %v634
      %v636 = vmul.f32 %v629, 1.442695
      %v637 = vpow.pop %v636
      %639 = vset.pattern.permute.xlu0 0
      %640 = vperm.xlu0 %639, %v622
      %v641 = vpop.permute.xlu0 %640
      %644 = vset.pattern.permute.xlu0 0
      %645 = vperm.xlu0 %644, %v623
      %v646 = vpop.permute.xlu0 %645
      %649 = vset.pattern.permute.xlu0 0
      %650 = vperm.xlu0 %649, %v624
      %v651 = vpop.permute.xlu0 %650
      %654 = vset.pattern.permute.xlu0 0
      %655 = vperm.xlu0 %654, %v625
      %v656 = vpop.permute.xlu0 %655
      %v658 = vsub.f32 %v375, %v641
      %v659 = vsub.f32 %v451, %v646
      %v660 = vsub.f32 %v527, %v651
      %v661 = vsub.f32 %v603, %v656
      %v662 = vmul.f32 %v658, 1.442695
      %v663 = vpow.pop %v662
      %v664 = vmul.f32 %v659, 1.442695
      %v665 = vpow.pop %v664
      %v666 = vmul.f32 %v660, 1.442695
      %v667 = vpow.pop %v666
      %v668 = vmul.f32 %v661, 1.442695
      %v669 = vpow.pop %v668
      %v670 = vld [vmem:[#allocation3] sm:$0xff]
      %v671 = vld [vmem:[#allocation3 + $0x8] sm:$0xff]
      %v672 = vld [vmem:[#allocation3 + $0x10] sm:$0xff]
      %v673 = vld [vmem:[#allocation3 + $0x18] sm:$0xff]
      %v674 = vmul.f32 %v631, %v670
      %v675 = vmul.f32 %v633, %v671
      %v676 = vmul.f32 %v635, %v672
      %v677 = vmul.f32 %v637, %v673
      %v678 = vsel %vm301, %v663, 0.0
      %679 = vadd.xlane.f32.xlu0 %v678
      %v680 = vpop.xlane.xlu0 %679
      %v681 = vsel %vm301, %v665, 0.0
      %682 = vadd.xlane.f32.xlu0 %v681
      %v683 = vpop.xlane.xlu0 %682
      %v684 = vsel %vm301, %v667, 0.0
      %685 = vadd.xlane.f32.xlu0 %v684
      %v686 = vpop.xlane.xlu0 %685
      %v687 = vsel %vm301, %v669, 0.0
      %688 = vadd.xlane.f32.xlu0 %v687
      %v689 = vpop.xlane.xlu0 %688
      %v690 = vadd.f32 %v674, %v680
      %v691 = vadd.f32 %v675, %v683
      %v692 = vadd.f32 %v676, %v686
      %v693 = vadd.f32 %v677, %v689
      %vm694 = vcmask 7168
      %695 = vst.msk [vmem:[#allocation3] sm:$0xff] %vm694, %v690
      %696 = vst.msk [vmem:[#allocation3 + $0x8] sm:$0xff] %vm694, %v691
      %697 = vst.msk [vmem:[#allocation3 + $0x10] sm:$0xff] %vm694, %v692
      %698 = vst.msk [vmem:[#allocation3 + $0x18] sm:$0xff] %vm694, %v693
      %v699 = vld [vmem:[#allocation4] sm:$0xff]
      %v700 = vld [vmem:[#allocation4 + $0x8] sm:$0xff]
      %v701 = vld [vmem:[#allocation4 + $0x10] sm:$0xff]
      %v702 = vld [vmem:[#allocation4 + $0x18] sm:$0xff]
      %704 = vset.pattern.permute.xlu0 0
      %705 = vperm.xlu0 %704, %v631
      %v706 = vpop.permute.xlu0 %705
      %709 = vset.pattern.permute.xlu0 0
      %710 = vperm.xlu0 %709, %v633
      %v711 = vpop.permute.xlu0 %710
      %714 = vset.pattern.permute.xlu0 0
      %715 = vperm.xlu0 %714, %v635
      %v716 = vpop.permute.xlu0 %715
      %719 = vset.pattern.permute.xlu0 0
      %720 = vperm.xlu0 %719, %v637
      %v721 = vpop.permute.xlu0 %720
      %v723 = vmul.f32 %v706, %v699
      %v724 = vmul.f32 %v711, %v700
      %v725 = vmul.f32 %v716, %v701
      %v726 = vmul.f32 %v721, %v702
      %v728 = vsel %vm301, %v663, 0
      %730 = vmatprep.subr.mxu0 0.0
      %731 = vmatpush1.msra.mxu0 %v297
      %732 = vmatprep.subr.mxu0 0.0
      %733 = vmatpush1.msra.mxu0 0.0
      %734 = vmatprep.subr.mxu0 0.0
      %735 = vmatpush1.msra.mxu0 0.0
      %736 = vmatprep.subr.mxu0 0.0
      %737 = vmatpush1.msra.mxu0 0.0
      %738 = vmatprep.subr.mxu0 0.0
      %739 = vmatpush1.msra.mxu0 0.0
      %740 = vmatprep.subr.mxu0 0.0
      %741 = vmatpush1.msra.mxu0 0.0
      %742 = vmatprep.subr.mxu0 0.0
      %743 = vmatpush1.msra.mxu0 0.0
      %744 = vmatprep.subr.mxu0 0.0
      %745 = vmatpush1.msra.mxu0 0.0
      %746 = vmatprep.subr.mxu0 0.0
      %747 = vmatpush1.msra.mxu0 0.0
      %748 = vmatprep.subr.mxu0 0.0
      %749 = vmatpush1.msra.mxu0 0.0
      %750 = vmatprep.subr.mxu0 0.0
      %751 = vmatpush1.msra.mxu0 0.0
      %752 = vmatprep.subr.mxu0 0.0
      %753 = vmatpush1.msra.mxu0 0.0
      %754 = vmatprep.subr.mxu0 0.0
      %755 = vmatpush1.msra.mxu0 0.0
      %756 = vmatprep.subr.mxu0 0.0
      %757 = vmatpush1.msra.mxu0 0.0
      %758 = vmatprep.subr.mxu0 0.0
      %759 = vmatpush1.msra.mxu0 0.0
      %760 = vmatprep.subr.mxu0 0.0
      %761 = vmatpush1.msra.mxu0 0.0
      %762 = vmatprep.subr.mxu0 0.0
      %763 = vmatpush1.msra.mxu0 0.0
      %764 = vmatprep.subr.mxu0 0.0
      %765 = vmatpush1.msra.mxu0 0.0
      %766 = vmatprep.subr.mxu0 0.0
      %767 = vmatpush1.msra.mxu0 0.0
      %768 = vmatprep.subr.mxu0 0.0
      %769 = vmatpush1.msra.mxu0 0.0
      %770 = vmatprep.subr.mxu0 0.0
      %771 = vmatpush1.msra.mxu0 0.0
      %772 = vmatprep.subr.mxu0 0.0
      %773 = vmatpush1.msra.mxu0 0.0
      %774 = vmatprep.subr.mxu0 0.0
      %775 = vmatpush1.msra.mxu0 0.0
      %776 = vmatprep.subr.mxu0 0.0
      %777 = vmatpush1.msra.mxu0 0.0
      %778 = vmatprep.subr.mxu0 0.0
      %779 = vmatpush1.msra.mxu0 0.0
      %780 = vmatprep.subr.mxu0 0.0
      %781 = vmatpush1.msra.mxu0 0.0
      %782 = vmatprep.subr.mxu0 0.0
      %783 = vmatpush1.msra.mxu0 0.0
      %784 = vmatprep.subr.mxu0 0.0
      %785 = vmatpush1.msra.mxu0 0.0
      %786 = vmatprep.subr.mxu0 0.0
      %787 = vmatpush1.msra.mxu0 0.0
      %788 = vmatprep.subr.mxu0 0.0
      %789 = vmatpush1.msra.mxu0 0.0
      %790 = vmatprep.subr.mxu0 0.0
      %791 = vmatpush1.msra.mxu0 0.0
      %792 = vmatprep.subr.mxu0 0.0
      %793 = vmatpush1.msra.mxu0 0.0
      %794 = vmatprep.mubr.f32.mxu0 0.0
      %795 = vmatmul.mubr.f32.gmra.mrb[0].mxu0 %v728
      %v796 = vpop.f32.mrb[0].mxu0
      %v797 = vadd.f32 0.0, %v796
      %v798 = vpop.f32.mrb[0].mxu0
      %799 = vdwg.mxu0
      %v801 = vsel %vm301, %v665, 0
      %803 = vmatprep.subr.mxu0 0.0
      %804 = vmatpush1.msra.mxu0 %v298
      %805 = vmatprep.subr.mxu0 0.0
      %806 = vmatpush1.msra.mxu0 0.0
      %807 = vmatprep.subr.mxu0 0.0
      %808 = vmatpush1.msra.mxu0 0.0
      %809 = vmatprep.subr.mxu0 0.0
      %810 = vmatpush1.msra.mxu0 0.0
      %811 = vmatprep.subr.mxu0 0.0
      %812 = vmatpush1.msra.mxu0 0.0
      %813 = vmatprep.subr.mxu0 0.0
      %814 = vmatpush1.msra.mxu0 0.0
      %815 = vmatprep.subr.mxu0 0.0
      %816 = vmatpush1.msra.mxu0 0.0
      %817 = vmatprep.subr.mxu0 0.0
      %818 = vmatpush1.msra.mxu0 0.0
      %819 = vmatprep.subr.mxu0 0.0
      %820 = vmatpush1.msra.mxu0 0.0
      %821 = vmatprep.subr.mxu0 0.0
      %822 = vmatpush1.msra.mxu0 0.0
      %823 = vmatprep.subr.mxu0 0.0
      %824 = vmatpush1.msra.mxu0 0.0
      %825 = vmatprep.subr.mxu0 0.0
      %826 = vmatpush1.msra.mxu0 0.0
      %827 = vmatprep.subr.mxu0 0.0
      %828 = vmatpush1.msra.mxu0 0.0
      %829 = vmatprep.subr.mxu0 0.0
      %830 = vmatpush1.msra.mxu0 0.0
      %831 = vmatprep.subr.mxu0 0.0
      %832 = vmatpush1.msra.mxu0 0.0
      %833 = vmatprep.subr.mxu0 0.0
      %834 = vmatpush1.msra.mxu0 0.0
      %835 = vmatprep.subr.mxu0 0.0
      %836 = vmatpush1.msra.mxu0 0.0
      %837 = vmatprep.subr.mxu0 0.0
      %838 = vmatpush1.msra.mxu0 0.0
      %839 = vmatprep.subr.mxu0 0.0
      %840 = vmatpush1.msra.mxu0 0.0
      %841 = vmatprep.subr.mxu0 0.0
      %842 = vmatpush1.msra.mxu0 0.0
      %843 = vmatprep.subr.mxu0 0.0
      %844 = vmatpush1.msra.mxu0 0.0
      %845 = vmatprep.subr.mxu0 0.0
      %846 = vmatpush1.msra.mxu0 0.0
      %847 = vmatprep.subr.mxu0 0.0
      %848 = vmatpush1.msra.mxu0 0.0
      %849 = vmatprep.subr.mxu0 0.0
      %850 = vmatpush1.msra.mxu0 0.0
      %851 = vmatprep.subr.mxu0 0.0
      %852 = vmatpush1.msra.mxu0 0.0
      %853 = vmatprep.subr.mxu0 0.0
      %854 = vmatpush1.msra.mxu0 0.0
      %855 = vmatprep.subr.mxu0 0.0
      %856 = vmatpush1.msra.mxu0 0.0
      %857 = vmatprep.subr.mxu0 0.0
      %858 = vmatpush1.msra.mxu0 0.0
      %859 = vmatprep.subr.mxu0 0.0
      %860 = vmatpush1.msra.mxu0 0.0
      %861 = vmatprep.subr.mxu0 0.0
      %862 = vmatpush1.msra.mxu0 0.0
      %863 = vmatprep.subr.mxu0 0.0
      %864 = vmatpush1.msra.mxu0 0.0
      %865 = vmatprep.subr.mxu0 0.0
      %866 = vmatpush1.msra.mxu0 0.0
      %867 = vmatprep.mubr.f32.mxu0 0.0
      %868 = vmatmul.mubr.f32.gmra.mrb[0].mxu0 %v801
      %v869 = vpop.f32.mrb[0].mxu0
      %v870 = vadd.f32 0.0, %v869
      %v871 = vpop.f32.mrb[0].mxu0
      %872 = vdwg.mxu0
      %v874 = vsel %vm301, %v667, 0
      %876 = vmatprep.subr.mxu0 0.0
      %877 = vmatpush1.msra.mxu0 %v299
      %878 = vmatprep.subr.mxu0 0.0
      %879 = vmatpush1.msra.mxu0 0.0
      %880 = vmatprep.subr.mxu0 0.0
      %881 = vmatpush1.msra.mxu0 0.0
      %882 = vmatprep.subr.mxu0 0.0
      %883 = vmatpush1.msra.mxu0 0.0
      %884 = vmatprep.subr.mxu0 0.0
      %885 = vmatpush1.msra.mxu0 0.0
      %886 = vmatprep.subr.mxu0 0.0
      %887 = vmatpush1.msra.mxu0 0.0
      %888 = vmatprep.subr.mxu0 0.0
      %889 = vmatpush1.msra.mxu0 0.0
      %890 = vmatprep.subr.mxu0 0.0
      %891 = vmatpush1.msra.mxu0 0.0
      %892 = vmatprep.subr.mxu0 0.0
      %893 = vmatpush1.msra.mxu0 0.0
      %894 = vmatprep.subr.mxu0 0.0
      %895 = vmatpush1.msra.mxu0 0.0
      %896 = vmatprep.subr.mxu0 0.0
      %897 = vmatpush1.msra.mxu0 0.0
      %898 = vmatprep.subr.mxu0 0.0
      %899 = vmatpush1.msra.mxu0 0.0
      %900 = vmatprep.subr.mxu0 0.0
      %901 = vmatpush1.msra.mxu0 0.0
      %902 = vmatprep.subr.mxu0 0.0
      %903 = vmatpush1.msra.mxu0 0.0
      %904 = vmatprep.subr.mxu0 0.0
      %905 = vmatpush1.msra.mxu0 0.0
      %906 = vmatprep.subr.mxu0 0.0
      %907 = vmatpush1.msra.mxu0 0.0
      %908 = vmatprep.subr.mxu0 0.0
      %909 = vmatpush1.msra.mxu0 0.0
      %910 = vmatprep.subr.mxu0 0.0
      %911 = vmatpush1.msra.mxu0 0.0
      %912 = vmatprep.subr.mxu0 0.0
      %913 = vmatpush1.msra.mxu0 0.0
      %914 = vmatprep.subr.mxu0 0.0
      %915 = vmatpush1.msra.mxu0 0.0
      %916 = vmatprep.subr.mxu0 0.0
      %917 = vmatpush1.msra.mxu0 0.0
      %918 = vmatprep.subr.mxu0 0.0
      %919 = vmatpush1.msra.mxu0 0.0
      %920 = vmatprep.subr.mxu0 0.0
      %921 = vmatpush1.msra.mxu0 0.0
      %922 = vmatprep.subr.mxu0 0.0
      %923 = vmatpush1.msra.mxu0 0.0
      %924 = vmatprep.subr.mxu0 0.0
      %925 = vmatpush1.msra.mxu0 0.0
      %926 = vmatprep.subr.mxu0 0.0
      %927 = vmatpush1.msra.mxu0 0.0
      %928 = vmatprep.subr.mxu0 0.0
      %929 = vmatpush1.msra.mxu0 0.0
      %930 = vmatprep.subr.mxu0 0.0
      %931 = vmatpush1.msra.mxu0 0.0
      %932 = vmatprep.subr.mxu0 0.0
      %933 = vmatpush1.msra.mxu0 0.0
      %934 = vmatprep.subr.mxu0 0.0
      %935 = vmatpush1.msra.mxu0 0.0
      %936 = vmatprep.subr.mxu0 0.0
      %937 = vmatpush1.msra.mxu0 0.0
      %938 = vmatprep.subr.mxu0 0.0
      %939 = vmatpush1.msra.mxu0 0.0
      %940 = vmatprep.mubr.f32.mxu0 0.0
      %941 = vmatmul.mubr.f32.gmra.mrb[0].mxu0 %v874
      %v942 = vpop.f32.mrb[0].mxu0
      %v943 = vadd.f32 0.0, %v942
      %v944 = vpop.f32.mrb[0].mxu0
      %945 = vdwg.mxu0
      %v947 = vsel %vm301, %v669, 0
      %949 = vmatprep.subr.mxu0 0.0
      %950 = vmatpush1.msra.mxu0 %v300
      %951 = vmatprep.subr.mxu0 0.0
      %952 = vmatpush1.msra.mxu0 0.0
      %953 = vmatprep.subr.mxu0 0.0
      %954 = vmatpush1.msra.mxu0 0.0
      %955 = vmatprep.subr.mxu0 0.0
      %956 = vmatpush1.msra.mxu0 0.0
      %957 = vmatprep.subr.mxu0 0.0
      %958 = vmatpush1.msra.mxu0 0.0
      %959 = vmatprep.subr.mxu0 0.0
      %960 = vmatpush1.msra.mxu0 0.0
      %961 = vmatprep.subr.mxu0 0.0
      %962 = vmatpush1.msra.mxu0 0.0
      %963 = vmatprep.subr.mxu0 0.0
      %964 = vmatpush1.msra.mxu0 0.0
      %965 = vmatprep.subr.mxu0 0.0
      %966 = vmatpush1.msra.mxu0 0.0
      %967 = vmatprep.subr.mxu0 0.0
      %968 = vmatpush1.msra.mxu0 0.0
      %969 = vmatprep.subr.mxu0 0.0
      %970 = vmatpush1.msra.mxu0 0.0
      %971 = vmatprep.subr.mxu0 0.0
      %972 = vmatpush1.msra.mxu0 0.0
      %973 = vmatprep.subr.mxu0 0.0
      %974 = vmatpush1.msra.mxu0 0.0
      %975 = vmatprep.subr.mxu0 0.0
      %976 = vmatpush1.msra.mxu0 0.0
      %977 = vmatprep.subr.mxu0 0.0
      %978 = vmatpush1.msra.mxu0 0.0
      %979 = vmatprep.subr.mxu0 0.0
      %980 = vmatpush1.msra.mxu0 0.0
      %981 = vmatprep.subr.mxu0 0.0
      %982 = vmatpush1.msra.mxu0 0.0
      %983 = vmatprep.subr.mxu0 0.0
      %984 = vmatpush1.msra.mxu0 0.0
      %985 = vmatprep.subr.mxu0 0.0
      %986 = vmatpush1.msra.mxu0 0.0
      %987 = vmatprep.subr.mxu0 0.0
      %988 = vmatpush1.msra.mxu0 0.0
      %989 = vmatprep.subr.mxu0 0.0
      %990 = vmatpush1.msra.mxu0 0.0
      %991 = vmatprep.subr.mxu0 0.0
      %992 = vmatpush1.msra.mxu0 0.0
      %993 = vmatprep.subr.mxu0 0.0
      %994 = vmatpush1.msra.mxu0 0.0
      %995 = vmatprep.subr.mxu0 0.0
      %996 = vmatpush1.msra.mxu0 0.0
      %997 = vmatprep.subr.mxu0 0.0
      %998 = vmatpush1.msra.mxu0 0.0
      %999 = vmatprep.subr.mxu0 0.0
      %1000 = vmatpush1.msra.mxu0 0.0
      %1001 = vmatprep.subr.mxu0 0.0
      %1002 = vmatpush1.msra.mxu0 0.0
      %1003 = vmatprep.subr.mxu0 0.0
      %1004 = vmatpush1.msra.mxu0 0.0
      %1005 = vmatprep.subr.mxu0 0.0
      %1006 = vmatpush1.msra.mxu0 0.0
      %1007 = vmatprep.subr.mxu0 0.0
      %1008 = vmatpush1.msra.mxu0 0.0
      %1009 = vmatprep.subr.mxu0 0.0
      %1010 = vmatpush1.msra.mxu0 0.0
      %1011 = vmatprep.subr.mxu0 0.0
      %1012 = vmatpush1.msra.mxu0 0.0
      %1013 = vmatprep.mubr.f32.mxu0 0.0
      %1014 = vmatmul.mubr.f32.gmra.mrb[0].mxu0 %v947
      %v1015 = vpop.f32.mrb[0].mxu0
      %v1016 = vadd.f32 0.0, %v1015
      %v1017 = vpop.f32.mrb[0].mxu0
      %1018 = vdwg.mxu0
      %v1019 = vadd.f32 %v723, %v797
      %v1020 = vadd.f32 %v724, %v870
      %v1021 = vadd.f32 %v725, %v943
      %v1022 = vadd.f32 %v726, %v1016
      %1023 = vst.msk [vmem:[#allocation4] sm:$0xff] %vm301, %v1019
      %1024 = vst.msk [vmem:[#allocation4 + $0x8] sm:$0xff] %vm301, %v1020
      %1025 = vst.msk [vmem:[#allocation4 + $0x10] sm:$0xff] %vm301, %v1021
      %1026 = vst.msk [vmem:[#allocation4 + $0x18] sm:$0xff] %vm301, %v1022
      %1027 = vst.msk [vmem:[#allocation2] sm:$0xff] %vm694, %v622
      %1028 = vst.msk [vmem:[#allocation2 + $0x8] sm:$0xff] %vm694, %v623
      %1029 = vst.msk [vmem:[#allocation2 + $0x10] sm:$0xff] %vm694, %v624
      %1030 = vst.msk [vmem:[#allocation2 + $0x18] sm:$0xff] %vm694, %v625
      // Predicated region
      $region37: #{decoder_layer.9} parent=31 // pred_check
        %p1031 = pneg %p271
      $region38: #{decoder_layer.9} parent=31 // pred_check_branch
        %1033 = sbr.rel (%p1031) target = $region40
      $region39: #{decoder_layer.9} parent=31 // pred_region
        %v1034 = vld [vmem:[#allocation4] sm:$0xff]
        %v1035 = vld [vmem:[#allocation4 + $0x8] sm:$0xff]
        %v1036 = vld [vmem:[#allocation4 + $0x10] sm:$0xff]
        %v1037 = vld [vmem:[#allocation4 + $0x18] sm:$0xff]
        %v1038 = vld [vmem:[#allocation3] sm:$0xff]
        %v1039 = vld [vmem:[#allocation3 + $0x8] sm:$0xff]
        %v1040 = vld [vmem:[#allocation3 + $0x10] sm:$0xff]
        %v1041 = vld [vmem:[#allocation3 + $0x18] sm:$0xff]
        %1043 = vset.pattern.permute.xlu0 0
        %1044 = vperm.xlu0 %1043, %v1038
        %v1045 = vpop.permute.xlu0 %1044
        %1048 = vset.pattern.permute.xlu0 0
        %1049 = vperm.xlu0 %1048, %v1039
        %v1050 = vpop.permute.xlu0 %1049
        %1053 = vset.pattern.permute.xlu0 0
        %1054 = vperm.xlu0 %1053, %v1040
        %v1055 = vpop.permute.xlu0 %1054
        %1058 = vset.pattern.permute.xlu0 0
        %1059 = vperm.xlu0 %1058, %v1041
        %v1060 = vpop.permute.xlu0 %1059
        %v1062 = vrcp.pop %v1045
        %v1063 = vmul.f32 %v1034, %v1062
        %v1064 = vrcp.pop %v1050
        %v1065 = vmul.f32 %v1035, %v1064
        %v1066 = vrcp.pop %v1055
        %v1067 = vmul.f32 %v1036, %v1066
        %v1068 = vrcp.pop %v1060
        %v1069 = vmul.f32 %v1037, %v1068
        %1070 = vst.msk [vmem:[%s270] sm:$0xff] %vm301, %v1063
        %1071 = vst.msk [vmem:[%s270 + $0x8] sm:$0xff] %vm301, %v1065
        %1072 = vst.msk [vmem:[%s270 + $0x10] sm:$0xff] %vm301, %v1067
        %1073 = vst.msk [vmem:[%s270 + $0x18] sm:$0xff] %vm301, %v1069
      $region40: #{decoder_layer.9} parent=31 // pred_fallthru
        _
      %p1074 = scmp.lt.s32.totalorder %s19, 1
      %s1075 = scalar_select %p1074, %s19, 1
      %p1076 = scmp.lt.s32.totalorder %s20, 0
      %s1077 = scalar_select %p1076, %s20, 0
      %s1078 = smul.addr %s1075, 4
      %s1079 = sadd.s32 %s1077, %s1078
      %s1080 = smul.addr %s1079, 8
      %s1081 = scalar_lea.vmem %s3, %s1080
      // Predicated region
      $region41: #{decoder_layer.9} parent=31 // pred_check
        %p1082 = pneg %p137
      $region42: #{decoder_layer.9} parent=31 // pred_check_branch
        %1084 = sbr.rel (%p1082) target = $region44
      $region43: #{decoder_layer.9} parent=31 // pred_region
        _
      $region44: #{decoder_layer.9} parent=31 // pred_fallthru
        _
    $region32: #{decoder_layer.9} parent=5 // pred_fallthru
      _
    %p1085 = scmp.le.s32.totalorder 2, %s9
    // Predicated region
    $region45: #{decoder_layer.9} parent=5 // pred_check
      %p1086 = pneg %p1085
    $region46: #{decoder_layer.9} parent=5 // pred_check_branch
      %1088 = sbr.rel (%p1086) target = $region48
    $region47: #{decoder_layer.9} parent=5 // pred_region
      %s1089 = ssub.s32 %s9, 2
      // Predicated region
      $region49: #{decoder_layer.9} parent=47 // pred_check
        %p1090 = pneg %p143
      $region50: #{decoder_layer.9} parent=47 // pred_check_branch
        %1092 = sbr.rel (%p1090) target = $region52
      $region51: #{decoder_layer.9} parent=47 // pred_region
        %p1093 = scmp.lt.s32.totalorder %s22, 1
        %s1094 = scalar_select %p1093, %s22, 1
        %p1095 = scmp.lt.s32.totalorder %s23, 0
        %s1096 = scalar_select %p1095, %s23, 0
        %s1097 = smul.addr %s1094, 4
        %s1098 = sadd.s32 %s1096, %s1097
        %s1099 = smul.addr %s1098, 8
        %s1100 = scalar_lea.vmem %s3, %s1099
      $region52: #{decoder_layer.9} parent=47 // pred_fallthru
        _
    $region48: #{decoder_layer.9} parent=5 // pred_fallthru
      _
  $region6: #{decoder_layer.9} parent=0 // loop_footer
    %s13 = sadd.s32 1, %s9
  $region7: #{decoder_layer.9} parent=0 // loop_footer_branch
    %8 = sbr.rel target = $region3
  $region8: #{decoder_layer.9} parent=0 // loop_exit
    _

// kernel: decoder_layer.12
$region0: #{decoder_layer.12}
  #allocation0 [shape = 'u32[]', space=smem, size = 0x4, offset = 0x4, fixed_abs, tag = 'smem constant byte address 0x4 - core index']
  #allocation1 [shape = 'u32[144,128]{1,0:T(1,128)}', space=vmem, size = 0x12000, scoped, tag = 'internal scratch']
  %s0 = inlined_call_operand.vmem [shape: f32[32,32], index: 0, kind: input, shape index: {}]
  %s1 = inlined_call_operand.vmem [shape: f32[32,64], index: 1, kind: input, shape index: {}]
  %s2 = inlined_call_operand.vmem [shape: f32[1,64], index: 2, kind: input, shape index: {}]
  %s3 = inlined_call_operand.vmem [shape: f32[32,64], index: 3, kind: output, shape index: {}]
  %s4 = sld [smem:[#allocation0]]
  $region22: #{decoder_layer.12} parent=0
    _
  %s6 = ssub.s32 1, %s4
  %s7 = scalar_select 0, %s6, %s4
  // Predicated region
  $region2: #{decoder_layer.12} parent=0 // pred_check
    _
  $region3: #{decoder_layer.12} parent=0 // pred_check_branch
    %9 = sbr.rel (0) target = $region5
  $region4: #{decoder_layer.12} parent=0 // pred_region
    _
  $region5: #{decoder_layer.12} parent=0 // pred_fallthru
    _
  // Predicated region
  $region6: #{decoder_layer.12} parent=0 // pred_check
    _
  $region7: #{decoder_layer.12} parent=0 // pred_check_branch
    %11 = sbr.rel (0) target = $region9
  $region8: #{decoder_layer.12} parent=0 // pred_region
    _
  $region9: #{decoder_layer.12} parent=0 // pred_fallthru
    _
  // Predicated region
  $region10: #{decoder_layer.12} parent=0 // pred_check
    _
  $region11: #{decoder_layer.12} parent=0 // pred_check_branch
    %13 = sbr.rel (0) target = $region13
  $region12: #{decoder_layer.12} parent=0 // pred_region
    _
  $region13: #{decoder_layer.12} parent=0 // pred_fallthru
    _
  %v14 = vld [vmem:[%s0] sm:$0xff]
  %v15 = vld [vmem:[%s0 + $0x8] sm:$0xff]
  %v16 = vld [vmem:[%s0 + $0x10] sm:$0xff]
  %v17 = vld [vmem:[%s0 + $0x18] sm:$0xff]
  %v18 = vld [vmem:[%s1] sm:$0xff]
  %v19 = vld [vmem:[%s1 + $0x8] sm:$0xff]
  %v20 = vld [vmem:[%s1 + $0x10] sm:$0xff]
  %v21 = vld [vmem:[%s1 + $0x18] sm:$0xff]
  %v22 = vld [vmem:[%s2] sm:$0x1]
  %v24 = vlaneseq
  %v25 = vshrl.u32 %v24, 7
  %v26 = vsub.s32 0, %v25
  %v27 = vrot.slane %v22, %v26
  %vm29 = vcmask 261120
  %v31 = vsel %vm29, %v14, 0
  %v34 = vsel %vm29, %v15, 0
  %v37 = vsel %vm29, %v16, 0
  %v40 = vsel %vm29, %v17, 0
  %42 = vmatprep.subr.mxu0 0.0
  %43 = vmatpush1.msra.mxu0 %v18
  %44 = vmatprep.subr.mxu0 0.0
  %45 = vmatpush1.msra.mxu0 %v19
  %46 = vmatprep.subr.mxu0 0.0
  %47 = vmatpush1.msra.mxu0 %v20
  %48 = vmatprep.subr.mxu0 0.0
  %49 = vmatpush1.msra.mxu0 %v21
  %50 = vmatprep.subr.mxu0 0.0
  %51 = vmatpush1.msra.mxu0 0.0
  %52 = vmatprep.subr.mxu0 0.0
  %53 = vmatpush1.msra.mxu0 0.0
  %54 = vmatprep.subr.mxu0 0.0
  %55 = vmatpush1.msra.mxu0 0.0
  %56 = vmatprep.subr.mxu0 0.0
  %57 = vmatpush1.msra.mxu0 0.0
  %58 = vmatprep.subr.mxu0 0.0
  %59 = vmatpush1.msra.mxu0 0.0
  %60 = vmatprep.subr.mxu0 0.0
  %61 = vmatpush1.msra.mxu0 0.0
  %62 = vmatprep.subr.mxu0 0.0
  %63 = vmatpush1.msra.mxu0 0.0
  %64 = vmatprep.subr.mxu0 0.0
  %65 = vmatpush1.msra.mxu0 0.0
  %66 = vmatprep.subr.mxu0 0.0
  %67 = vmatpush1.msra.mxu0 0.0
  %68 = vmatprep.subr.mxu0 0.0
  %69 = vmatpush1.msra.mxu0 0.0
  %70 = vmatprep.subr.mxu0 0.0
  %71 = vmatpush1.msra.mxu0 0.0
  %72 = vmatprep.subr.mxu0 0.0
  %73 = vmatpush1.msra.mxu0 0.0
  %74 = vmatprep.subr.mxu0 0.0
  %75 = vmatpush1.msra.mxu0 0.0
  %76 = vmatprep.subr.mxu0 0.0
  %77 = vmatpush1.msra.mxu0 0.0
  %78 = vmatprep.subr.mxu0 0.0
  %79 = vmatpush1.msra.mxu0 0.0
  %80 = vmatprep.subr.mxu0 0.0
  %81 = vmatpush1.msra.mxu0 0.0
  %82 = vmatprep.subr.mxu0 0.0
  %83 = vmatpush1.msra.mxu0 0.0
  %84 = vmatprep.subr.mxu0 0.0
  %85 = vmatpush1.msra.mxu0 0.0
  %86 = vmatprep.subr.mxu0 0.0
  %87 = vmatpush1.msra.mxu0 0.0
  %88 = vmatprep.subr.mxu0 0.0
  %89 = vmatpush1.msra.mxu0 0.0
  %90 = vmatprep.subr.mxu0 0.0
  %91 = vmatpush1.msra.mxu0 0.0
  %92 = vmatprep.subr.mxu0 0.0
  %93 = vmatpush1.msra.mxu0 0.0
  %94 = vmatprep.subr.mxu0 0.0
  %95 = vmatpush1.msra.mxu0 0.0
  %96 = vmatprep.subr.mxu0 0.0
  %97 = vmatpush1.msra.mxu0 0.0
  %98 = vmatprep.subr.mxu0 0.0
  %99 = vmatpush1.msra.mxu0 0.0
  %100 = vmatprep.subr.mxu0 0.0
  %101 = vmatpush1.msra.mxu0 0.0
  %102 = vmatprep.subr.mxu0 0.0
  %103 = vmatpush1.msra.mxu0 0.0
  %104 = vmatprep.subr.mxu0 0.0
  %105 = vmatpush1.msra.mxu0 0.0
  %106 = vmatprep.mubr.f32.mxu0 0.0
  %107 = vmatmul.mubr.f32.gmra.mrb[0].mxu0 %v31
  %v108 = vpop.f32.mrb[0].mxu0
  %v109 = vadd.f32 %v27, %v108
  %v110 = vpop.f32.mrb[0].mxu0
  %111 = vmatprep.mubr.f32.mxu0 0.0
  %112 = vmatmul.mubr.f32.gmra.mrb[0].mxu0 %v34
  %v113 = vpop.f32.mrb[0].mxu0
  %v114 = vadd.f32 %v27, %v113
  %v115 = vpop.f32.mrb[0].mxu0
  %116 = vmatprep.mubr.f32.mxu0 0.0
  %117 = vmatmul.mubr.f32.gmra.mrb[0].mxu0 %v37
  %v118 = vpop.f32.mrb[0].mxu0
  %v119 = vadd.f32 %v27, %v118
  %v120 = vpop.f32.mrb[0].mxu0
  %121 = vmatprep.mubr.f32.mxu0 0.0
  %122 = vmatmul.mubr.f32.gmra.mrb[0].mxu0 %v40
  %v123 = vpop.f32.mrb[0].mxu0
  %v124 = vadd.f32 %v27, %v123
  %v125 = vpop.f32.mrb[0].mxu0
  %126 = vdwg.mxu0
  %vm127 = vcmask 523264
  %128 = vst.msk [vmem:[%s3] sm:$0xff] %vm127, %v109
  %129 = vst.msk [vmem:[%s3 + $0x8] sm:$0xff] %vm127, %v114
  %130 = vst.msk [vmem:[%s3 + $0x10] sm:$0xff] %vm127, %v119
  %131 = vst.msk [vmem:[%s3 + $0x18] sm:$0xff] %vm127, %v124
  // Predicated region
  $region14: #{decoder_layer.12} parent=0 // pred_check
    _
  $region15: #{decoder_layer.12} parent=0 // pred_check_branch
    %133 = sbr.rel (0) target = $region17
  $region16: #{decoder_layer.12} parent=0 // pred_region
    _
  $region17: #{decoder_layer.12} parent=0 // pred_fallthru
    _
  // Predicated region
  $region18: #{decoder_layer.12} parent=0 // pred_check
    _
  $region19: #{decoder_layer.12} parent=0 // pred_check_branch
    %135 = sbr.rel (0) target = $region21
  $region20: #{decoder_layer.12} parent=0 // pred_region
    _
  $region21: #{decoder_layer.12} parent=0 // pred_fallthru
    _

// kernel: decoder_layer.13
$region0: #{decoder_layer.13}
  #allocation0 [shape = 'u32[]', space=smem, size = 0x4, offset = 0x4, fixed_abs, tag = 'smem constant byte address 0x4 - core index']
  #allocation1 [shape = 'u32[144,128]{1,0:T(1,128)}', space=vmem, size = 0x12000, scoped, tag = 'internal scratch']
  #allocation2 [shape = 'f32[4,8,1]{2,1,0:T(8,128)}', space=vmem, size = 0x4000, scoped, tag = 'scratch operand']
  #allocation3 [shape = 'f32[4,8,1]{2,1,0:T(8,128)}', space=vmem, size = 0x4000, scoped, tag = 'scratch operand']
  #allocation4 [shape = 'f32[4,8,8]{2,1,0:T(8,128)}', space=vmem, size = 0x4000, scoped, tag = 'scratch operand']
  %s0 = inlined_call_operand.vmem [shape: f32[2,4,8,8], index: 0, kind: input, shape index: {}]
  %s1 = inlined_call_operand.vmem [shape: f32[2,4,16,8], index: 1, kind: input, shape index: {}]
  %s2 = inlined_call_operand.vmem [shape: f32[2,4,16,8], index: 2, kind: input, shape index: {}]
  %s3 = inlined_call_operand.vmem [shape: f32[2,4,8,8], index: 3, kind: output, shape index: {}]
  %s4 = sld [smem:[#allocation0]]
  $region53: #{decoder_layer.13} parent=0
    _
  %s6 = ssub.s32 1, %s4
  %s7 = scalar_select 0, %s6, %s4
  loop: start=0, step=1, limit=4
  $region2: #{decoder_layer.13} parent=0 // loop_pre_header
    _
  $region3: #{decoder_layer.13} parent=0 // loop_header
    %s9 = sphi 0, %s13
    %p10 = scmp.ge.s32.totalorder %s9, 4
    %s16 = sphi 0, %s35
    %s17 = sphi 0, %s31
    %s18 = sphi 0, %s27
    %s19 = sphi 0, %s16
    %s20 = sphi 0, %s17
    %s21 = sphi 0, %s18
    %s22 = sphi 0, %s19
    %s23 = sphi 0, %s20
    %s24 = sphi 0, %s21
    %s40 = sphi 0, %s42
    %s43 = sphi 0, %s40
    %s44 = sphi 0, %s43
    %s60 = sphi 0, %s44
    %s68 = sphi 0, %s70
    %s71 = sphi 0, %s68
    %s72 = sphi 0, %s71
    %s88 = sphi 0, %s72
    %s96 = sphi 0, %s98
    %s99 = sphi 0, %s96
    %s100 = sphi 0, %s99
    %s116 = sphi 0, %s100
    %s124 = sphi 0, %s126
    %s127 = sphi 0, %s124
    %s128 = sphi 0, %s127
    %s144 = sphi 0, %s128
  $region4: #{decoder_layer.13} parent=0 // loop_header_branch
    %12 = sbr.rel (%p10) target = $region8
  $region5: #{decoder_layer.13} parent=0 // loop_body
    %s14 = ssub.s32 %s9, 1
    %s15 = ssub.s32 %s9, 2
    %s25 = sadd.s32 1, %s18
    %p26 = scmp.ge.s32.totalorder %s25, 1
    %s27 = scalar_select %p26, 0, %s25
    %s28 = sadd.s32 1, %s17
    %s29 = scalar_select %p26, %s28, %s17
    %p30 = scmp.ge.s32.totalorder %s29, 1
    %s31 = scalar_select %p30, 0, %s29
    %s32 = sadd.s32 1, %s16
    %s33 = scalar_select %p30, %s32, %s16
    %p34 = scmp.ge.s32.totalorder %s33, 2
    %s35 = scalar_select %p34, 0, %s33
    %s36 = ssub.s32 %s16, %s35
    %s37 = ssub.s32 %s17, %s31
    %s38 = sor.u32 %s36, %s37
    %p39 = scmp.eq.s32.totalorder %s38, 0
    %s41 = sadd.s32 %s40, 1
    %s42 = scalar_select %p39, %s40, %s41
    %p45 = pneg %p39
    %p46 = scmp.eq.s32.totalorder %s9, 1
    %p47 = por %p45, %p46
    %p48 = scmp.ne.s32.totalorder %s40, %s43
    %p49 = scmp.eq.s32.totalorder %s9, 0
    %p50 = por %p48, %p49
    %p51 = scmp.ne.s32.totalorder %s40, %s43
    %p52 = scmp.eq.s32.totalorder %s14, 1
    %p53 = por %p51, %p52
    %p54 = scmp.ne.s32.totalorder %s43, %s44
    %p55 = scmp.eq.s32.totalorder %s14, 0
    %p56 = por %p54, %p55
    %p57 = scmp.ne.s32.totalorder %s43, %s44
    %p58 = scmp.eq.s32.totalorder %s15, 1
    %p59 = por %p57, %p58
    %p61 = scmp.ne.s32.totalorder %s44, %s60
    %p62 = scmp.eq.s32.totalorder %s15, 0
    %p63 = por %p61, %p62
    %s64 = ssub.s32 %s16, %s35
    %s65 = ssub.s32 %s18, %s27
    %s66 = sor.u32 %s64, %s65
    %p67 = scmp.eq.s32.totalorder %s66, 0
    %s69 = sadd.s32 %s68, 1
    %s70 = scalar_select %p67, %s68, %s69
    %p73 = pneg %p67
    %p74 = scmp.eq.s32.totalorder %s9, 1
    %p75 = por %p73, %p74
    %p76 = scmp.ne.s32.totalorder %s68, %s71
    %p77 = scmp.eq.s32.totalorder %s9, 0
    %p78 = por %p76, %p77
    %p79 = scmp.ne.s32.totalorder %s68, %s71
    %p80 = scmp.eq.s32.totalorder %s14, 1
    %p81 = por %p79, %p80
    %p82 = scmp.ne.s32.totalorder %s71, %s72
    %p83 = scmp.eq.s32.totalorder %s14, 0
    %p84 = por %p82, %p83
    %p85 = scmp.ne.s32.totalorder %s71, %s72
    %p86 = scmp.eq.s32.totalorder %s15, 1
    %p87 = por %p85, %p86
    %p89 = scmp.ne.s32.totalorder %s72, %s88
    %p90 = scmp.eq.s32.totalorder %s15, 0
    %p91 = por %p89, %p90
    %s92 = ssub.s32 %s16, %s35
    %s93 = ssub.s32 %s18, %s27
    %s94 = sor.u32 %s92, %s93
    %p95 = scmp.eq.s32.totalorder %s94, 0
    %s97 = sadd.s32 %s96, 1
    %s98 = scalar_select %p95, %s96, %s97
    %p101 = pneg %p95
    %p102 = scmp.eq.s32.totalorder %s9, 1
    %p103 = por %p101, %p102
    %p104 = scmp.ne.s32.totalorder %s96, %s99
    %p105 = scmp.eq.s32.totalorder %s9, 0
    %p106 = por %p104, %p105
    %p107 = scmp.ne.s32.totalorder %s96, %s99
    %p108 = scmp.eq.s32.totalorder %s14, 1
    %p109 = por %p107, %p108
    %p110 = scmp.ne.s32.totalorder %s99, %s100
    %p111 = scmp.eq.s32.totalorder %s14, 0
    %p112 = por %p110, %p111
    %p113 = scmp.ne.s32.totalorder %s99, %s100
    %p114 = scmp.eq.s32.totalorder %s15, 1
    %p115 = por %p113, %p114
    %p117 = scmp.ne.s32.totalorder %s100, %s116
    %p118 = scmp.eq.s32.totalorder %s15, 0
    %p119 = por %p117, %p118
    %s120 = ssub.s32 %s16, %s35
    %s121 = ssub.s32 %s17, %s31
    %s122 = sor.u32 %s120, %s121
    %p123 = scmp.eq.s32.totalorder %s122, 0
    %s125 = sadd.s32 %s124, 1
    %s126 = scalar_select %p123, %s124, %s125
    %p129 = pneg %p123
    %p130 = scmp.eq.s32.totalorder %s9, 1
    %p131 = por %p129, %p130
    %p132 = scmp.ne.s32.totalorder %s124, %s127
    %p133 = scmp.eq.s32.totalorder %s9, 0
    %p134 = por %p132, %p133
    %p135 = scmp.ne.s32.totalorder %s124, %s127
    %p136 = scmp.eq.s32.totalorder %s14, 1
    %p137 = por %p135, %p136
    %p138 = scmp.ne.s32.totalorder %s127, %s128
    %p139 = scmp.eq.s32.totalorder %s14, 0
    %p140 = por %p138, %p139
    %p141 = scmp.ne.s32.totalorder %s127, %s128
    %p142 = scmp.eq.s32.totalorder %s15, 1
    %p143 = por %p141, %p142
    %p145 = scmp.ne.s32.totalorder %s128, %s144
    %p146 = scmp.eq.s32.totalorder %s15, 0
    %p147 = por %p145, %p146
    %p148 = scmp.le.s32.totalorder 1, %s9
    %p149 = scmp.lt.s32.totalorder %s9, 3
    %p150 = pnand %p148, %p149
    %p151 = pneg %p150
    // Predicated region
    $region9: #{decoder_layer.13} parent=5 // pred_check
      _
    $region10: #{decoder_layer.13} parent=5 // pred_check_branch
      %153 = sbr.rel (%p150) target = $region12
    $region11: #{decoder_layer.13} parent=5 // pred_region
      %s154 = ssub.s32 %s9, 1
    $region12: #{decoder_layer.13} parent=5 // pred_fallthru
      _
    %p155 = scmp.lt.s32.totalorder %s9, 2
    // Predicated region
    $region13: #{decoder_layer.13} parent=5 // pred_check
      %p156 = pneg %p155
    $region14: #{decoder_layer.13} parent=5 // pred_check_branch
      %158 = sbr.rel (%p156) target = $region16
    $region15: #{decoder_layer.13} parent=5 // pred_region
      // Predicated region
      $region17: #{decoder_layer.13} parent=15 // pred_check
        %p159 = pneg %p50
      $region18: #{decoder_layer.13} parent=15 // pred_check_branch
        %161 = sbr.rel (%p159) target = $region20
      $region19: #{decoder_layer.13} parent=15 // pred_region
        %p162 = scmp.lt.s32.totalorder %s16, 1
        %s163 = scalar_select %p162, %s16, 1
        %p164 = scmp.lt.s32.totalorder %s17, 0
        %s165 = scalar_select %p164, %s17, 0
        %s166 = smul.addr %s163, 4
        %s167 = sadd.s32 %s165, %s166
        %s168 = smul.addr %s167, 8
        %s169 = scalar_lea.vmem %s0, %s168
      $region20: #{decoder_layer.13} parent=15 // pred_fallthru
        _
      // Predicated region
      $region21: #{decoder_layer.13} parent=15 // pred_check
        %p170 = pneg %p78
      $region22: #{decoder_layer.13} parent=15 // pred_check_branch
        %172 = sbr.rel (%p170) target = $region24
      $region23: #{decoder_layer.13} parent=15 // pred_region
        %s173 = smul.u32 2, %s18
        %p174 = scmp.lt.s32.totalorder %s16, 1
        %s175 = scalar_select %p174, %s16, 1
        %p176 = scmp.lt.s32.totalorder %s173, 1
        %s177 = scalar_select %p176, %s173, 1
        %s178 = smul.addr %s175, 8
        %s179 = sadd.s32 %s177, %s178
        %s180 = smul.addr %s179, 8
        %s181 = scalar_lea.vmem %s1, %s180
        %s182 = smul.u32 2, %s18
      $region24: #{decoder_layer.13} parent=15 // pred_fallthru
        _
      // Predicated region
      $region25: #{decoder_layer.13} parent=15 // pred_check
        %p183 = pneg %p106
      $region26: #{decoder_layer.13} parent=15 // pred_check_branch
        %185 = sbr.rel (%p183) target = $region28
      $region27: #{decoder_layer.13} parent=15 // pred_region
        %s186 = smul.u32 2, %s18
        %p187 = scmp.lt.s32.totalorder %s16, 1
        %s188 = scalar_select %p187, %s16, 1
        %p189 = scmp.lt.s32.totalorder %s186, 1
        %s190 = scalar_select %p189, %s186, 1
        %s191 = smul.addr %s188, 8
        %s192 = sadd.s32 %s190, %s191
        %s193 = smul.addr %s192, 8
        %s194 = scalar_lea.vmem %s2, %s193
        %s195 = smul.u32 2, %s18
      $region28: #{decoder_layer.13} parent=15 // pred_fallthru
        _
    $region16: #{decoder_layer.13} parent=5 // pred_fallthru
      _
    %p196 = scmp.le.s32.totalorder 1, %s9
    %p197 = scmp.lt.s32.totalorder %s9, 3
    %p198 = pnand %p196, %p197
    %p199 = pneg %p198
    // Predicated region
    $region29: #{decoder_layer.13} parent=5 // pred_check
      _
    $region30: #{decoder_layer.13} parent=5 // pred_check_branch
      %201 = sbr.rel (%p198) target = $region32
    $region31: #{decoder_layer.13} parent=5 // pred_region
      %s202 = ssub.s32 %s9, 1
      %p203 = scmp.lt.s32.totalorder %s19, 1
      %s204 = scalar_select %p203, %s19, 1
      %p205 = scmp.lt.s32.totalorder %s20, 0
      %s206 = scalar_select %p205, %s20, 0
      %s207 = smul.addr %s204, 4
      %s208 = sadd.s32 %s206, %s207
      %s209 = smul.addr %s208, 8
      %s210 = scalar_lea.vmem %s0, %s209
      %p211 = pneg %p56
      %p212 = pneg %p53
      %s213 = smul.u32 2, %s21
      %p214 = scmp.lt.s32.totalorder %s19, 1
      %s215 = scalar_select %p214, %s19, 1
      %p216 = scmp.lt.s32.totalorder %s213, 1
      %s217 = scalar_select %p216, %s213, 1
      %s218 = smul.addr %s215, 8
      %s219 = sadd.s32 %s217, %s218
      %s220 = smul.addr %s219, 8
      %s221 = scalar_lea.vmem %s1, %s220
      %p222 = pneg %p84
      %p223 = pneg %p81
      %s224 = smul.u32 2, %s21
      %p225 = scmp.lt.s32.totalorder %s19, 1
      %s226 = scalar_select %p225, %s19, 1
      %p227 = scmp.lt.s32.totalorder %s224, 1
      %s228 = scalar_select %p227, %s224, 1
      %s229 = smul.addr %s226, 8
      %s230 = sadd.s32 %s228, %s229
      %s231 = smul.addr %s230, 8
      %s232 = scalar_lea.vmem %s2, %s231
      %p233 = pneg %p112
      %p234 = pneg %p109
      %p235 = pneg %p140
      %p236 = pneg %p137
      %p237 = scmp.lt.s32.totalorder %s19, 1
      %s238 = scalar_select %p237, %s19, 1
      %p239 = scmp.lt.s32.totalorder %s20, 0
      %s240 = scalar_select %p239, %s20, 0
      %s241 = smul.addr %s238, 4
      %s242 = sadd.s32 %s240, %s241
      %s243 = smul.addr %s242, 8
      %s244 = scalar_lea.vmem %s3, %s243
      %p245 = scmp.lt.s32.totalorder %s19, 1
      %s246 = scalar_select %p245, %s19, 1
      %p247 = scmp.lt.s32.totalorder %s20, 0
      %s248 = scalar_select %p247, %s20, 0
      %s249 = smul.addr %s246, 4
      %s250 = sadd.s32 %s248, %s249
      %s251 = smul.addr %s250, 8
      %s252 = scalar_lea.vmem %s0, %s251
      %s253 = smul.u32 2, %s21
      %p254 = scmp.lt.s32.totalorder %s19, 1
      %s255 = scalar_select %p254, %s19, 1
      %p256 = scmp.lt.s32.totalorder %s253, 1
      %s257 = scalar_select %p256, %s253, 1
      %s258 = smul.addr %s255, 8
      %s259 = sadd.s32 %s257, %s258
      %s260 = smul.addr %s259, 8
      %s261 = scalar_lea.vmem %s1, %s260
      %s262 = smul.u32 2, %s21
      %s263 = smul.u32 2, %s21
      %p264 = scmp.lt.s32.totalorder %s19, 1
      %s265 = scalar_select %p264, %s19, 1
      %p266 = scmp.lt.s32.totalorder %s263, 1
      %s267 = scalar_select %p266, %s263, 1
      %s268 = smul.addr %s265, 8
      %s269 = sadd.s32 %s267, %s268
      %s270 = smul.addr %s269, 8
      %s271 = scalar_lea.vmem %s2, %s270
      %s272 = smul.u32 2, %s21
      %p273 = scmp.lt.s32.totalorder %s19, 1
      %s274 = scalar_select %p273, %s19, 1
      %p275 = scmp.lt.s32.totalorder %s20, 0
      %s276 = scalar_select %p275, %s20, 0
      %s277 = smul.addr %s274, 4
      %s278 = sadd.s32 %s276, %s277
      %s279 = smul.addr %s278, 8
      %s280 = scalar_lea.vmem %s3, %s279
      %p281 = scmp.eq.s32.totalorder %s21, 0
      // Predicated region
      $region33: #{decoder_layer.13} parent=31 // pred_check
        %p282 = pneg %p281
      $region34: #{decoder_layer.13} parent=31 // pred_check_branch
        %284 = sbr.rel (%p282) target = $region36
      $region35: #{decoder_layer.13} parent=31 // pred_region
        %vm285 = vcmask 7168
        %286 = vst.msk [vmem:[#allocation2] sm:$0xff] %vm285, -inf
        %287 = vst.msk [vmem:[#allocation2 + $0x8] sm:$0xff] %vm285, -inf
        %288 = vst.msk [vmem:[#allocation2 + $0x10] sm:$0xff] %vm285, -inf
        %289 = vst.msk [vmem:[#allocation2 + $0x18] sm:$0xff] %vm285, -inf
        %290 = vst.msk [vmem:[#allocation3] sm:$0xff] %vm285, 0.0
        %291 = vst.msk [vmem:[#allocation3 + $0x8] sm:$0xff] %vm285, 0.0
        %292 = vst.msk [vmem:[#allocation3 + $0x10] sm:$0xff] %vm285, 0.0
        %293 = vst.msk [vmem:[#allocation3 + $0x18] sm:$0xff] %vm285, 0.0
        %vm294 = vcmask 64512
        %295 = vst.msk [vmem:[#allocation4] sm:$0xff] %vm294, 0.0
        %296 = vst.msk [vmem:[#allocation4 + $0x8] sm:$0xff] %vm294, 0.0
        %297 = vst.msk [vmem:[#allocation4 + $0x10] sm:$0xff] %vm294, 0.0
        %298 = vst.msk [vmem:[#allocation4 + $0x18] sm:$0xff] %vm294, 0.0
      $region36: #{decoder_layer.13} parent=31 // pred_fallthru
        _
      %v299 = vld [vmem:[%s252] sm:$0xff]
      %v300 = vld [vmem:[%s252 + $0x8] sm:$0xff]
      %v301 = vld [vmem:[%s252 + $0x10] sm:$0xff]
      %v302 = vld [vmem:[%s252 + $0x18] sm:$0xff]
      %v303 = vld [vmem:[%s261] sm:$0xff]
      %v304 = vld [vmem:[%s261 + $0x8] sm:$0xff]
      %v305 = vld [vmem:[%s261 + $0x10] sm:$0xff]
      %v306 = vld [vmem:[%s261 + $0x18] sm:$0xff]
      %v307 = vld [vmem:[%s261 + $0x20] sm:$0xff]
      %v308 = vld [vmem:[%s261 + $0x28] sm:$0xff]
      %v309 = vld [vmem:[%s261 + $0x30] sm:$0xff]
      %v310 = vld [vmem:[%s261 + $0x38] sm:$0xff]
      %v311 = vld [vmem:[%s271] sm:$0xff]
      %v312 = vld [vmem:[%s271 + $0x8] sm:$0xff]
      %v313 = vld [vmem:[%s271 + $0x10] sm:$0xff]
      %v314 = vld [vmem:[%s271 + $0x18] sm:$0xff]
      %v315 = vld [vmem:[%s271 + $0x20] sm:$0xff]
      %v316 = vld [vmem:[%s271 + $0x28] sm:$0xff]
      %v317 = vld [vmem:[%s271 + $0x30] sm:$0xff]
      %v318 = vld [vmem:[%s271 + $0x38] sm:$0xff]
      %vm319 = vcmask 64512
      %v321 = vsel %vm319, %v299, 0
      %v324 = vsel %vm319, %v303, 0
      %v327 = vsel %vm319, %v304, 0
      %329 = vmatprep.subr.mxu0 0.0
      %330 = vmatpush1.xpose.msra.mxu0 %v324
      %331 = vmatprep.subr.mxu0 0.0
      %332 = vmatpush1.xpose.msra.mxu0 %v327
      %333 = vmatprep.subr.mxu0 0.0
      %334 = vmatpush1.xpose.msra.mxu0 0.0
      %335 = vmatprep.subr.mxu0 0.0
      %336 = vmatpush1.xpose.msra.mxu0 0.0
      %337 = vmatprep.subr.mxu0 0.0
      %338 = vmatpush1.xpose.msra.mxu0 0.0
      %339 = vmatprep.subr.mxu0 0.0
      %340 = vmatpush1.xpose.msra.mxu0 0.0
      %341 = vmatprep.subr.mxu0 0.0
      %342 = vmatpush1.xpose.msra.mxu0 0.0
      %343 = vmatprep.subr.mxu0 0.0
      %344 = vmatpush1.xpose.msra.mxu0 0.0
      %345 = vmatprep.subr.mxu0 0.0
      %346 = vmatpush1.xpose.msra.mxu0 0.0
      %347 = vmatprep.subr.mxu0 0.0
      %348 = vmatpush1.xpose.msra.mxu0 0.0
      %349 = vmatprep.subr.mxu0 0.0
      %350 = vmatpush1.xpose.msra.mxu0 0.0
      %351 = vmatprep.subr.mxu0 0.0
      %352 = vmatpush1.xpose.msra.mxu0 0.0
      %353 = vmatprep.subr.mxu0 0.0
      %354 = vmatpush1.xpose.msra.mxu0 0.0
      %355 = vmatprep.subr.mxu0 0.0
      %356 = vmatpush1.xpose.msra.mxu0 0.0
      %357 = vmatprep.subr.mxu0 0.0
      %358 = vmatpush1.xpose.msra.mxu0 0.0
      %359 = vmatprep.subr.mxu0 0.0
      %360 = vmatpush1.xpose.msra.mxu0 0.0
      %361 = vmatprep.subr.mxu0 0.0
      %362 = vmatpush1.xpose.msra.mxu0 0.0
      %363 = vmatprep.subr.mxu0 0.0
      %364 = vmatpush1.xpose.msra.mxu0 0.0
      %365 = vmatprep.subr.mxu0 0.0
      %366 = vmatpush1.xpose.msra.mxu0 0.0
      %367 = vmatprep.subr.mxu0 0.0
      %368 = vmatpush1.xpose.msra.mxu0 0.0
      %369 = vmatprep.subr.mxu0 0.0
      %370 = vmatpush1.xpose.msra.mxu0 0.0
      %371 = vmatprep.subr.mxu0 0.0
      %372 = vmatpush1.xpose.msra.mxu0 0.0
      %373 = vmatprep.subr.mxu0 0.0
      %374 = vmatpush1.xpose.msra.mxu0 0.0
      %375 = vmatprep.subr.mxu0 0.0
      %376 = vmatpush1.xpose.msra.mxu0 0.0
      %377 = vmatprep.subr.mxu0 0.0
      %378 = vmatpush1.xpose.msra.mxu0 0.0
      %379 = vmatprep.subr.mxu0 0.0
      %380 = vmatpush1.xpose.msra.mxu0 0.0
      %381 = vmatprep.subr.mxu0 0.0
      %382 = vmatpush1.xpose.msra.mxu0 0.0
      %383 = vmatprep.subr.mxu0 0.0
      %384 = vmatpush1.xpose.msra.mxu0 0.0
      %385 = vmatprep.subr.mxu0 0.0
      %386 = vmatpush1.xpose.msra.mxu0 0.0
      %387 = vmatprep.subr.mxu0 0.0
      %388 = vmatpush1.xpose.msra.mxu0 0.0
      %389 = vmatprep.subr.mxu0 0.0
      %390 = vmatpush1.xpose.msra.mxu0 0.0
      %391 = vmatprep.subr.mxu0 0.0
      %392 = vmatpush1.xpose.msra.mxu0 0.0
      %393 = vmatprep.mubr.f32.mxu0 0.0
      %394 = vmatmul.mubr.f32.gmra.mrb[0].mxu0 %v321
      %v395 = vpop.f32.mrb[0].mxu0
      %v396 = vadd.f32 0.0, %v395
      %v397 = vpop.f32.mrb[0].mxu0
      %398 = vdwg.mxu0
      %v400 = vsel %vm319, %v300, 0
      %v403 = vsel %vm319, %v305, 0
      %v406 = vsel %vm319, %v306, 0
      %408 = vmatprep.subr.mxu0 0.0
      %409 = vmatpush1.xpose.msra.mxu0 %v403
      %410 = vmatprep.subr.mxu0 0.0
      %411 = vmatpush1.xpose.msra.mxu0 %v406
      %412 = vmatprep.subr.mxu0 0.0
      %413 = vmatpush1.xpose.msra.mxu0 0.0
      %414 = vmatprep.subr.mxu0 0.0
      %415 = vmatpush1.xpose.msra.mxu0 0.0
      %416 = vmatprep.subr.mxu0 0.0
      %417 = vmatpush1.xpose.msra.mxu0 0.0
      %418 = vmatprep.subr.mxu0 0.0
      %419 = vmatpush1.xpose.msra.mxu0 0.0
      %420 = vmatprep.subr.mxu0 0.0
      %421 = vmatpush1.xpose.msra.mxu0 0.0
      %422 = vmatprep.subr.mxu0 0.0
      %423 = vmatpush1.xpose.msra.mxu0 0.0
      %424 = vmatprep.subr.mxu0 0.0
      %425 = vmatpush1.xpose.msra.mxu0 0.0
      %426 = vmatprep.subr.mxu0 0.0
      %427 = vmatpush1.xpose.msra.mxu0 0.0
      %428 = vmatprep.subr.mxu0 0.0
      %429 = vmatpush1.xpose.msra.mxu0 0.0
      %430 = vmatprep.subr.mxu0 0.0
      %431 = vmatpush1.xpose.msra.mxu0 0.0
      %432 = vmatprep.subr.mxu0 0.0
      %433 = vmatpush1.xpose.msra.mxu0 0.0
      %434 = vmatprep.subr.mxu0 0.0
      %435 = vmatpush1.xpose.msra.mxu0 0.0
      %436 = vmatprep.subr.mxu0 0.0
      %437 = vmatpush1.xpose.msra.mxu0 0.0
      %438 = vmatprep.subr.mxu0 0.0
      %439 = vmatpush1.xpose.msra.mxu0 0.0
      %440 = vmatprep.subr.mxu0 0.0
      %441 = vmatpush1.xpose.msra.mxu0 0.0
      %442 = vmatprep.subr.mxu0 0.0
      %443 = vmatpush1.xpose.msra.mxu0 0.0
      %444 = vmatprep.subr.mxu0 0.0
      %445 = vmatpush1.xpose.msra.mxu0 0.0
      %446 = vmatprep.subr.mxu0 0.0
      %447 = vmatpush1.xpose.msra.mxu0 0.0
      %448 = vmatprep.subr.mxu0 0.0
      %449 = vmatpush1.xpose.msra.mxu0 0.0
      %450 = vmatprep.subr.mxu0 0.0
      %451 = vmatpush1.xpose.msra.mxu0 0.0
      %452 = vmatprep.subr.mxu0 0.0
      %453 = vmatpush1.xpose.msra.mxu0 0.0
      %454 = vmatprep.subr.mxu0 0.0
      %455 = vmatpush1.xpose.msra.mxu0 0.0
      %456 = vmatprep.subr.mxu0 0.0
      %457 = vmatpush1.xpose.msra.mxu0 0.0
      %458 = vmatprep.subr.mxu0 0.0
      %459 = vmatpush1.xpose.msra.mxu0 0.0
      %460 = vmatprep.subr.mxu0 0.0
      %461 = vmatpush1.xpose.msra.mxu0 0.0
      %462 = vmatprep.subr.mxu0 0.0
      %463 = vmatpush1.xpose.msra.mxu0 0.0
      %464 = vmatprep.subr.mxu0 0.0
      %465 = vmatpush1.xpose.msra.mxu0 0.0
      %466 = vmatprep.subr.mxu0 0.0
      %467 = vmatpush1.xpose.msra.mxu0 0.0
      %468 = vmatprep.subr.mxu0 0.0
      %469 = vmatpush1.xpose.msra.mxu0 0.0
      %470 = vmatprep.subr.mxu0 0.0
      %471 = vmatpush1.xpose.msra.mxu0 0.0
      %472 = vmatprep.mubr.f32.mxu0 0.0
      %473 = vmatmul.mubr.f32.gmra.mrb[0].mxu0 %v400
      %v474 = vpop.f32.mrb[0].mxu0
      %v475 = vadd.f32 0.0, %v474
      %v476 = vpop.f32.mrb[0].mxu0
      %477 = vdwg.mxu0
      %v479 = vsel %vm319, %v301, 0
      %v482 = vsel %vm319, %v307, 0
      %v485 = vsel %vm319, %v308, 0
      %487 = vmatprep.subr.mxu0 0.0
      %488 = vmatpush1.xpose.msra.mxu0 %v482
      %489 = vmatprep.subr.mxu0 0.0
      %490 = vmatpush1.xpose.msra.mxu0 %v485
      %491 = vmatprep.subr.mxu0 0.0
      %492 = vmatpush1.xpose.msra.mxu0 0.0
      %493 = vmatprep.subr.mxu0 0.0
      %494 = vmatpush1.xpose.msra.mxu0 0.0
      %495 = vmatprep.subr.mxu0 0.0
      %496 = vmatpush1.xpose.msra.mxu0 0.0
      %497 = vmatprep.subr.mxu0 0.0
      %498 = vmatpush1.xpose.msra.mxu0 0.0
      %499 = vmatprep.subr.mxu0 0.0
      %500 = vmatpush1.xpose.msra.mxu0 0.0
      %501 = vmatprep.subr.mxu0 0.0
      %502 = vmatpush1.xpose.msra.mxu0 0.0
      %503 = vmatprep.subr.mxu0 0.0
      %504 = vmatpush1.xpose.msra.mxu0 0.0
      %505 = vmatprep.subr.mxu0 0.0
      %506 = vmatpush1.xpose.msra.mxu0 0.0
      %507 = vmatprep.subr.mxu0 0.0
      %508 = vmatpush1.xpose.msra.mxu0 0.0
      %509 = vmatprep.subr.mxu0 0.0
      %510 = vmatpush1.xpose.msra.mxu0 0.0
      %511 = vmatprep.subr.mxu0 0.0
      %512 = vmatpush1.xpose.msra.mxu0 0.0
      %513 = vmatprep.subr.mxu0 0.0
      %514 = vmatpush1.xpose.msra.mxu0 0.0
      %515 = vmatprep.subr.mxu0 0.0
      %516 = vmatpush1.xpose.msra.mxu0 0.0
      %517 = vmatprep.subr.mxu0 0.0
      %518 = vmatpush1.xpose.msra.mxu0 0.0
      %519 = vmatprep.subr.mxu0 0.0
      %520 = vmatpush1.xpose.msra.mxu0 0.0
      %521 = vmatprep.subr.mxu0 0.0
      %522 = vmatpush1.xpose.msra.mxu0 0.0
      %523 = vmatprep.subr.mxu0 0.0
      %524 = vmatpush1.xpose.msra.mxu0 0.0
      %525 = vmatprep.subr.mxu0 0.0
      %526 = vmatpush1.xpose.msra.mxu0 0.0
      %527 = vmatprep.subr.mxu0 0.0
      %528 = vmatpush1.xpose.msra.mxu0 0.0
      %529 = vmatprep.subr.mxu0 0.0
      %530 = vmatpush1.xpose.msra.mxu0 0.0
      %531 = vmatprep.subr.mxu0 0.0
      %532 = vmatpush1.xpose.msra.mxu0 0.0
      %533 = vmatprep.subr.mxu0 0.0
      %534 = vmatpush1.xpose.msra.mxu0 0.0
      %535 = vmatprep.subr.mxu0 0.0
      %536 = vmatpush1.xpose.msra.mxu0 0.0
      %537 = vmatprep.subr.mxu0 0.0
      %538 = vmatpush1.xpose.msra.mxu0 0.0
      %539 = vmatprep.subr.mxu0 0.0
      %540 = vmatpush1.xpose.msra.mxu0 0.0
      %541 = vmatprep.subr.mxu0 0.0
      %542 = vmatpush1.xpose.msra.mxu0 0.0
      %543 = vmatprep.subr.mxu0 0.0
      %544 = vmatpush1.xpose.msra.mxu0 0.0
      %545 = vmatprep.subr.mxu0 0.0
      %546 = vmatpush1.xpose.msra.mxu0 0.0
      %547 = vmatprep.subr.mxu0 0.0
      %548 = vmatpush1.xpose.msra.mxu0 0.0
      %549 = vmatprep.subr.mxu0 0.0
      %550 = vmatpush1.xpose.msra.mxu0 0.0
      %551 = vmatprep.mubr.f32.mxu0 0.0
      %552 = vmatmul.mubr.f32.gmra.mrb[0].mxu0 %v479
      %v553 = vpop.f32.mrb[0].mxu0
      %v554 = vadd.f32 0.0, %v553
      %v555 = vpop.f32.mrb[0].mxu0
      %556 = vdwg.mxu0
      %v558 = vsel %vm319, %v302, 0
      %v561 = vsel %vm319, %v309, 0
      %v564 = vsel %vm319, %v310, 0
      %566 = vmatprep.subr.mxu0 0.0
      %567 = vmatpush1.xpose.msra.mxu0 %v561
      %568 = vmatprep.subr.mxu0 0.0
      %569 = vmatpush1.xpose.msra.mxu0 %v564
      %570 = vmatprep.subr.mxu0 0.0
      %571 = vmatpush1.xpose.msra.mxu0 0.0
      %572 = vmatprep.subr.mxu0 0.0
      %573 = vmatpush1.xpose.msra.mxu0 0.0
      %574 = vmatprep.subr.mxu0 0.0
      %575 = vmatpush1.xpose.msra.mxu0 0.0
      %576 = vmatprep.subr.mxu0 0.0
      %577 = vmatpush1.xpose.msra.mxu0 0.0
      %578 = vmatprep.subr.mxu0 0.0
      %579 = vmatpush1.xpose.msra.mxu0 0.0
      %580 = vmatprep.subr.mxu0 0.0
      %581 = vmatpush1.xpose.msra.mxu0 0.0
      %582 = vmatprep.subr.mxu0 0.0
      %583 = vmatpush1.xpose.msra.mxu0 0.0
      %584 = vmatprep.subr.mxu0 0.0
      %585 = vmatpush1.xpose.msra.mxu0 0.0
      %586 = vmatprep.subr.mxu0 0.0
      %587 = vmatpush1.xpose.msra.mxu0 0.0
      %588 = vmatprep.subr.mxu0 0.0
      %589 = vmatpush1.xpose.msra.mxu0 0.0
      %590 = vmatprep.subr.mxu0 0.0
      %591 = vmatpush1.xpose.msra.mxu0 0.0
      %592 = vmatprep.subr.mxu0 0.0
      %593 = vmatpush1.xpose.msra.mxu0 0.0
      %594 = vmatprep.subr.mxu0 0.0
      %595 = vmatpush1.xpose.msra.mxu0 0.0
      %596 = vmatprep.subr.mxu0 0.0
      %597 = vmatpush1.xpose.msra.mxu0 0.0
      %598 = vmatprep.subr.mxu0 0.0
      %599 = vmatpush1.xpose.msra.mxu0 0.0
      %600 = vmatprep.subr.mxu0 0.0
      %601 = vmatpush1.xpose.msra.mxu0 0.0
      %602 = vmatprep.subr.mxu0 0.0
      %603 = vmatpush1.xpose.msra.mxu0 0.0
      %604 = vmatprep.subr.mxu0 0.0
      %605 = vmatpush1.xpose.msra.mxu0 0.0
      %606 = vmatprep.subr.mxu0 0.0
      %607 = vmatpush1.xpose.msra.mxu0 0.0
      %608 = vmatprep.subr.mxu0 0.0
      %609 = vmatpush1.xpose.msra.mxu0 0.0
      %610 = vmatprep.subr.mxu0 0.0
      %611 = vmatpush1.xpose.msra.mxu0 0.0
      %612 = vmatprep.subr.mxu0 0.0
      %613 = vmatpush1.xpose.msra.mxu0 0.0
      %614 = vmatprep.subr.mxu0 0.0
      %615 = vmatpush1.xpose.msra.mxu0 0.0
      %616 = vmatprep.subr.mxu0 0.0
      %617 = vmatpush1.xpose.msra.mxu0 0.0
      %618 = vmatprep.subr.mxu0 0.0
      %619 = vmatpush1.xpose.msra.mxu0 0.0
      %620 = vmatprep.subr.mxu0 0.0
      %621 = vmatpush1.xpose.msra.mxu0 0.0
      %622 = vmatprep.subr.mxu0 0.0
      %623 = vmatpush1.xpose.msra.mxu0 0.0
      %624 = vmatprep.subr.mxu0 0.0
      %625 = vmatpush1.xpose.msra.mxu0 0.0
      %626 = vmatprep.subr.mxu0 0.0
      %627 = vmatpush1.xpose.msra.mxu0 0.0
      %628 = vmatprep.subr.mxu0 0.0
      %629 = vmatpush1.xpose.msra.mxu0 0.0
      %630 = vmatprep.mubr.f32.mxu0 0.0
      %631 = vmatmul.mubr.f32.gmra.mrb[0].mxu0 %v558
      %v632 = vpop.f32.mrb[0].mxu0
      %v633 = vadd.f32 0.0, %v632
      %v634 = vpop.f32.mrb[0].mxu0
      %635 = vdwg.mxu0
      %v636 = vld [vmem:[#allocation2] sm:$0xff]
      %v637 = vld [vmem:[#allocation2 + $0x8] sm:$0xff]
      %v638 = vld [vmem:[#allocation2 + $0x10] sm:$0xff]
      %v639 = vld [vmem:[#allocation2 + $0x18] sm:$0xff]
      %vm640 = vcmask 130048
      %v641 = vsel %vm640, %v396, -inf
      %642 = vmax.xlane.f32.xlu0 %v641
      %v643 = vpop.xlane.xlu0 %642
      %v644 = vsel %vm640, %v475, -inf
      %645 = vmax.xlane.f32.xlu0 %v644
      %v646 = vpop.xlane.xlu0 %645
      %v647 = vsel %vm640, %v554, -inf
      %648 = vmax.xlane.f32.xlu0 %v647
      %v649 = vpop.xlane.xlu0 %648
      %v650 = vsel %vm640, %v633, -inf
      %651 = vmax.xlane.f32.xlu0 %v650
      %v652 = vpop.xlane.xlu0 %651
      %v653 = vmax.f32 %v636, %v643
      %v654 = vmax.f32 %v637, %v646
      %v655 = vmax.f32 %v638, %v649
      %v656 = vmax.f32 %v639, %v652
      %v657 = vsub.f32 %v636, %v653
      %v658 = vsub.f32 %v637, %v654
      %v659 = vsub.f32 %v638, %v655
      %v660 = vsub.f32 %v639, %v656
      %v661 = vmul.f32 %v657, 1.442695
      %v662 = vpow.pop %v661
      %v663 = vmul.f32 %v658, 1.442695
      %v664 = vpow.pop %v663
      %v665 = vmul.f32 %v659, 1.442695
      %v666 = vpow.pop %v665
      %v667 = vmul.f32 %v660, 1.442695
      %v668 = vpow.pop %v667
      %670 = vset.pattern.permute.xlu0 0
      %671 = vperm.xlu0 %670, %v653
      %v672 = vpop.permute.xlu0 %671
      %675 = vset.pattern.permute.xlu0 0
      %676 = vperm.xlu0 %675, %v654
      %v677 = vpop.permute.xlu0 %676
      %680 = vset.pattern.permute.xlu0 0
      %681 = vperm.xlu0 %680, %v655
      %v682 = vpop.permute.xlu0 %681
      %685 = vset.pattern.permute.xlu0 0
      %686 = vperm.xlu0 %685, %v656
      %v687 = vpop.permute.xlu0 %686
      %v689 = vsub.f32 %v396, %v672
      %v690 = vsub.f32 %v475, %v677
      %v691 = vsub.f32 %v554, %v682
      %v692 = vsub.f32 %v633, %v687
      %v693 = vmul.f32 %v689, 1.442695
      %v694 = vpow.pop %v693
      %v695 = vmul.f32 %v690, 1.442695
      %v696 = vpow.pop %v695
      %v697 = vmul.f32 %v691, 1.442695
      %v698 = vpow.pop %v697
      %v699 = vmul.f32 %v692, 1.442695
      %v700 = vpow.pop %v699
      %v701 = vld [vmem:[#allocation3] sm:$0xff]
      %v702 = vld [vmem:[#allocation3 + $0x8] sm:$0xff]
      %v703 = vld [vmem:[#allocation3 + $0x10] sm:$0xff]
      %v704 = vld [vmem:[#allocation3 + $0x18] sm:$0xff]
      %v705 = vmul.f32 %v662, %v701
      %v706 = vmul.f32 %v664, %v702
      %v707 = vmul.f32 %v666, %v703
      %v708 = vmul.f32 %v668, %v704
      %v709 = vsel %vm640, %v694, 0.0
      %710 = vadd.xlane.f32.xlu0 %v709
      %v711 = vpop.xlane.xlu0 %710
      %v712 = vsel %vm640, %v696, 0.0
      %713 = vadd.xlane.f32.xlu0 %v712
      %v714 = vpop.xlane.xlu0 %713
      %v715 = vsel %vm640, %v698, 0.0
      %716 = vadd.xlane.f32.xlu0 %v715
      %v717 = vpop.xlane.xlu0 %716
      %v718 = vsel %vm640, %v700, 0.0
      %719 = vadd.xlane.f32.xlu0 %v718
      %v720 = vpop.xlane.xlu0 %719
      %v721 = vadd.f32 %v705, %v711
      %v722 = vadd.f32 %v706, %v714
      %v723 = vadd.f32 %v707, %v717
      %v724 = vadd.f32 %v708, %v720
      %vm725 = vcmask 7168
      %726 = vst.msk [vmem:[#allocation3] sm:$0xff] %vm725, %v721
      %727 = vst.msk [vmem:[#allocation3 + $0x8] sm:$0xff] %vm725, %v722
      %728 = vst.msk [vmem:[#allocation3 + $0x10] sm:$0xff] %vm725, %v723
      %729 = vst.msk [vmem:[#allocation3 + $0x18] sm:$0xff] %vm725, %v724
      %v730 = vld [vmem:[#allocation4] sm:$0xff]
      %v731 = vld [vmem:[#allocation4 + $0x8] sm:$0xff]
      %v732 = vld [vmem:[#allocation4 + $0x10] sm:$0xff]
      %v733 = vld [vmem:[#allocation4 + $0x18] sm:$0xff]
      %735 = vset.pattern.permute.xlu0 0
      %736 = vperm.xlu0 %735, %v662
      %v737 = vpop.permute.xlu0 %736
      %740 = vset.pattern.permute.xlu0 0
      %741 = vperm.xlu0 %740, %v664
      %v742 = vpop.permute.xlu0 %741
      %745 = vset.pattern.permute.xlu0 0
      %746 = vperm.xlu0 %745, %v666
      %v747 = vpop.permute.xlu0 %746
      %750 = vset.pattern.permute.xlu0 0
      %751 = vperm.xlu0 %750, %v668
      %v752 = vpop.permute.xlu0 %751
      %v754 = vmul.f32 %v737, %v730
      %v755 = vmul.f32 %v742, %v731
      %v756 = vmul.f32 %v747, %v732
      %v757 = vmul.f32 %v752, %v733
      %v759 = vsel %vm640, %v694, 0
      %761 = vmatprep.subr.mxu0 0.0
      %762 = vmatpush1.msra.mxu0 %v311
      %763 = vmatprep.subr.mxu0 0.0
      %764 = vmatpush1.msra.mxu0 %v312
      %765 = vmatprep.subr.mxu0 0.0
      %766 = vmatpush1.msra.mxu0 0.0
      %767 = vmatprep.subr.mxu0 0.0
      %768 = vmatpush1.msra.mxu0 0.0
      %769 = vmatprep.subr.mxu0 0.0
      %770 = vmatpush1.msra.mxu0 0.0
      %771 = vmatprep.subr.mxu0 0.0
      %772 = vmatpush1.msra.mxu0 0.0
      %773 = vmatprep.subr.mxu0 0.0
      %774 = vmatpush1.msra.mxu0 0.0
      %775 = vmatprep.subr.mxu0 0.0
      %776 = vmatpush1.msra.mxu0 0.0
      %777 = vmatprep.subr.mxu0 0.0
      %778 = vmatpush1.msra.mxu0 0.0
      %779 = vmatprep.subr.mxu0 0.0
      %780 = vmatpush1.msra.mxu0 0.0
      %781 = vmatprep.subr.mxu0 0.0
      %782 = vmatpush1.msra.mxu0 0.0
      %783 = vmatprep.subr.mxu0 0.0
      %784 = vmatpush1.msra.mxu0 0.0
      %785 = vmatprep.subr.mxu0 0.0
      %786 = vmatpush1.msra.mxu0 0.0
      %787 = vmatprep.subr.mxu0 0.0
      %788 = vmatpush1.msra.mxu0 0.0
      %789 = vmatprep.subr.mxu0 0.0
      %790 = vmatpush1.msra.mxu0 0.0
      %791 = vmatprep.subr.mxu0 0.0
      %792 = vmatpush1.msra.mxu0 0.0
      %793 = vmatprep.subr.mxu0 0.0
      %794 = vmatpush1.msra.mxu0 0.0
      %795 = vmatprep.subr.mxu0 0.0
      %796 = vmatpush1.msra.mxu0 0.0
      %797 = vmatprep.subr.mxu0 0.0
      %798 = vmatpush1.msra.mxu0 0.0
      %799 = vmatprep.subr.mxu0 0.0
      %800 = vmatpush1.msra.mxu0 0.0
      %801 = vmatprep.subr.mxu0 0.0
      %802 = vmatpush1.msra.mxu0 0.0
      %803 = vmatprep.subr.mxu0 0.0
      %804 = vmatpush1.msra.mxu0 0.0
      %805 = vmatprep.subr.mxu0 0.0
      %806 = vmatpush1.msra.mxu0 0.0
      %807 = vmatprep.subr.mxu0 0.0
      %808 = vmatpush1.msra.mxu0 0.0
      %809 = vmatprep.subr.mxu0 0.0
      %810 = vmatpush1.msra.mxu0 0.0
      %811 = vmatprep.subr.mxu0 0.0
      %812 = vmatpush1.msra.mxu0 0.0
      %813 = vmatprep.subr.mxu0 0.0
      %814 = vmatpush1.msra.mxu0 0.0
      %815 = vmatprep.subr.mxu0 0.0
      %816 = vmatpush1.msra.mxu0 0.0
      %817 = vmatprep.subr.mxu0 0.0
      %818 = vmatpush1.msra.mxu0 0.0
      %819 = vmatprep.subr.mxu0 0.0
      %820 = vmatpush1.msra.mxu0 0.0
      %821 = vmatprep.subr.mxu0 0.0
      %822 = vmatpush1.msra.mxu0 0.0
      %823 = vmatprep.subr.mxu0 0.0
      %824 = vmatpush1.msra.mxu0 0.0
      %825 = vmatprep.mubr.f32.mxu0 0.0
      %826 = vmatmul.mubr.f32.gmra.mrb[0].mxu0 %v759
      %v827 = vpop.f32.mrb[0].mxu0
      %v828 = vadd.f32 0.0, %v827
      %v829 = vpop.f32.mrb[0].mxu0
      %830 = vdwg.mxu0
      %v832 = vsel %vm640, %v696, 0
      %834 = vmatprep.subr.mxu0 0.0
      %835 = vmatpush1.msra.mxu0 %v313
      %836 = vmatprep.subr.mxu0 0.0
      %837 = vmatpush1.msra.mxu0 %v314
      %838 = vmatprep.subr.mxu0 0.0
      %839 = vmatpush1.msra.mxu0 0.0
      %840 = vmatprep.subr.mxu0 0.0
      %841 = vmatpush1.msra.mxu0 0.0
      %842 = vmatprep.subr.mxu0 0.0
      %843 = vmatpush1.msra.mxu0 0.0
      %844 = vmatprep.subr.mxu0 0.0
      %845 = vmatpush1.msra.mxu0 0.0
      %846 = vmatprep.subr.mxu0 0.0
      %847 = vmatpush1.msra.mxu0 0.0
      %848 = vmatprep.subr.mxu0 0.0
      %849 = vmatpush1.msra.mxu0 0.0
      %850 = vmatprep.subr.mxu0 0.0
      %851 = vmatpush1.msra.mxu0 0.0
      %852 = vmatprep.subr.mxu0 0.0
      %853 = vmatpush1.msra.mxu0 0.0
      %854 = vmatprep.subr.mxu0 0.0
      %855 = vmatpush1.msra.mxu0 0.0
      %856 = vmatprep.subr.mxu0 0.0
      %857 = vmatpush1.msra.mxu0 0.0
      %858 = vmatprep.subr.mxu0 0.0
      %859 = vmatpush1.msra.mxu0 0.0
      %860 = vmatprep.subr.mxu0 0.0
      %861 = vmatpush1.msra.mxu0 0.0
      %862 = vmatprep.subr.mxu0 0.0
      %863 = vmatpush1.msra.mxu0 0.0
      %864 = vmatprep.subr.mxu0 0.0
      %865 = vmatpush1.msra.mxu0 0.0
      %866 = vmatprep.subr.mxu0 0.0
      %867 = vmatpush1.msra.mxu0 0.0
      %868 = vmatprep.subr.mxu0 0.0
      %869 = vmatpush1.msra.mxu0 0.0
      %870 = vmatprep.subr.mxu0 0.0
      %871 = vmatpush1.msra.mxu0 0.0
      %872 = vmatprep.subr.mxu0 0.0
      %873 = vmatpush1.msra.mxu0 0.0
      %874 = vmatprep.subr.mxu0 0.0
      %875 = vmatpush1.msra.mxu0 0.0
      %876 = vmatprep.subr.mxu0 0.0
      %877 = vmatpush1.msra.mxu0 0.0
      %878 = vmatprep.subr.mxu0 0.0
      %879 = vmatpush1.msra.mxu0 0.0
      %880 = vmatprep.subr.mxu0 0.0
      %881 = vmatpush1.msra.mxu0 0.0
      %882 = vmatprep.subr.mxu0 0.0
      %883 = vmatpush1.msra.mxu0 0.0
      %884 = vmatprep.subr.mxu0 0.0
      %885 = vmatpush1.msra.mxu0 0.0
      %886 = vmatprep.subr.mxu0 0.0
      %887 = vmatpush1.msra.mxu0 0.0
      %888 = vmatprep.subr.mxu0 0.0
      %889 = vmatpush1.msra.mxu0 0.0
      %890 = vmatprep.subr.mxu0 0.0
      %891 = vmatpush1.msra.mxu0 0.0
      %892 = vmatprep.subr.mxu0 0.0
      %893 = vmatpush1.msra.mxu0 0.0
      %894 = vmatprep.subr.mxu0 0.0
      %895 = vmatpush1.msra.mxu0 0.0
      %896 = vmatprep.subr.mxu0 0.0
      %897 = vmatpush1.msra.mxu0 0.0
      %898 = vmatprep.mubr.f32.mxu0 0.0
      %899 = vmatmul.mubr.f32.gmra.mrb[0].mxu0 %v832
      %v900 = vpop.f32.mrb[0].mxu0
      %v901 = vadd.f32 0.0, %v900
      %v902 = vpop.f32.mrb[0].mxu0
      %903 = vdwg.mxu0
      %v905 = vsel %vm640, %v698, 0
      %907 = vmatprep.subr.mxu0 0.0
      %908 = vmatpush1.msra.mxu0 %v315
      %909 = vmatprep.subr.mxu0 0.0
      %910 = vmatpush1.msra.mxu0 %v316
      %911 = vmatprep.subr.mxu0 0.0
      %912 = vmatpush1.msra.mxu0 0.0
      %913 = vmatprep.subr.mxu0 0.0
      %914 = vmatpush1.msra.mxu0 0.0
      %915 = vmatprep.subr.mxu0 0.0
      %916 = vmatpush1.msra.mxu0 0.0
      %917 = vmatprep.subr.mxu0 0.0
      %918 = vmatpush1.msra.mxu0 0.0
      %919 = vmatprep.subr.mxu0 0.0
      %920 = vmatpush1.msra.mxu0 0.0
      %921 = vmatprep.subr.mxu0 0.0
      %922 = vmatpush1.msra.mxu0 0.0
      %923 = vmatprep.subr.mxu0 0.0
      %924 = vmatpush1.msra.mxu0 0.0
      %925 = vmatprep.subr.mxu0 0.0
      %926 = vmatpush1.msra.mxu0 0.0
      %927 = vmatprep.subr.mxu0 0.0
      %928 = vmatpush1.msra.mxu0 0.0
      %929 = vmatprep.subr.mxu0 0.0
      %930 = vmatpush1.msra.mxu0 0.0
      %931 = vmatprep.subr.mxu0 0.0
      %932 = vmatpush1.msra.mxu0 0.0
      %933 = vmatprep.subr.mxu0 0.0
      %934 = vmatpush1.msra.mxu0 0.0
      %935 = vmatprep.subr.mxu0 0.0
      %936 = vmatpush1.msra.mxu0 0.0
      %937 = vmatprep.subr.mxu0 0.0
      %938 = vmatpush1.msra.mxu0 0.0
      %939 = vmatprep.subr.mxu0 0.0
      %940 = vmatpush1.msra.mxu0 0.0
      %941 = vmatprep.subr.mxu0 0.0
      %942 = vmatpush1.msra.mxu0 0.0
      %943 = vmatprep.subr.mxu0 0.0
      %944 = vmatpush1.msra.mxu0 0.0
      %945 = vmatprep.subr.mxu0 0.0
      %946 = vmatpush1.msra.mxu0 0.0
      %947 = vmatprep.subr.mxu0 0.0
      %948 = vmatpush1.msra.mxu0 0.0
      %949 = vmatprep.subr.mxu0 0.0
      %950 = vmatpush1.msra.mxu0 0.0
      %951 = vmatprep.subr.mxu0 0.0
      %952 = vmatpush1.msra.mxu0 0.0
      %953 = vmatprep.subr.mxu0 0.0
      %954 = vmatpush1.msra.mxu0 0.0
      %955 = vmatprep.subr.mxu0 0.0
      %956 = vmatpush1.msra.mxu0 0.0
      %957 = vmatprep.subr.mxu0 0.0
      %958 = vmatpush1.msra.mxu0 0.0
      %959 = vmatprep.subr.mxu0 0.0
      %960 = vmatpush1.msra.mxu0 0.0
      %961 = vmatprep.subr.mxu0 0.0
      %962 = vmatpush1.msra.mxu0 0.0
      %963 = vmatprep.subr.mxu0 0.0
      %964 = vmatpush1.msra.mxu0 0.0
      %965 = vmatprep.subr.mxu0 0.0
      %966 = vmatpush1.msra.mxu0 0.0
      %967 = vmatprep.subr.mxu0 0.0
      %968 = vmatpush1.msra.mxu0 0.0
      %969 = vmatprep.subr.mxu0 0.0
      %970 = vmatpush1.msra.mxu0 0.0
      %971 = vmatprep.mubr.f32.mxu0 0.0
      %972 = vmatmul.mubr.f32.gmra.mrb[0].mxu0 %v905
      %v973 = vpop.f32.mrb[0].mxu0
      %v974 = vadd.f32 0.0, %v973
      %v975 = vpop.f32.mrb[0].mxu0
      %976 = vdwg.mxu0
      %v978 = vsel %vm640, %v700, 0
      %980 = vmatprep.subr.mxu0 0.0
      %981 = vmatpush1.msra.mxu0 %v317
      %982 = vmatprep.subr.mxu0 0.0
      %983 = vmatpush1.msra.mxu0 %v318
      %984 = vmatprep.subr.mxu0 0.0
      %985 = vmatpush1.msra.mxu0 0.0
      %986 = vmatprep.subr.mxu0 0.0
      %987 = vmatpush1.msra.mxu0 0.0
      %988 = vmatprep.subr.mxu0 0.0
      %989 = vmatpush1.msra.mxu0 0.0
      %990 = vmatprep.subr.mxu0 0.0
      %991 = vmatpush1.msra.mxu0 0.0
      %992 = vmatprep.subr.mxu0 0.0
      %993 = vmatpush1.msra.mxu0 0.0
      %994 = vmatprep.subr.mxu0 0.0
      %995 = vmatpush1.msra.mxu0 0.0
      %996 = vmatprep.subr.mxu0 0.0
      %997 = vmatpush1.msra.mxu0 0.0
      %998 = vmatprep.subr.mxu0 0.0
      %999 = vmatpush1.msra.mxu0 0.0
      %1000 = vmatprep.subr.mxu0 0.0
      %1001 = vmatpush1.msra.mxu0 0.0
      %1002 = vmatprep.subr.mxu0 0.0
      %1003 = vmatpush1.msra.mxu0 0.0
      %1004 = vmatprep.subr.mxu0 0.0
      %1005 = vmatpush1.msra.mxu0 0.0
      %1006 = vmatprep.subr.mxu0 0.0
      %1007 = vmatpush1.msra.mxu0 0.0
      %1008 = vmatprep.subr.mxu0 0.0
      %1009 = vmatpush1.msra.mxu0 0.0
      %1010 = vmatprep.subr.mxu0 0.0
      %1011 = vmatpush1.msra.mxu0 0.0
      %1012 = vmatprep.subr.mxu0 0.0
      %1013 = vmatpush1.msra.mxu0 0.0
      %1014 = vmatprep.subr.mxu0 0.0
      %1015 = vmatpush1.msra.mxu0 0.0
      %1016 = vmatprep.subr.mxu0 0.0
      %1017 = vmatpush1.msra.mxu0 0.0
      %1018 = vmatprep.subr.mxu0 0.0
      %1019 = vmatpush1.msra.mxu0 0.0
      %1020 = vmatprep.subr.mxu0 0.0
      %1021 = vmatpush1.msra.mxu0 0.0
      %1022 = vmatprep.subr.mxu0 0.0
      %1023 = vmatpush1.msra.mxu0 0.0
      %1024 = vmatprep.subr.mxu0 0.0
      %1025 = vmatpush1.msra.mxu0 0.0
      %1026 = vmatprep.subr.mxu0 0.0
      %1027 = vmatpush1.msra.mxu0 0.0
      %1028 = vmatprep.subr.mxu0 0.0
      %1029 = vmatpush1.msra.mxu0 0.0
      %1030 = vmatprep.subr.mxu0 0.0
      %1031 = vmatpush1.msra.mxu0 0.0
      %1032 = vmatprep.subr.mxu0 0.0
      %1033 = vmatpush1.msra.mxu0 0.0
      %1034 = vmatprep.subr.mxu0 0.0
      %1035 = vmatpush1.msra.mxu0 0.0
      %1036 = vmatprep.subr.mxu0 0.0
      %1037 = vmatpush1.msra.mxu0 0.0
      %1038 = vmatprep.subr.mxu0 0.0
      %1039 = vmatpush1.msra.mxu0 0.0
      %1040 = vmatprep.subr.mxu0 0.0
      %1041 = vmatpush1.msra.mxu0 0.0
      %1042 = vmatprep.subr.mxu0 0.0
      %1043 = vmatpush1.msra.mxu0 0.0
      %1044 = vmatprep.mubr.f32.mxu0 0.0
      %1045 = vmatmul.mubr.f32.gmra.mrb[0].mxu0 %v978
      %v1046 = vpop.f32.mrb[0].mxu0
      %v1047 = vadd.f32 0.0, %v1046
      %v1048 = vpop.f32.mrb[0].mxu0
      %1049 = vdwg.mxu0
      %v1050 = vadd.f32 %v754, %v828
      %v1051 = vadd.f32 %v755, %v901
      %v1052 = vadd.f32 %v756, %v974
      %v1053 = vadd.f32 %v757, %v1047
      %1054 = vst.msk [vmem:[#allocation4] sm:$0xff] %vm319, %v1050
      %1055 = vst.msk [vmem:[#allocation4 + $0x8] sm:$0xff] %vm319, %v1051
      %1056 = vst.msk [vmem:[#allocation4 + $0x10] sm:$0xff] %vm319, %v1052
      %1057 = vst.msk [vmem:[#allocation4 + $0x18] sm:$0xff] %vm319, %v1053
      %1058 = vst.msk [vmem:[#allocation2] sm:$0xff] %vm725, %v653
      %1059 = vst.msk [vmem:[#allocation2 + $0x8] sm:$0xff] %vm725, %v654
      %1060 = vst.msk [vmem:[#allocation2 + $0x10] sm:$0xff] %vm725, %v655
      %1061 = vst.msk [vmem:[#allocation2 + $0x18] sm:$0xff] %vm725, %v656
      // Predicated region
      $region37: #{decoder_layer.13} parent=31 // pred_check
        %p1062 = pneg %p281
      $region38: #{decoder_layer.13} parent=31 // pred_check_branch
        %1064 = sbr.rel (%p1062) target = $region40
      $region39: #{decoder_layer.13} parent=31 // pred_region
        %v1065 = vld [vmem:[#allocation4] sm:$0xff]
        %v1066 = vld [vmem:[#allocation4 + $0x8] sm:$0xff]
        %v1067 = vld [vmem:[#allocation4 + $0x10] sm:$0xff]
        %v1068 = vld [vmem:[#allocation4 + $0x18] sm:$0xff]
        %v1069 = vld [vmem:[#allocation3] sm:$0xff]
        %v1070 = vld [vmem:[#allocation3 + $0x8] sm:$0xff]
        %v1071 = vld [vmem:[#allocation3 + $0x10] sm:$0xff]
        %v1072 = vld [vmem:[#allocation3 + $0x18] sm:$0xff]
        %1074 = vset.pattern.permute.xlu0 0
        %1075 = vperm.xlu0 %1074, %v1069
        %v1076 = vpop.permute.xlu0 %1075
        %1079 = vset.pattern.permute.xlu0 0
        %1080 = vperm.xlu0 %1079, %v1070
        %v1081 = vpop.permute.xlu0 %1080
        %1084 = vset.pattern.permute.xlu0 0
        %1085 = vperm.xlu0 %1084, %v1071
        %v1086 = vpop.permute.xlu0 %1085
        %1089 = vset.pattern.permute.xlu0 0
        %1090 = vperm.xlu0 %1089, %v1072
        %v1091 = vpop.permute.xlu0 %1090
        %v1093 = vrcp.pop %v1076
        %v1094 = vmul.f32 %v1065, %v1093
        %v1095 = vrcp.pop %v1081
        %v1096 = vmul.f32 %v1066, %v1095
        %v1097 = vrcp.pop %v1086
        %v1098 = vmul.f32 %v1067, %v1097
        %v1099 = vrcp.pop %v1091
        %v1100 = vmul.f32 %v1068, %v1099
        %1101 = vst.msk [vmem:[%s280] sm:$0xff] %vm319, %v1094
        %1102 = vst.msk [vmem:[%s280 + $0x8] sm:$0xff] %vm319, %v1096
        %1103 = vst.msk [vmem:[%s280 + $0x10] sm:$0xff] %vm319, %v1098
        %1104 = vst.msk [vmem:[%s280 + $0x18] sm:$0xff] %vm319, %v1100
      $region40: #{decoder_layer.13} parent=31 // pred_fallthru
        _
      %p1105 = scmp.lt.s32.totalorder %s19, 1
      %s1106 = scalar_select %p1105, %s19, 1
      %p1107 = scmp.lt.s32.totalorder %s20, 0
      %s1108 = scalar_select %p1107, %s20, 0
      %s1109 = smul.addr %s1106, 4
      %s1110 = sadd.s32 %s1108, %s1109
      %s1111 = smul.addr %s1110, 8
      %s1112 = scalar_lea.vmem %s3, %s1111
      // Predicated region
      $region41: #{decoder_layer.13} parent=31 // pred_check
        %p1113 = pneg %p137
      $region42: #{decoder_layer.13} parent=31 // pred_check_branch
        %1115 = sbr.rel (%p1113) target = $region44
      $region43: #{decoder_layer.13} parent=31 // pred_region
        _
      $region44: #{decoder_layer.13} parent=31 // pred_fallthru
        _
    $region32: #{decoder_layer.13} parent=5 // pred_fallthru
      _
    %p1116 = scmp.le.s32.totalorder 2, %s9
    // Predicated region
    $region45: #{decoder_layer.13} parent=5 // pred_check
      %p1117 = pneg %p1116
    $region46: #{decoder_layer.13} parent=5 // pred_check_branch
      %1119 = sbr.rel (%p1117) target = $region48
    $region47: #{decoder_layer.13} parent=5 // pred_region
      %s1120 = ssub.s32 %s9, 2
      // Predicated region
      $region49: #{decoder_layer.13} parent=47 // pred_check
        %p1121 = pneg %p143
      $region50: #{decoder_layer.13} parent=47 // pred_check_branch
        %1123 = sbr.rel (%p1121) target = $region52
      $region51: #{decoder_layer.13} parent=47 // pred_region
        %p1124 = scmp.lt.s32.totalorder %s22, 1
        %s1125 = scalar_select %p1124, %s22, 1
        %p1126 = scmp.lt.s32.totalorder %s23, 0
        %s1127 = scalar_select %p1126, %s23, 0
        %s1128 = smul.addr %s1125, 4
        %s1129 = sadd.s32 %s1127, %s1128
        %s1130 = smul.addr %s1129, 8
        %s1131 = scalar_lea.vmem %s3, %s1130
      $region52: #{decoder_layer.13} parent=47 // pred_fallthru
        _
    $region48: #{decoder_layer.13} parent=5 // pred_fallthru
      _
  $region6: #{decoder_layer.13} parent=0 // loop_footer
    %s13 = sadd.s32 1, %s9
  $region7: #{decoder_layer.13} parent=0 // loop_footer_branch
    %8 = sbr.rel target = $region3
  $region8: #{decoder_layer.13} parent=0 // loop_exit
    _

// kernel: decoder_layer.15
$region0: #{decoder_layer.15}
  #allocation0 [shape = 'u32[]', space=smem, size = 0x4, offset = 0x4, fixed_abs, tag = 'smem constant byte address 0x4 - core index']
  #allocation1 [shape = 'u32[144,128]{1,0:T(1,128)}', space=vmem, size = 0x12000, scoped, tag = 'internal scratch']
  #allocation2 [shape = 'f32[16,32]{1,0:T(8,128)}', space=vmem, size = 0x2000, scoped, tag = 'scratch operand']
  #allocation3 [shape = 'f32[16,32]{1,0:T(8,128)}', space=vmem, size = 0x2000, scoped, tag = 'scratch operand']
  %s0 = inlined_call_operand.vmem [shape: f32[16,32], index: 0, kind: input, shape index: {}]
  %s1 = inlined_call_operand.vmem [shape: f32[1,32], index: 1, kind: input, shape index: {}]
  %s2 = inlined_call_operand.vmem [shape: f32[1,32], index: 2, kind: input, shape index: {}]
  %s3 = inlined_call_operand.vmem [shape: f32[32,128], index: 3, kind: input, shape index: {}]
  %s4 = inlined_call_operand.vmem [shape: f32[1,128], index: 4, kind: input, shape index: {}]
  %s5 = inlined_call_operand.vmem [shape: f32[128,32], index: 5, kind: input, shape index: {}]
  %s6 = inlined_call_operand.vmem [shape: f32[1,32], index: 6, kind: input, shape index: {}]
  %s7 = inlined_call_operand.hbm [shape: f32[16,32], index: 7, kind: output, shape index: {}]
  %s8 = sld [smem:[#allocation0]]
  $region46: #{decoder_layer.15} parent=0
    _
  %s10 = ssub.s32 1, %s8
  %s11 = scalar_select 0, %s10, %s8
  $region1: #{decoder_layer.15} parent=0
    #allocation4 [shape = 'u8[8192]{0}', space=vmem, size = 0x2000, scoped, tag = 'output window, operand 0, single buffered']
    #allocation5 [shape = 's32[1]{0}', space=sflag, size = 0x4, scoped, tag = 'scoped memory for decoder_layer.15']
    %12 = vsyncpa [#allocation5], 0
    // Predicated region
    $region2: #{decoder_layer.15} parent=1 // pred_check
      _
    $region3: #{decoder_layer.15} parent=1 // pred_check_branch
      %14 = sbr.rel (0) target = $region5
    $region4: #{decoder_layer.15} parent=1 // pred_region
      _
    $region5: #{decoder_layer.15} parent=1 // pred_fallthru
      _
    // Predicated region
    $region6: #{decoder_layer.15} parent=1 // pred_check
      _
    $region7: #{decoder_layer.15} parent=1 // pred_check_branch
      %16 = sbr.rel (0) target = $region9
    $region8: #{decoder_layer.15} parent=1 // pred_region
      _
    $region9: #{decoder_layer.15} parent=1 // pred_fallthru
      _
    // Predicated region
    $region10: #{decoder_layer.15} parent=1 // pred_check
      _
    $region11: #{decoder_layer.15} parent=1 // pred_check_branch
      %18 = sbr.rel (0) target = $region13
    $region12: #{decoder_layer.15} parent=1 // pred_region
      _
    $region13: #{decoder_layer.15} parent=1 // pred_fallthru
      _
    // Predicated region
    $region14: #{decoder_layer.15} parent=1 // pred_check
      _
    $region15: #{decoder_layer.15} parent=1 // pred_check_branch
      %20 = sbr.rel (0) target = $region17
    $region16: #{decoder_layer.15} parent=1 // pred_region
      _
    $region17: #{decoder_layer.15} parent=1 // pred_fallthru
      _
    // Predicated region
    $region18: #{decoder_layer.15} parent=1 // pred_check
      _
    $region19: #{decoder_layer.15} parent=1 // pred_check_branch
      %22 = sbr.rel (0) target = $region21
    $region20: #{decoder_layer.15} parent=1 // pred_region
      _
    $region21: #{decoder_layer.15} parent=1 // pred_fallthru
      _
    // Predicated region
    $region22: #{decoder_layer.15} parent=1 // pred_check
      _
    $region23: #{decoder_layer.15} parent=1 // pred_check_branch
      %24 = sbr.rel (0) target = $region25
    $region24: #{decoder_layer.15} parent=1 // pred_region
      _
    $region25: #{decoder_layer.15} parent=1 // pred_fallthru
      _
    // Predicated region
    $region26: #{decoder_layer.15} parent=1 // pred_check
      _
    $region27: #{decoder_layer.15} parent=1 // pred_check_branch
      %26 = sbr.rel (0) target = $region29
    $region28: #{decoder_layer.15} parent=1 // pred_region
      _
    $region29: #{decoder_layer.15} parent=1 // pred_fallthru
      _
    %p27 = scmp.eq.s32.totalorder 0, 0
    // Predicated region
    $region30: #{decoder_layer.15} parent=1 // pred_check
      %p28 = pneg %p27
    $region31: #{decoder_layer.15} parent=1 // pred_check_branch
      %30 = sbr.rel (%p28) target = $region33
    $region32: #{decoder_layer.15} parent=1 // pred_region
      %v31 = vld [vmem:[%s0] sm:$0xff]
      %v32 = vld [vmem:[%s0 + $0x8] sm:$0xff]
      %vm33 = vcmask 261120
      %v34 = vsel %vm33, %v31, 0.0
      %35 = vadd.xlane.f32.xlu0 %v34
      %v36 = vpop.xlane.xlu0 %35
      %v37 = vsel %vm33, %v32, 0.0
      %38 = vadd.xlane.f32.xlu0 %v37
      %v39 = vpop.xlane.xlu0 %38
      %v40 = vrcp.pop 32.0
      %v41 = vmul.f32 %v36, %v40
      %v42 = vmul.f32 %v39, %v40
      %v43 = vsub.f32 %v31, %v41
      %v44 = vsub.f32 %v32, %v42
      %v45 = vmul.f32 %v43, %v43
      %v46 = vmul.f32 %v44, %v44
      %v47 = vsel %vm33, %v45, 0.0
      %48 = vadd.xlane.f32.xlu0 %v47
      %v49 = vpop.xlane.xlu0 %48
      %v50 = vsel %vm33, %v46, 0.0
      %51 = vadd.xlane.f32.xlu0 %v50
      %v52 = vpop.xlane.xlu0 %51
      %v53 = vmul.f32 %v49, %v40
      %v54 = vmul.f32 %v52, %v40
      %v55 = vadd.f32 %v53, 1e-06
      %v56 = vadd.f32 %v54, 1e-06
      %v57 = vrsqrt.pop %v55
      %v58 = vrsqrt.pop %v56
      %v59 = vmul.f32 %v43, %v57
      %v60 = vmul.f32 %v44, %v58
      %v61 = vld [vmem:[%s1] sm:$0x1]
      %v63 = vlaneseq
      %v64 = vshrl.u32 %v63, 7
      %v65 = vsub.s32 0, %v64
      %v66 = vrot.slane %v61, %v65
      %v68 = vmul.f32 %v59, %v66
      %v69 = vmul.f32 %v60, %v66
      %v70 = vld [vmem:[%s2] sm:$0x1]
      %v72 = vlaneseq
      %v73 = vshrl.u32 %v72, 7
      %v74 = vsub.s32 0, %v73
      %v75 = vrot.slane %v70, %v74
      %v77 = vadd.f32 %v68, %v75
      %v78 = vadd.f32 %v69, %v75
      %79 = vst.msk [vmem:[#allocation2] sm:$0xff] %vm33, %v77
      %80 = vst.msk [vmem:[#allocation2 + $0x8] sm:$0xff] %vm33, %v78
      %v81 = vld [vmem:[%s6] sm:$0x1]
      %v83 = vlaneseq
      %v84 = vshrl.u32 %v83, 7
      %v85 = vsub.s32 0, %v84
      %v86 = vrot.slane %v81, %v85
      %v88 = vadd.f32 %v31, %v86
      %v89 = vadd.f32 %v32, %v86
      %90 = vst.msk [vmem:[#allocation3] sm:$0xff] %vm33, %v88
      %91 = vst.msk [vmem:[#allocation3 + $0x8] sm:$0xff] %vm33, %v89
    $region33: #{decoder_layer.15} parent=1 // pred_fallthru
      _
    %v92 = vld [vmem:[#allocation2] sm:$0xff]
    %v93 = vld [vmem:[#allocation2 + $0x8] sm:$0xff]
    %v94 = vld [vmem:[%s3] sm:$0xff]
    %v95 = vld [vmem:[%s3 + $0x8] sm:$0xff]
    %v96 = vld [vmem:[%s3 + $0x10] sm:$0xff]
    %v97 = vld [vmem:[%s3 + $0x18] sm:$0xff]
    %v98 = vld [vmem:[%s4] sm:$0x1]
    %v100 = vlaneseq
    %v101 = vshrl.u32 %v100, 7
    %v102 = vsub.s32 0, %v101
    %v103 = vrot.slane %v98, %v102
    %vm105 = vcmask 261120
    %v107 = vsel %vm105, %v92, 0
    %v110 = vsel %vm105, %v93, 0
    %112 = vmatprep.subr.mxu0 0.0
    %113 = vmatpush1.msra.mxu0 %v94
    %114 = vmatprep.subr.mxu0 0.0
    %115 = vmatpush1.msra.mxu0 %v95
    %116 = vmatprep.subr.mxu0 0.0
    %117 = vmatpush1.msra.mxu0 %v96
    %118 = vmatprep.subr.mxu0 0.0
    %119 = vmatpush1.msra.mxu0 %v97
    %120 = vmatprep.subr.mxu0 0.0
    %121 = vmatpush1.msra.mxu0 0.0
    %122 = vmatprep.subr.mxu0 0.0
    %123 = vmatpush1.msra.mxu0 0.0
    %124 = vmatprep.subr.mxu0 0.0
    %125 = vmatpush1.msra.mxu0 0.0
    %126 = vmatprep.subr.mxu0 0.0
    %127 = vmatpush1.msra.mxu0 0.0
    %128 = vmatprep.subr.mxu0 0.0
    %129 = vmatpush1.msra.mxu0 0.0
    %130 = vmatprep.subr.mxu0 0.0
    %131 = vmatpush1.msra.mxu0 0.0
    %132 = vmatprep.subr.mxu0 0.0
    %133 = vmatpush1.msra.mxu0 0.0
    %134 = vmatprep.subr.mxu0 0.0
    %135 = vmatpush1.msra.mxu0 0.0
    %136 = vmatprep.subr.mxu0 0.0
    %137 = vmatpush1.msra.mxu0 0.0
    %138 = vmatprep.subr.mxu0 0.0
    %139 = vmatpush1.msra.mxu0 0.0
    %140 = vmatprep.subr.mxu0 0.0
    %141 = vmatpush1.msra.mxu0 0.0
    %142 = vmatprep.subr.mxu0 0.0
    %143 = vmatpush1.msra.mxu0 0.0
    %144 = vmatprep.subr.mxu0 0.0
    %145 = vmatpush1.msra.mxu0 0.0
    %146 = vmatprep.subr.mxu0 0.0
    %147 = vmatpush1.msra.mxu0 0.0
    %148 = vmatprep.subr.mxu0 0.0
    %149 = vmatpush1.msra.mxu0 0.0
    %150 = vmatprep.subr.mxu0 0.0
    %151 = vmatpush1.msra.mxu0 0.0
    %152 = vmatprep.subr.mxu0 0.0
    %153 = vmatpush1.msra.mxu0 0.0
    %154 = vmatprep.subr.mxu0 0.0
    %155 = vmatpush1.msra.mxu0 0.0
    %156 = vmatprep.subr.mxu0 0.0
    %157 = vmatpush1.msra.mxu0 0.0
    %158 = vmatprep.subr.mxu0 0.0
    %159 = vmatpush1.msra.mxu0 0.0
    %160 = vmatprep.subr.mxu0 0.0
    %161 = vmatpush1.msra.mxu0 0.0
    %162 = vmatprep.subr.mxu0 0.0
    %163 = vmatpush1.msra.mxu0 0.0
    %164 = vmatprep.subr.mxu0 0.0
    %165 = vmatpush1.msra.mxu0 0.0
    %166 = vmatprep.subr.mxu0 0.0
    %167 = vmatpush1.msra.mxu0 0.0
    %168 = vmatprep.subr.mxu0 0.0
    %169 = vmatpush1.msra.mxu0 0.0
    %170 = vmatprep.subr.mxu0 0.0
    %171 = vmatpush1.msra.mxu0 0.0
    %172 = vmatprep.subr.mxu0 0.0
    %173 = vmatpush1.msra.mxu0 0.0
    %174 = vmatprep.subr.mxu0 0.0
    %175 = vmatpush1.msra.mxu0 0.0
    %176 = vmatprep.mubr.f32.mxu0 0.0
    %177 = vmatmul.mubr.f32.gmra.mrb[0].mxu0 %v107
    %v178 = vpop.f32.mrb[0].mxu0
    %v179 = vadd.f32 %v103, %v178
    %v180 = vpop.f32.mrb[0].mxu0
    %181 = vmatprep.mubr.f32.mxu0 0.0
    %182 = vmatmul.mubr.f32.gmra.mrb[0].mxu0 %v110
    %v183 = vpop.f32.mrb[0].mxu0
    %v184 = vadd.f32 %v103, %v183
    %v185 = vpop.f32.mrb[0].mxu0
    %186 = vdwg.mxu0
    %v187 = vmax.f32 %v179, 0.0
    %v188 = vmax.f32 %v184, 0.0
    %v189 = vld [vmem:[#allocation3] sm:$0xff]
    %v190 = vld [vmem:[#allocation3 + $0x8] sm:$0xff]
    %v191 = vld [vmem:[%s5] sm:$0xff]
    %v192 = vld [vmem:[%s5 + $0x8] sm:$0xff]
    %v193 = vld [vmem:[%s5 + $0x10] sm:$0xff]
    %v194 = vld [vmem:[%s5 + $0x18] sm:$0xff]
    %v195 = vld [vmem:[%s5 + $0x20] sm:$0xff]
    %v196 = vld [vmem:[%s5 + $0x28] sm:$0xff]
    %v197 = vld [vmem:[%s5 + $0x30] sm:$0xff]
    %v198 = vld [vmem:[%s5 + $0x38] sm:$0xff]
    %v199 = vld [vmem:[%s5 + $0x40] sm:$0xff]
    %v200 = vld [vmem:[%s5 + $0x48] sm:$0xff]
    %v201 = vld [vmem:[%s5 + $0x50] sm:$0xff]
    %v202 = vld [vmem:[%s5 + $0x58] sm:$0xff]
    %v203 = vld [vmem:[%s5 + $0x60] sm:$0xff]
    %v204 = vld [vmem:[%s5 + $0x68] sm:$0xff]
    %v205 = vld [vmem:[%s5 + $0x70] sm:$0xff]
    %v206 = vld [vmem:[%s5 + $0x78] sm:$0xff]
    %207 = vmatprep.subr.mxu0 0.0
    %208 = vmatpush1.msra.mxu0 %v191
    %209 = vmatprep.subr.mxu0 0.0
    %210 = vmatpush1.msra.mxu0 %v192
    %211 = vmatprep.subr.mxu0 0.0
    %212 = vmatpush1.msra.mxu0 %v193
    %213 = vmatprep.subr.mxu0 0.0
    %214 = vmatpush1.msra.mxu0 %v194
    %215 = vmatprep.subr.mxu0 0.0
    %216 = vmatpush1.msra.mxu0 %v195
    %217 = vmatprep.subr.mxu0 0.0
    %218 = vmatpush1.msra.mxu0 %v196
    %219 = vmatprep.subr.mxu0 0.0
    %220 = vmatpush1.msra.mxu0 %v197
    %221 = vmatprep.subr.mxu0 0.0
    %222 = vmatpush1.msra.mxu0 %v198
    %223 = vmatprep.subr.mxu0 0.0
    %224 = vmatpush1.msra.mxu0 %v199
    %225 = vmatprep.subr.mxu0 0.0
    %226 = vmatpush1.msra.mxu0 %v200
    %227 = vmatprep.subr.mxu0 0.0
    %228 = vmatpush1.msra.mxu0 %v201
    %229 = vmatprep.subr.mxu0 0.0
    %230 = vmatpush1.msra.mxu0 %v202
    %231 = vmatprep.subr.mxu0 0.0
    %232 = vmatpush1.msra.mxu0 %v203
    %233 = vmatprep.subr.mxu0 0.0
    %234 = vmatpush1.msra.mxu0 %v204
    %235 = vmatprep.subr.mxu0 0.0
    %236 = vmatpush1.msra.mxu0 %v205
    %237 = vmatprep.subr.mxu0 0.0
    %238 = vmatpush1.msra.mxu0 %v206
    %239 = vmatprep.subr.mxu0 0.0
    %240 = vmatpush1.msra.mxu0 0.0
    %241 = vmatprep.subr.mxu0 0.0
    %242 = vmatpush1.msra.mxu0 0.0
    %243 = vmatprep.subr.mxu0 0.0
    %244 = vmatpush1.msra.mxu0 0.0
    %245 = vmatprep.subr.mxu0 0.0
    %246 = vmatpush1.msra.mxu0 0.0
    %247 = vmatprep.subr.mxu0 0.0
    %248 = vmatpush1.msra.mxu0 0.0
    %249 = vmatprep.subr.mxu0 0.0
    %250 = vmatpush1.msra.mxu0 0.0
    %251 = vmatprep.subr.mxu0 0.0
    %252 = vmatpush1.msra.mxu0 0.0
    %253 = vmatprep.subr.mxu0 0.0
    %254 = vmatpush1.msra.mxu0 0.0
    %255 = vmatprep.subr.mxu0 0.0
    %256 = vmatpush1.msra.mxu0 0.0
    %257 = vmatprep.subr.mxu0 0.0
    %258 = vmatpush1.msra.mxu0 0.0
    %259 = vmatprep.subr.mxu0 0.0
    %260 = vmatpush1.msra.mxu0 0.0
    %261 = vmatprep.subr.mxu0 0.0
    %262 = vmatpush1.msra.mxu0 0.0
    %263 = vmatprep.subr.mxu0 0.0
    %264 = vmatpush1.msra.mxu0 0.0
    %265 = vmatprep.subr.mxu0 0.0
    %266 = vmatpush1.msra.mxu0 0.0
    %267 = vmatprep.subr.mxu0 0.0
    %268 = vmatpush1.msra.mxu0 0.0
    %269 = vmatprep.subr.mxu0 0.0
    %270 = vmatpush1.msra.mxu0 0.0
    %271 = vmatprep.mubr.f32.mxu0 0.0
    %272 = vmatmul.mubr.f32.gmra.mrb[0].mxu0 %v187
    %v273 = vpop.f32.mrb[0].mxu0
    %v274 = vadd.f32 0.0, %v273
    %v275 = vpop.f32.mrb[0].mxu0
    %276 = vmatprep.mubr.f32.mxu0 0.0
    %277 = vmatmul.mubr.f32.gmra.mrb[0].mxu0 %v188
    %v278 = vpop.f32.mrb[0].mxu0
    %v279 = vadd.f32 0.0, %v278
    %v280 = vpop.f32.mrb[0].mxu0
    %281 = vdwg.mxu0
    %v282 = vadd.f32 %v189, %v274
    %v283 = vadd.f32 %v190, %v279
    %284 = vst.msk [vmem:[#allocation3] sm:$0xff] %vm105, %v282
    %285 = vst.msk [vmem:[#allocation3 + $0x8] sm:$0xff] %vm105, %v283
    // Predicated region
    $region34: #{decoder_layer.15} parent=1 // pred_check
      %p286 = pneg %p27
    $region35: #{decoder_layer.15} parent=1 // pred_check_branch
      %288 = sbr.rel (%p286) target = $region37
    $region36: #{decoder_layer.15} parent=1 // pred_region
      %v289 = vld [vmem:[#allocation3] sm:$0xff]
      %v290 = vld [vmem:[#allocation3 + $0x8] sm:$0xff]
      %291 = vst.msk [vmem:[#allocation4] sm:$0xff] %vm105, %v289
      %292 = vst.msk [vmem:[#allocation4 + $0x8] sm:$0xff] %vm105, %v290
    $region37: #{decoder_layer.15} parent=1 // pred_fallthru
      _
    // Predicated region
    $region38: #{decoder_layer.15} parent=1 // pred_check
      _
    $region39: #{decoder_layer.15} parent=1 // pred_check_branch
      %294 = sbr.rel (0) target = $region41
    $region40: #{decoder_layer.15} parent=1 // pred_region
      %s296 = ssub.s32 256, 256
      %297 = vsyncadd [#allocation5], %s296
      %s298 = sshll.u32 [#allocation4], 4
      %s299 = int_to_ptr.vmem [resolvable:$true] %s298
      %304 = dma.vmem_to_hbm [thread:$0]  %s299, 256, %s7, [#allocation5], 128, 128, 8
    $region41: #{decoder_layer.15} parent=1 // pred_fallthru
      _
    // Predicated region
    $region42: #{decoder_layer.15} parent=1 // pred_check
      _
    $region43: #{decoder_layer.15} parent=1 // pred_check_branch
      %306 = sbr.rel (0) target = $region45
    $region44: #{decoder_layer.15} parent=1 // pred_region
      %307 = dma.done [#allocation5], 256
    $region45: #{decoder_layer.15} parent=1 // pred_fallthru
      _
    %308 = vsyncpa [#allocation5], 1

</llo_original>
